<compile_context>
chip_gen: v7x
topology: tpu7x:2x2x1
jax: 0.10.0
libtpu: 0.0.40
codegen_flags: <defaults>
</compile_context>

<pallas_src>
import functools

import jax
import jax.numpy as jnp
from jax import lax
from jax.experimental import pallas as pl
from jax.experimental.pallas import tpu as pltpu


_EPS = 1e-12
_VMEM_LIMIT_BYTES = 32 * 1024 * 1024   # explicit, well under v7x's 64 MiB physical
_TILE_BYTE_CAP = 2 * 1024 * 1024       # per-operand block cap (double-buffered x2)


# ----------------------------------------------------------------------------
# Batch-block sizing
# ----------------------------------------------------------------------------

def _choose_bb(B, N):
    """Matrices per grid step: the largest divisor of B whose (bb, N, N) f32 tile
    fits the byte cap.  Always a divisor -> no ragged blocks, no VMEM blowup."""
    max_bb = max(1, _TILE_BYTE_CAP // (N * N * 4))
    for bb in range(min(B, max_bb), 0, -1):
        if B % bb == 0:
            return bb
    return 1


# ----------------------------------------------------------------------------
# Pallas kernels
# ----------------------------------------------------------------------------

def _congruence_kernel(a_ref, x_ref, o_ref):
    # out_b = A @ X_b @ A  ==  A @ (X_b @ A), computed as two batched MXU matmuls
    # in the standard 'bij,bjk->bik' form (guaranteed Mosaic lowering).
    a = a_ref[...]                                             # (N, N)
    x3 = x_ref[...]                                            # (bb, N, N)
    ab = jnp.broadcast_to(a, x3.shape)                         # (bb, N, N), once per step
    v3 = lax.dot_general(x3, ab, (((2,), (1,)), ((0,), (0,))),
                         preferred_element_type=jnp.float32)   # V_b = X_b @ A
    v3 = v3.astype(a.dtype)
    o_ref[...] = lax.dot_general(ab, v3, (((2,), (1,)), ((0,), (0,))),
                                 preferred_element_type=jnp.float32)   # A @ V_b


def congruence_batched(a, x, *, mxu_dtype=jnp.float32):
    """out[b] = a @ x[b] @ a for a batch x of (N, N) matrices.

    mxu_dtype selects the MXU operand precision (accumulation is always f32).
    Use bf16 only where the result does not feed an eigendecomposition.
    """
    B, N, _ = x.shape
    bb = _choose_bb(B, N)
    return pl.pallas_call(
        _congruence_kernel,
        out_shape=jax.ShapeDtypeStruct((B, N, N), jnp.float32),
        grid=(B // bb,),
        in_specs=[pl.BlockSpec((N, N), lambda i: (0, 0)),
                  pl.BlockSpec((bb, N, N), lambda i: (i, 0, 0))],
        out_specs=pl.BlockSpec((bb, N, N), lambda i: (i, 0, 0)),
        compiler_params=pltpu.CompilerParams(
            dimension_semantics=("parallel",),
            vmem_limit_bytes=_VMEM_LIMIT_BYTES),
    )(a.astype(mxu_dtype), x.astype(mxu_dtype))


def _log_recon_mean_kernel(inv_b, eps, u_ref, l_ref, o_ref):
    # Fused: mean_b( U_b @ diag(log l_b) @ U_b^T ) as an accumulating reduction.
    step = pl.program_id(0)

    @pl.when(step == 0)
    def _():
        o_ref[...] = jnp.zeros_like(o_ref)

    u3 = u_ref[...]                                            # (bb, N, N)
    ll = jnp.log(jnp.maximum(l_ref[...], eps))                 # (bb, 1, N), clamped
    w3 = u3 * ll                                               # U_b @ diag(log l_b)
    # sum_b W_b @ U_b^T : batched 'bij,bkj->bik' then reduce the block axis.
    t3 = lax.dot_general(w3, u3, (((2,), (2,)), ((0,), (0,))),
                         preferred_element_type=jnp.float32)   # (bb, N, N)
    # TODO(synk): if N grows well beyond 16, pad this (N, N) accumulator to a
    # lane-dense (N, 128) slab to avoid masked partial stores.
    o_ref[...] += jnp.sum(t3, axis=0)

    @pl.when(step == pl.num_programs(0) - 1)
    def _():
        o_ref[...] *= inv_b


def log_recon_mean(u, l, *, eps=_EPS):
    """mean_b( u[b] @ diag(log(max(l[b], eps))) @ u[b].T ) -> (N, N)."""
    B, N, _ = u.shape
    bb = _choose_bb(B, N)
    l3 = l.reshape(B, 1, N).astype(jnp.float32)
    # TODO(synk): on v7x, split this reduction grid into (2, steps/2) with
    # ("parallel", "arbitrary") + two partial outputs summed in XLA so both
    # TensorCores participate; at demo sizes steps == 1 so it is left single-core.
    return pl.pallas_call(
        functools.partial(_log_recon_mean_kernel, 1.0 / B, eps),
        out_shape=jax.ShapeDtypeStruct((N, N), jnp.float32),
        grid=(B // bb,),
        in_specs=[pl.BlockSpec((bb, N, N), lambda i: (i, 0, 0)),
                  pl.BlockSpec((bb, 1, N), lambda i: (i, 0, 0))],
        out_specs=pl.BlockSpec((N, N), lambda i: (0, 0)),
        compiler_params=pltpu.CompilerParams(
            dimension_semantics=("arbitrary",),
            vmem_limit_bytes=_VMEM_LIMIT_BYTES),
    )(u.astype(jnp.float32), l3)


# ----------------------------------------------------------------------------
# Single-matrix SPD helpers (plain XLA — Pallas over one 16x16 is pure overhead)
# ----------------------------------------------------------------------------

def _eigh_sym(x):
    # TODO(synk): symmetric eigendecomposition is an iterative algorithm with no
    # clean Pallas equivalent; it stays in XLA (jnp.linalg.eigh). Symmetrize so
    # the UPLO choice ('U' in torch vs 'L' in jnp) is irrelevant.
    xs = 0.5 * (x + jnp.swapaxes(x, -1, -2))
    return jnp.linalg.eigh(xs)


def _exp_single(m):
    l, u = _eigh_sym(m)
    return (u * jnp.exp(l)) @ u.T


def _sqrtm_and_invsqrt(m):
    # sqrtm via ONE eigh (== exp(0.5*log(m)) for SPD m); inverse sqrt from the
    # same factorization — symmetric by construction, no LU inverse needed.
    l, u = _eigh_sym(m)
    sl = jnp.sqrt(jnp.maximum(l, _EPS))
    return (u * sl) @ u.T, (u * (1.0 / sl)) @ u.T


def _invsqrtm_single(m):
    l, u = _eigh_sym(m)
    return (u * (1.0 / jnp.sqrt(jnp.maximum(l, _EPS)))) @ u.T


# ----------------------------------------------------------------------------
# Karcher mean + SPDNormalization forward
# ----------------------------------------------------------------------------

def karcher_mean(x, num_iter=1):
    """Mirrors `mean(spds, num_iter)` from the PyTorch reference."""
    B, N, _ = x.shape
    m = jnp.mean(x, axis=0)                               # Euclidean init (XLA reduce)
    for _ in range(num_iter):
        c, c_inv = _sqrtm_and_invsqrt(m)
        # Feeds eigh -> log: keep MXU operands in f32 (bf16 rounding would compound).
        y = congruence_batched(c_inv, x, mxu_dtype=jnp.float32)
        l, u = _eigh_sym(y)                               # batched eigh (XLA)
        tm_core = log_recon_mean(u, l)                    # mean_b(log(y_b))
        # c_inv @ (c @ tm_core @ c) @ c_inv == tm_core exactly, so skip the sandwich:
        m = c @ _exp_single(tm_core) @ c
    return m


class SPDNormalization:
    """JAX/Pallas port of the PyTorch SPDNormalization module (forward only)."""

    def __init__(self, input_size):
        # Parameter G = eye(input_size); unused in forward (parity with torch).
        self.G = jnp.eye(input_size, dtype=jnp.float32)

    def __call__(self, x):
        # x: (B, N, N) batch of SPD matrices
        x = x.astype(jnp.float32)
        center = karcher_mean(x, num_iter=1)
        center_sqrt_inv = _invsqrtm_single(center)        # inv(sqrtm(center))
        # Output congruence: bf16 MXU operands, f32 accumulation (does not feed eigh).
        return congruence_batched(center_sqrt_inv, x, mxu_dtype=jnp.bfloat16)


# ----------------------------------------------------------------------------
# Pure-JAX reference (mirrors the torch code) for a sanity check
# ----------------------------------------------------------------------------

def _ref_forward(x):
    def _exp(m):
        l, u = _eigh_sym(m)
        return (u * jnp.exp(l)[..., None, :]) @ jnp.swapaxes(u, -1, -2)

    def _log(m):
        l, u = _eigh_sym(m)
        return (u * jnp.log(l)[..., None, :]) @ jnp.swapaxes(u, -1, -2)

    def _sqrtm(m):
        return _exp(0.5 * _log(m))

    m = jnp.mean(x, axis=0)
    for _ in range(1):
        c = _sqrtm(m)
        c_inv = jnp.linalg.inv(c)
        t = _log(c_inv @ x @ c_inv)
        tm = jnp.mean(c @ t @ c, axis=0)
        m = c @ _exp(c_inv @ tm @ c_inv) @ c
    cs = _sqrtm(m)
    csi = jnp.linalg.inv(cs)
    return csi @ x @ csi


# ----------------------------------------------------------------------------
# Demo
# ----------------------------------------------------------------------------

if __name__ == "__main__":
    key = jax.random.PRNGKey(0)
    B, N = 8, 16
    a = jax.random.normal(key, (B, N, N), dtype=jnp.float32)
    # Deterministic batch of SPD matrices: A A^T + 0.5 I
    x = jnp.einsum("bij,bkj->bik", a, a) + 0.5 * jnp.eye(N, dtype=jnp.float32)

    module = SPDNormalization(N)
    out = jax.jit(module.__call__)(x)
    jax.block_until_ready(out)

    assert out.shape == (B, N, N)
    assert out.dtype == jnp.float32
    assert bool(jnp.all(jnp.isfinite(out)))

    ref = _ref_forward(x)
    assert bool(jnp.allclose(out, ref, rtol=2e-2, atol=2e-2))

    print("KERNEL_OK")
</pallas_src>

<mosaic_0001>
module attributes {stable_mosaic.version = 11 : i64} {
  func.func @_congruence_kernel(%arg0: i32, %arg1: memref<16x16xf32, #tpu.memory_space<vmem>>, %arg2: memref<8x16x16xf32, #tpu.memory_space<vmem>>, %arg3: memref<8x16x16xf32, #tpu.memory_space<vmem>>) attributes {dimension_semantics = [#tpu.dimension_semantics<parallel>], iteration_bounds = array<i64: 1>, scalar_prefetch = 0 : i64, scratch_operands = 0 : i64, tpu.core_type = #tpu.core_type<tc>, window_params = [{pipeline_mode = #tpu.pipeline_mode<synchronous>, transform_indices = @transform_0, window_bounds = array<i64: 16, 16>}, {transform_indices = @transform_1, window_bounds = array<i64: 8, 16, 16>}, {transform_indices = @transform_2, window_bounds = array<i64: 8, 16, 16>}]} {
    %c0 = arith.constant 0 : index
    %c0_0 = arith.constant 0 : index
    %0 = vector.load %arg1[%c0, %c0_0] : memref<16x16xf32, #tpu.memory_space<vmem>>, vector<16x16xf32>
    %c0_1 = arith.constant 0 : index
    %c0_2 = arith.constant 0 : index
    %c0_3 = arith.constant 0 : index
    %1 = vector.load %arg2[%c0_1, %c0_2, %c0_3] : memref<8x16x16xf32, #tpu.memory_space<vmem>>, vector<8x16x16xf32>
    %2 = vector.shape_cast %0 : vector<16x16xf32> to vector<1x16x16xf32>
    %3 = vector.broadcast %2 : vector<1x16x16xf32> to vector<8x16x16xf32>
    %cst = arith.constant dense<0.000000e+00> : vector<8x16x16xf32>
    %4 = tpu.matmul %1, %3, %cst {dimension_numbers = #tpu.dot_dimension_numbers<[2], [1], [1], [2], [0, 0, 0, 1, 1, 2], [0], [0]>} : vector<8x16x16xf32>, vector<8x16x16xf32>, vector<8x16x16xf32> -> vector<8x16x16xf32>
    %cst_4 = arith.constant dense<0.000000e+00> : vector<8x16x16xf32>
    %5 = tpu.matmul %3, %4, %cst_4 {dimension_numbers = #tpu.dot_dimension_numbers<[2], [1], [1], [2], [0, 0, 0, 1, 1, 2], [0], [0]>} : vector<8x16x16xf32>, vector<8x16x16xf32>, vector<8x16x16xf32> -> vector<8x16x16xf32>
    %c0_5 = arith.constant 0 : index
    %c0_6 = arith.constant 0 : index
    %c0_7 = arith.constant 0 : index
    %6 = vector.load %arg3[%c0_5, %c0_6, %c0_7] : memref<8x16x16xf32, #tpu.memory_space<vmem>>, vector<8x16x16xf32>
    tpu.vector_store %arg3[%c0_5, %c0_6, %c0_7], %5 {strides = array<i32>} : memref<8x16x16xf32, #tpu.memory_space<vmem>>, vector<8x16x16xf32>,
    return
  }
  func.func @transform_0(%arg0: i32) -> (i32, i32) {
    %c0_i32 = arith.constant 0 : i32
    %c0_i32_0 = arith.constant 0 : i32
    %c0_i32_1 = arith.constant 0 : i32
    return %c0_i32, %c0_i32_0 : i32, i32
  }
  func.func @transform_1(%arg0: i32) -> (i32, i32, i32) {
    %c0_i32 = arith.constant 0 : i32
    %c0_i32_0 = arith.constant 0 : i32
    %c0_i32_1 = arith.constant 0 : i32
    return %arg0, %c0_i32, %c0_i32_0 : i32, i32, i32
  }
  func.func @transform_2(%arg0: i32) -> (i32, i32, i32) {
    %c0_i32 = arith.constant 0 : i32
    %c0_i32_0 = arith.constant 0 : i32
    %c0_i32_1 = arith.constant 0 : i32
    return %arg0, %c0_i32, %c0_i32_0 : i32, i32, i32
  }
}

module attributes {stable_mosaic.version = 11 : i64} {
  func.func @_log_recon_mean_kernel(%arg0: i32, %arg1: memref<8x16x16xf32, #tpu.memory_space<vmem>>, %arg2: memref<8x1x16xf32, #tpu.memory_space<vmem>>, %arg3: memref<16x16xf32, #tpu.memory_space<vmem>>) attributes {dimension_semantics = [#tpu.dimension_semantics<arbitrary>], iteration_bounds = array<i64: 1>, scalar_prefetch = 0 : i64, scratch_operands = 0 : i64, tpu.core_type = #tpu.core_type<tc>, window_params = [{transform_indices = @transform_0, window_bounds = array<i64: 8, 16, 16>}, {transform_indices = @transform_1, window_bounds = array<i64: 8, 1, 16>}, {pipeline_mode = #tpu.pipeline_mode<synchronous>, transform_indices = @transform_2, window_bounds = array<i64: 16, 16>}]} {
    %c0_i32 = arith.constant 0 : i32
    %0 = arith.cmpi eq, %arg0, %c0_i32 : i32
    %1 = arith.extui %0 : i1 to i32
    %c0_i32_0 = arith.constant 0 : i32
    %2 = arith.cmpi ne, %1, %c0_i32_0 : i32
    scf.if %2 {
      %cst_14 = arith.constant 0.000000e+00 : f32
      %18 = vector.broadcast %cst_14 : f32 to vector<16x16xf32>
      %c0_15 = arith.constant 0 : index
      %c0_16 = arith.constant 0 : index
      %19 = vector.load %arg3[%c0_15, %c0_16] : memref<16x16xf32, #tpu.memory_space<vmem>>, vector<16x16xf32>
      tpu.vector_store %arg3[%c0_15, %c0_16], %18 {strides = array<i32>} : memref<16x16xf32, #tpu.memory_space<vmem>>, vector<16x16xf32>,
    } else {
    }
    %c0 = arith.constant 0 : index
    %c0_1 = arith.constant 0 : index
    %c0_2 = arith.constant 0 : index
    %3 = vector.load %arg1[%c0, %c0_1, %c0_2] : memref<8x16x16xf32, #tpu.memory_space<vmem>>, vector<8x16x16xf32>
    %c0_3 = arith.constant 0 : index
    %c0_4 = arith.constant 0 : index
    %c0_5 = arith.constant 0 : index
    %4 = vector.load %arg2[%c0_3, %c0_4, %c0_5] : memref<8x1x16xf32, #tpu.memory_space<vmem>>, vector<8x1x16xf32>
    %cst = arith.constant 9.99999996E-13 : f32
    %5 = vector.broadcast %cst : f32 to vector<8x1x16xf32>
    %6 = arith.maximumf %4, %5 : vector<8x1x16xf32>
    %7 = math.log %6 : vector<8x1x16xf32>
    %8 = vector.broadcast %7 : vector<8x1x16xf32> to vector<8x16x16xf32>
    %9 = arith.mulf %3, %8 : vector<8x16x16xf32>
    %cst_6 = arith.constant dense<0.000000e+00> : vector<8x16x16xf32>
    %10 = tpu.matmul %9, %3, %cst_6 {dimension_numbers = #tpu.dot_dimension_numbers<[2], [2], [1], [1], [0, 0, 0, 1, 1, 1], [0], [0]>} : vector<8x16x16xf32>, vector<8x16x16xf32>, vector<8x16x16xf32> -> vector<8x16x16xf32>
    %c0_7 = arith.constant 0 : index
    %c0_8 = arith.constant 0 : index
    %11 = vector.load %arg3[%c0_7, %c0_8] : memref<16x16xf32, #tpu.memory_space<vmem>>, vector<16x16xf32>
    %cst_9 = arith.constant dense<0.000000e+00> : vector<16x16xf32>
    %12 = vector.multi_reduction <add>, %10, %cst_9 [0] : vector<8x16x16xf32> to vector<16x16xf32>
    %13 = arith.addf %11, %12 : vector<16x16xf32>
    %c0_10 = arith.constant 0 : index
    %c0_11 = arith.constant 0 : index
    %14 = vector.load %arg3[%c0_10, %c0_11] : memref<16x16xf32, #tpu.memory_space<vmem>>, vector<16x16xf32>
    tpu.vector_store %arg3[%c0_10, %c0_11], %13 {strides = array<i32>} : memref<16x16xf32, #tpu.memory_space<vmem>>, vector<16x16xf32>,
    %c0_i32_12 = arith.constant 0 : i32
    %15 = arith.cmpi eq, %arg0, %c0_i32_12 : i32
    %16 = arith.extui %15 : i1 to i32
    %c0_i32_13 = arith.constant 0 : i32
    %17 = arith.cmpi ne, %16, %c0_i32_13 : i32
    scf.if %17 {
      %c0_14 = arith.constant 0 : index
      %c0_15 = arith.constant 0 : index
      %18 = vector.load %arg3[%c0_14, %c0_15] : memref<16x16xf32, #tpu.memory_space<vmem>>, vector<16x16xf32>
      %cst_16 = arith.constant 1.250000e-01 : f32
      %19 = vector.broadcast %cst_16 : f32 to vector<16x16xf32>
      %20 = arith.mulf %18, %19 : vector<16x16xf32>
      %c0_17 = arith.constant 0 : index
      %c0_18 = arith.constant 0 : index
      %21 = vector.load %arg3[%c0_17, %c0_18] : memref<16x16xf32, #tpu.memory_space<vmem>>, vector<16x16xf32>
      tpu.vector_store %arg3[%c0_17, %c0_18], %20 {strides = array<i32>} : memref<16x16xf32, #tpu.memory_space<vmem>>, vector<16x16xf32>,
    } else {
    }
    return
  }
  func.func @transform_0(%arg0: i32) -> (i32, i32, i32) {
    %c0_i32 = arith.constant 0 : i32
    %c0_i32_0 = arith.constant 0 : i32
    %c0_i32_1 = arith.constant 0 : i32
    return %arg0, %c0_i32, %c0_i32_0 : i32, i32, i32
  }
  func.func @transform_1(%arg0: i32) -> (i32, i32, i32) {
    %c0_i32 = arith.constant 0 : i32
    %c0_i32_0 = arith.constant 0 : i32
    %c0_i32_1 = arith.constant 0 : i32
    return %arg0, %c0_i32, %c0_i32_0 : i32, i32, i32
  }
  func.func @transform_2(%arg0: i32) -> (i32, i32) {
    %c0_i32 = arith.constant 0 : i32
    %c0_i32_0 = arith.constant 0 : i32
    %c0_i32_1 = arith.constant 0 : i32
    return %c0_i32, %c0_i32_0 : i32, i32
  }
}

module attributes {stable_mosaic.version = 11 : i64} {
  func.func @_congruence_kernel(%arg0: i32, %arg1: memref<16x16xbf16, #tpu.memory_space<vmem>>, %arg2: memref<8x16x16xbf16, #tpu.memory_space<vmem>>, %arg3: memref<8x16x16xf32, #tpu.memory_space<vmem>>) attributes {dimension_semantics = [#tpu.dimension_semantics<parallel>], iteration_bounds = array<i64: 1>, scalar_prefetch = 0 : i64, scratch_operands = 0 : i64, tpu.core_type = #tpu.core_type<tc>, window_params = [{pipeline_mode = #tpu.pipeline_mode<synchronous>, transform_indices = @transform_0, window_bounds = array<i64: 16, 16>}, {transform_indices = @transform_1, window_bounds = array<i64: 8, 16, 16>}, {transform_indices = @transform_2, window_bounds = array<i64: 8, 16, 16>}]} {
    %c0 = arith.constant 0 : index
    %c0_0 = arith.constant 0 : index
    %0 = vector.load %arg1[%c0, %c0_0] : memref<16x16xbf16, #tpu.memory_space<vmem>>, vector<16x16xbf16>
    %c0_1 = arith.constant 0 : index
    %c0_2 = arith.constant 0 : index
    %c0_3 = arith.constant 0 : index
    %1 = vector.load %arg2[%c0_1, %c0_2, %c0_3] : memref<8x16x16xbf16, #tpu.memory_space<vmem>>, vector<8x16x16xbf16>
    %2 = vector.shape_cast %0 : vector<16x16xbf16> to vector<1x16x16xbf16>
    %3 = vector.broadcast %2 : vector<1x16x16xbf16> to vector<8x16x16xbf16>
    %cst = arith.constant dense<0.000000e+00> : vector<8x16x16xf32>
    %4 = tpu.matmul %1, %3, %cst {dimension_numbers = #tpu.dot_dimension_numbers<[2], [1], [1], [2], [0, 0, 0, 1, 1, 2], [0], [0]>} : vector<8x16x16xbf16>, vector<8x16x16xbf16>, vector<8x16x16xf32> -> vector<8x16x16xf32>
    %5 = arith.truncf %4 : vector<8x16x16xf32> to vector<8x16x16xbf16>
    %cst_4 = arith.constant dense<0.000000e+00> : vector<8x16x16xf32>
    %6 = tpu.matmul %3, %5, %cst_4 {dimension_numbers = #tpu.dot_dimension_numbers<[2], [1], [1], [2], [0, 0, 0, 1, 1, 2], [0], [0]>} : vector<8x16x16xbf16>, vector<8x16x16xbf16>, vector<8x16x16xf32> -> vector<8x16x16xf32>
    %c0_5 = arith.constant 0 : index
    %c0_6 = arith.constant 0 : index
    %c0_7 = arith.constant 0 : index
    %7 = vector.load %arg3[%c0_5, %c0_6, %c0_7] : memref<8x16x16xf32, #tpu.memory_space<vmem>>, vector<8x16x16xf32>
    tpu.vector_store %arg3[%c0_5, %c0_6, %c0_7], %6 {strides = array<i32>} : memref<8x16x16xf32, #tpu.memory_space<vmem>>, vector<8x16x16xf32>,
    return
  }
  func.func @transform_0(%arg0: i32) -> (i32, i32) {
    %c0_i32 = arith.constant 0 : i32
    %c0_i32_0 = arith.constant 0 : i32
    %c0_i32_1 = arith.constant 0 : i32
    return %c0_i32, %c0_i32_0 : i32, i32
  }
  func.func @transform_1(%arg0: i32) -> (i32, i32, i32) {
    %c0_i32 = arith.constant 0 : i32
    %c0_i32_0 = arith.constant 0 : i32
    %c0_i32_1 = arith.constant 0 : i32
    return %arg0, %c0_i32, %c0_i32_0 : i32, i32, i32
  }
  func.func @transform_2(%arg0: i32) -> (i32, i32, i32) {
    %c0_i32 = arith.constant 0 : i32
    %c0_i32_0 = arith.constant 0 : i32
    %c0_i32_1 = arith.constant 0 : i32
    return %arg0, %c0_i32, %c0_i32_0 : i32, i32, i32
  }
}

</mosaic_0001>

<llo_original>
// kernel: custom-call.7
$region0: #{custom-call.7}
  %s0 = inlined_call_operand.vmem [shape: f32[8,8], index: 0, kind: input, shape index: {}]
  %s1 = inlined_call_operand.vmem [shape: f32[8,8], index: 1, kind: input, shape index: {}]
  %s2 = inlined_call_operand.vmem [shape: f32[8,8], index: 2, kind: input, shape index: {}]
  %s3 = inlined_call_operand.vmem [shape: f32[8,8], index: 3, kind: input, shape index: {}]
  %s4 = inlined_call_operand.vmem [shape: f32[8], index: 4, kind: output, shape index: {0}]
  %s5 = inlined_call_operand.vmem [shape: f32[8], index: 5, kind: output, shape index: {1}]
  %s6 = inlined_call_operand.vmem [shape: f32[8,8], index: 6, kind: output, shape index: {2}]
  %s7 = inlined_call_operand.vmem [shape: f32[8,8], index: 7, kind: output, shape index: {3}]
  %s8 = inlined_call_operand.vmem [shape: f32[8,8], index: 8, kind: output, shape index: {4}]
  %s9 = inlined_call_operand.vmem [shape: f32[8,8], index: 9, kind: output, shape index: {5}]
  %10 = xla_tuple %s4, %s5, %s6, %s7, %s8, %s9
  $region1: #{custom-call.7} parent=0
    #allocation0 [shape = 'u8[4096]{0}', space=vmem, size = 0x1000, scoped, tag = 'operand span for operand 0']
    #allocation1 [shape = 'u8[4096]{0}', space=vmem, size = 0x1000, scoped, tag = 'operand span for operand 1']
    #allocation2 [shape = 'u8[4096]{0}', space=vmem, size = 0x1000, scoped, tag = 'operand span for operand 2']
    #allocation3 [shape = 'u8[4096]{0}', space=vmem, size = 0x1000, scoped, tag = 'operand span for operand 3']
    #allocation4 [shape = 'u8[4096]{0}', space=vmem, size = 0x1000, scoped, tag = 'operand span for operand 4']
    #allocation5 [shape = 'u8[512]{0}', space=vmem, size = 0x400, scoped, tag = 'packed  for operand 4']
    #allocation6 [shape = 'u8[4096]{0}', space=vmem, size = 0x1000, scoped, tag = 'operand span for operand 5']
    #allocation7 [shape = 'u8[512]{0}', space=vmem, size = 0x400, scoped, tag = 'packed  for operand 5']
    #allocation8 [shape = 'u8[4096]{0}', space=vmem, size = 0x1000, scoped, tag = 'operand span for operand 6']
    #allocation9 [shape = 'u8[4096]{0}', space=vmem, size = 0x1000, scoped, tag = 'operand span for operand 7']
    #allocation10 [shape = 'u8[4096]{0}', space=vmem, size = 0x1000, scoped, tag = 'operand span for operand 8']
    #allocation11 [shape = 'u8[4096]{0}', space=vmem, size = 0x1000, scoped, tag = 'operand span for operand 9']
    #allocation12 [shape = 'f32[8,8]{1,0}', space=vmem, size = 0x1000, scoped, tag = 'a top-left matrix']
    #allocation13 [shape = 'f32[8,8]{1,0}', space=vmem, size = 0x1000, scoped, tag = 'a top-right matrix']
    #allocation14 [shape = 'f32[8,8]{1,0}', space=vmem, size = 0x1000, scoped, tag = 'a bottom-left matrix']
    #allocation15 [shape = 'f32[8,8]{1,0}', space=vmem, size = 0x1000, scoped, tag = 'a bottom-right matrix']
    %p12 = scmp.gt.s32.totalorder 8, 0
    // Predicated region
    $region2: #{custom-call.7} parent=1 // pred_check
      %p13 = pneg %p12
    $region3: #{custom-call.7} parent=1 // pred_check_branch
      %15 = sbr.rel (%p13) target = $region5
    $region4: #{custom-call.7} parent=1 // pred_region
      %s16 = sshra.s32 8, 3
      %p17 = scmp.gt.s32.totalorder %s16, 0
      // Predicated region
      $region6: #{custom-call.7} parent=4 // pred_check
        %p18 = pneg %p17
      $region7: #{custom-call.7} parent=4 // pred_check_branch
        %20 = sbr.rel (%p18) target = $region9
      $region8: #{custom-call.7} parent=4 // pred_region
        %s21 = ssub.s32 %s16, 1
        %s22 = smul.u32 %s21, 128
        %s23 = sshra.s32 %s22, 4
        %s24 = scalar_lea.vmem %s0, %s23
        %v25 = vld [vmem:[%s0] sm:$0xff]
        // While loop
        $region10: #{custom-call.7} parent=8 // loop_pre_header
          _
        $region11: #{custom-call.7} parent=8 // loop_header
          %s26 = sphi %s0, %s48
          %s27 = sphi [#allocation0], %s49
          %v28 = vphi %v25, %v50
          %s29 = ssub.s32 %s24, 64
          %p30 = scmp.gt.s32.totalorder %s26, %s29
        $region12: #{custom-call.7} parent=8 // loop_header_branch
          %32 = sbr.rel (%p30) target = $region16
        $region13: #{custom-call.7} parent=8 // loop_body
          %33 = vst [vmem:[%s27] sm:$0xff] %v28
          %v34 = vld [vmem:[%s26 + $0x8] sm:$0xff]
          %35 = vst [vmem:[%s27 + $0x8] sm:$0xff] %v34
          %v36 = vld [vmem:[%s26 + $0x10] sm:$0xff]
          %37 = vst [vmem:[%s27 + $0x10] sm:$0xff] %v36
          %v38 = vld [vmem:[%s26 + $0x18] sm:$0xff]
          %39 = vst [vmem:[%s27 + $0x18] sm:$0xff] %v38
          %v40 = vld [vmem:[%s26 + $0x20] sm:$0xff]
          %41 = vst [vmem:[%s27 + $0x20] sm:$0xff] %v40
          %v42 = vld [vmem:[%s26 + $0x28] sm:$0xff]
          %43 = vst [vmem:[%s27 + $0x28] sm:$0xff] %v42
          %v44 = vld [vmem:[%s26 + $0x30] sm:$0xff]
          %45 = vst [vmem:[%s27 + $0x30] sm:$0xff] %v44
          %v46 = vld [vmem:[%s26 + $0x38] sm:$0xff]
          %47 = vst [vmem:[%s27 + $0x38] sm:$0xff] %v46
        $region14: #{custom-call.7} parent=8 // loop_footer
          %s48 = scalar_lea.vmem %s26, 64
          %s49 = scalar_lea.vmem %s27, 64
          %v50 = vld [vmem:[%s26 + $0x40] sm:$0xff]
        $region15: #{custom-call.7} parent=8 // loop_footer_branch
          %51 = sbr.rel target = $region11
        $region16: #{custom-call.7} parent=8 // loop_exit
          _
        // While loop
        $region17: #{custom-call.7} parent=8 // loop_pre_header
          _
        $region18: #{custom-call.7} parent=8 // loop_header
          %s52 = sphi %s26, %s60
          %s53 = sphi %s27, %s61
          %v54 = vphi %v28, %v54
          %p55 = scmp.gt.s32.totalorder %s52, %s24
        $region19: #{custom-call.7} parent=8 // loop_header_branch
          %57 = sbr.rel (%p55) target = $region23
        $region20: #{custom-call.7} parent=8 // loop_body
          %v58 = vld [vmem:[%s52] sm:$0xff]
          %59 = vst [vmem:[%s53] sm:$0xff] %v58
        $region21: #{custom-call.7} parent=8 // loop_footer
          %s60 = scalar_lea.vmem %s52, 8
          %s61 = scalar_lea.vmem %s53, 8
        $region22: #{custom-call.7} parent=8 // loop_footer_branch
          %62 = sbr.rel target = $region18
        $region23: #{custom-call.7} parent=8 // loop_exit
          _
      $region9: #{custom-call.7} parent=4 // pred_fallthru
        _
      %s63 = sand.u32 8, 7
      %s64 = sshllo.u32 0, %s63
      %s65 = smul.u32 %s16, 128
      %s66 = sshra.s32 %s65, 4
      %s67 = scalar_lea.vmem [#allocation0], %s66
      %s68 = smul.u32 %s16, 128
      %s69 = sshra.s32 %s68, 4
      %s70 = scalar_lea.vmem %s0, %s69
      %v71 = vld [vmem:[%s70] sm:%s64]
      %72 = vst [vmem:[%s67] sm:%s64] %v71
    $region5: #{custom-call.7} parent=1 // pred_fallthru
      _
    %p74 = scmp.gt.s32.totalorder 8, 0
    // Predicated region
    $region24: #{custom-call.7} parent=1 // pred_check
      %p75 = pneg %p74
    $region25: #{custom-call.7} parent=1 // pred_check_branch
      %77 = sbr.rel (%p75) target = $region27
    $region26: #{custom-call.7} parent=1 // pred_region
      %s78 = sshra.s32 8, 3
      %p79 = scmp.gt.s32.totalorder %s78, 0
      // Predicated region
      $region28: #{custom-call.7} parent=26 // pred_check
        %p80 = pneg %p79
      $region29: #{custom-call.7} parent=26 // pred_check_branch
        %82 = sbr.rel (%p80) target = $region31
      $region30: #{custom-call.7} parent=26 // pred_region
        %s83 = ssub.s32 %s78, 1
        %s84 = smul.u32 %s83, 128
        %s85 = sshra.s32 %s84, 4
        %s86 = scalar_lea.vmem %s1, %s85
        %v87 = vld [vmem:[%s1] sm:$0xff]
        // While loop
        $region32: #{custom-call.7} parent=30 // loop_pre_header
          _
        $region33: #{custom-call.7} parent=30 // loop_header
          %s88 = sphi %s1, %s110
          %s89 = sphi [#allocation1], %s111
          %v90 = vphi %v87, %v112
          %s91 = ssub.s32 %s86, 64
          %p92 = scmp.gt.s32.totalorder %s88, %s91
        $region34: #{custom-call.7} parent=30 // loop_header_branch
          %94 = sbr.rel (%p92) target = $region38
        $region35: #{custom-call.7} parent=30 // loop_body
          %95 = vst [vmem:[%s89] sm:$0xff] %v90
          %v96 = vld [vmem:[%s88 + $0x8] sm:$0xff]
          %97 = vst [vmem:[%s89 + $0x8] sm:$0xff] %v96
          %v98 = vld [vmem:[%s88 + $0x10] sm:$0xff]
          %99 = vst [vmem:[%s89 + $0x10] sm:$0xff] %v98
          %v100 = vld [vmem:[%s88 + $0x18] sm:$0xff]
          %101 = vst [vmem:[%s89 + $0x18] sm:$0xff] %v100
          %v102 = vld [vmem:[%s88 + $0x20] sm:$0xff]
          %103 = vst [vmem:[%s89 + $0x20] sm:$0xff] %v102
          %v104 = vld [vmem:[%s88 + $0x28] sm:$0xff]
          %105 = vst [vmem:[%s89 + $0x28] sm:$0xff] %v104
          %v106 = vld [vmem:[%s88 + $0x30] sm:$0xff]
          %107 = vst [vmem:[%s89 + $0x30] sm:$0xff] %v106
          %v108 = vld [vmem:[%s88 + $0x38] sm:$0xff]
          %109 = vst [vmem:[%s89 + $0x38] sm:$0xff] %v108
        $region36: #{custom-call.7} parent=30 // loop_footer
          %s110 = scalar_lea.vmem %s88, 64
          %s111 = scalar_lea.vmem %s89, 64
          %v112 = vld [vmem:[%s88 + $0x40] sm:$0xff]
        $region37: #{custom-call.7} parent=30 // loop_footer_branch
          %113 = sbr.rel target = $region33
        $region38: #{custom-call.7} parent=30 // loop_exit
          _
        // While loop
        $region39: #{custom-call.7} parent=30 // loop_pre_header
          _
        $region40: #{custom-call.7} parent=30 // loop_header
          %s114 = sphi %s88, %s122
          %s115 = sphi %s89, %s123
          %v116 = vphi %v90, %v116
          %p117 = scmp.gt.s32.totalorder %s114, %s86
        $region41: #{custom-call.7} parent=30 // loop_header_branch
          %119 = sbr.rel (%p117) target = $region45
        $region42: #{custom-call.7} parent=30 // loop_body
          %v120 = vld [vmem:[%s114] sm:$0xff]
          %121 = vst [vmem:[%s115] sm:$0xff] %v120
        $region43: #{custom-call.7} parent=30 // loop_footer
          %s122 = scalar_lea.vmem %s114, 8
          %s123 = scalar_lea.vmem %s115, 8
        $region44: #{custom-call.7} parent=30 // loop_footer_branch
          %124 = sbr.rel target = $region40
        $region45: #{custom-call.7} parent=30 // loop_exit
          _
      $region31: #{custom-call.7} parent=26 // pred_fallthru
        _
      %s125 = sand.u32 8, 7
      %s126 = sshllo.u32 0, %s125
      %s127 = smul.u32 %s78, 128
      %s128 = sshra.s32 %s127, 4
      %s129 = scalar_lea.vmem [#allocation1], %s128
      %s130 = smul.u32 %s78, 128
      %s131 = sshra.s32 %s130, 4
      %s132 = scalar_lea.vmem %s1, %s131
      %v133 = vld [vmem:[%s132] sm:%s126]
      %134 = vst [vmem:[%s129] sm:%s126] %v133
    $region27: #{custom-call.7} parent=1 // pred_fallthru
      _
    %p136 = scmp.gt.s32.totalorder 8, 0
    // Predicated region
    $region46: #{custom-call.7} parent=1 // pred_check
      %p137 = pneg %p136
    $region47: #{custom-call.7} parent=1 // pred_check_branch
      %139 = sbr.rel (%p137) target = $region49
    $region48: #{custom-call.7} parent=1 // pred_region
      %s140 = sshra.s32 8, 3
      %p141 = scmp.gt.s32.totalorder %s140, 0
      // Predicated region
      $region50: #{custom-call.7} parent=48 // pred_check
        %p142 = pneg %p141
      $region51: #{custom-call.7} parent=48 // pred_check_branch
        %144 = sbr.rel (%p142) target = $region53
      $region52: #{custom-call.7} parent=48 // pred_region
        %s145 = ssub.s32 %s140, 1
        %s146 = smul.u32 %s145, 128
        %s147 = sshra.s32 %s146, 4
        %s148 = scalar_lea.vmem %s2, %s147
        %v149 = vld [vmem:[%s2] sm:$0xff]
        // While loop
        $region54: #{custom-call.7} parent=52 // loop_pre_header
          _
        $region55: #{custom-call.7} parent=52 // loop_header
          %s150 = sphi %s2, %s172
          %s151 = sphi [#allocation2], %s173
          %v152 = vphi %v149, %v174
          %s153 = ssub.s32 %s148, 64
          %p154 = scmp.gt.s32.totalorder %s150, %s153
        $region56: #{custom-call.7} parent=52 // loop_header_branch
          %156 = sbr.rel (%p154) target = $region60
        $region57: #{custom-call.7} parent=52 // loop_body
          %157 = vst [vmem:[%s151] sm:$0xff] %v152
          %v158 = vld [vmem:[%s150 + $0x8] sm:$0xff]
          %159 = vst [vmem:[%s151 + $0x8] sm:$0xff] %v158
          %v160 = vld [vmem:[%s150 + $0x10] sm:$0xff]
          %161 = vst [vmem:[%s151 + $0x10] sm:$0xff] %v160
          %v162 = vld [vmem:[%s150 + $0x18] sm:$0xff]
          %163 = vst [vmem:[%s151 + $0x18] sm:$0xff] %v162
          %v164 = vld [vmem:[%s150 + $0x20] sm:$0xff]
          %165 = vst [vmem:[%s151 + $0x20] sm:$0xff] %v164
          %v166 = vld [vmem:[%s150 + $0x28] sm:$0xff]
          %167 = vst [vmem:[%s151 + $0x28] sm:$0xff] %v166
          %v168 = vld [vmem:[%s150 + $0x30] sm:$0xff]
          %169 = vst [vmem:[%s151 + $0x30] sm:$0xff] %v168
          %v170 = vld [vmem:[%s150 + $0x38] sm:$0xff]
          %171 = vst [vmem:[%s151 + $0x38] sm:$0xff] %v170
        $region58: #{custom-call.7} parent=52 // loop_footer
          %s172 = scalar_lea.vmem %s150, 64
          %s173 = scalar_lea.vmem %s151, 64
          %v174 = vld [vmem:[%s150 + $0x40] sm:$0xff]
        $region59: #{custom-call.7} parent=52 // loop_footer_branch
          %175 = sbr.rel target = $region55
        $region60: #{custom-call.7} parent=52 // loop_exit
          _
        // While loop
        $region61: #{custom-call.7} parent=52 // loop_pre_header
          _
        $region62: #{custom-call.7} parent=52 // loop_header
          %s176 = sphi %s150, %s184
          %s177 = sphi %s151, %s185
          %v178 = vphi %v152, %v178
          %p179 = scmp.gt.s32.totalorder %s176, %s148
        $region63: #{custom-call.7} parent=52 // loop_header_branch
          %181 = sbr.rel (%p179) target = $region67
        $region64: #{custom-call.7} parent=52 // loop_body
          %v182 = vld [vmem:[%s176] sm:$0xff]
          %183 = vst [vmem:[%s177] sm:$0xff] %v182
        $region65: #{custom-call.7} parent=52 // loop_footer
          %s184 = scalar_lea.vmem %s176, 8
          %s185 = scalar_lea.vmem %s177, 8
        $region66: #{custom-call.7} parent=52 // loop_footer_branch
          %186 = sbr.rel target = $region62
        $region67: #{custom-call.7} parent=52 // loop_exit
          _
      $region53: #{custom-call.7} parent=48 // pred_fallthru
        _
      %s187 = sand.u32 8, 7
      %s188 = sshllo.u32 0, %s187
      %s189 = smul.u32 %s140, 128
      %s190 = sshra.s32 %s189, 4
      %s191 = scalar_lea.vmem [#allocation2], %s190
      %s192 = smul.u32 %s140, 128
      %s193 = sshra.s32 %s192, 4
      %s194 = scalar_lea.vmem %s2, %s193
      %v195 = vld [vmem:[%s194] sm:%s188]
      %196 = vst [vmem:[%s191] sm:%s188] %v195
    $region49: #{custom-call.7} parent=1 // pred_fallthru
      _
    %p198 = scmp.gt.s32.totalorder 8, 0
    // Predicated region
    $region68: #{custom-call.7} parent=1 // pred_check
      %p199 = pneg %p198
    $region69: #{custom-call.7} parent=1 // pred_check_branch
      %201 = sbr.rel (%p199) target = $region71
    $region70: #{custom-call.7} parent=1 // pred_region
      %s202 = sshra.s32 8, 3
      %p203 = scmp.gt.s32.totalorder %s202, 0
      // Predicated region
      $region72: #{custom-call.7} parent=70 // pred_check
        %p204 = pneg %p203
      $region73: #{custom-call.7} parent=70 // pred_check_branch
        %206 = sbr.rel (%p204) target = $region75
      $region74: #{custom-call.7} parent=70 // pred_region
        %s207 = ssub.s32 %s202, 1
        %s208 = smul.u32 %s207, 128
        %s209 = sshra.s32 %s208, 4
        %s210 = scalar_lea.vmem %s3, %s209
        %v211 = vld [vmem:[%s3] sm:$0xff]
        // While loop
        $region76: #{custom-call.7} parent=74 // loop_pre_header
          _
        $region77: #{custom-call.7} parent=74 // loop_header
          %s212 = sphi %s3, %s234
          %s213 = sphi [#allocation3], %s235
          %v214 = vphi %v211, %v236
          %s215 = ssub.s32 %s210, 64
          %p216 = scmp.gt.s32.totalorder %s212, %s215
        $region78: #{custom-call.7} parent=74 // loop_header_branch
          %218 = sbr.rel (%p216) target = $region82
        $region79: #{custom-call.7} parent=74 // loop_body
          %219 = vst [vmem:[%s213] sm:$0xff] %v214
          %v220 = vld [vmem:[%s212 + $0x8] sm:$0xff]
          %221 = vst [vmem:[%s213 + $0x8] sm:$0xff] %v220
          %v222 = vld [vmem:[%s212 + $0x10] sm:$0xff]
          %223 = vst [vmem:[%s213 + $0x10] sm:$0xff] %v222
          %v224 = vld [vmem:[%s212 + $0x18] sm:$0xff]
          %225 = vst [vmem:[%s213 + $0x18] sm:$0xff] %v224
          %v226 = vld [vmem:[%s212 + $0x20] sm:$0xff]
          %227 = vst [vmem:[%s213 + $0x20] sm:$0xff] %v226
          %v228 = vld [vmem:[%s212 + $0x28] sm:$0xff]
          %229 = vst [vmem:[%s213 + $0x28] sm:$0xff] %v228
          %v230 = vld [vmem:[%s212 + $0x30] sm:$0xff]
          %231 = vst [vmem:[%s213 + $0x30] sm:$0xff] %v230
          %v232 = vld [vmem:[%s212 + $0x38] sm:$0xff]
          %233 = vst [vmem:[%s213 + $0x38] sm:$0xff] %v232
        $region80: #{custom-call.7} parent=74 // loop_footer
          %s234 = scalar_lea.vmem %s212, 64
          %s235 = scalar_lea.vmem %s213, 64
          %v236 = vld [vmem:[%s212 + $0x40] sm:$0xff]
        $region81: #{custom-call.7} parent=74 // loop_footer_branch
          %237 = sbr.rel target = $region77
        $region82: #{custom-call.7} parent=74 // loop_exit
          _
        // While loop
        $region83: #{custom-call.7} parent=74 // loop_pre_header
          _
        $region84: #{custom-call.7} parent=74 // loop_header
          %s238 = sphi %s212, %s246
          %s239 = sphi %s213, %s247
          %v240 = vphi %v214, %v240
          %p241 = scmp.gt.s32.totalorder %s238, %s210
        $region85: #{custom-call.7} parent=74 // loop_header_branch
          %243 = sbr.rel (%p241) target = $region89
        $region86: #{custom-call.7} parent=74 // loop_body
          %v244 = vld [vmem:[%s238] sm:$0xff]
          %245 = vst [vmem:[%s239] sm:$0xff] %v244
        $region87: #{custom-call.7} parent=74 // loop_footer
          %s246 = scalar_lea.vmem %s238, 8
          %s247 = scalar_lea.vmem %s239, 8
        $region88: #{custom-call.7} parent=74 // loop_footer_branch
          %248 = sbr.rel target = $region84
        $region89: #{custom-call.7} parent=74 // loop_exit
          _
      $region75: #{custom-call.7} parent=70 // pred_fallthru
        _
      %s249 = sand.u32 8, 7
      %s250 = sshllo.u32 0, %s249
      %s251 = smul.u32 %s202, 128
      %s252 = sshra.s32 %s251, 4
      %s253 = scalar_lea.vmem [#allocation3], %s252
      %s254 = smul.u32 %s202, 128
      %s255 = sshra.s32 %s254, 4
      %s256 = scalar_lea.vmem %s3, %s255
      %v257 = vld [vmem:[%s256] sm:%s250]
      %258 = vst [vmem:[%s253] sm:%s250] %v257
    $region71: #{custom-call.7} parent=1 // pred_fallthru
      _
    %s259 = smov [#allocation12]
    %v260 = vld [vmem:[#allocation0] sm:$0xff]
    %261 = vst [vmem:[%s259] sm:$0xff] %v260
    %s262 = smov [#allocation13]
    %v263 = vld [vmem:[#allocation1] sm:$0xff]
    %264 = vst [vmem:[%s262] sm:$0xff] %v263
    %s265 = smov [#allocation14]
    %v266 = vld [vmem:[#allocation2] sm:$0xff]
    %267 = vst [vmem:[%s265] sm:$0xff] %v266
    %s268 = smov [#allocation15]
    %v269 = vld [vmem:[#allocation3] sm:$0xff]
    %270 = vst [vmem:[%s268] sm:$0xff] %v269
    %271 = vst [vmem:[#allocation8] sm:$0xff] 0.0
    %272 = vst [vmem:[#allocation9] sm:$0xff] 0.0
    %273 = vst [vmem:[#allocation10] sm:$0xff] 0.0
    %274 = vst [vmem:[#allocation11] sm:$0xff] 0.0
    %s275 = smov [#allocation8]
    %v276 = vlaneseq
    %v277 = vand.u32 %v276, 127
    %v278 = vmov %v277
    %v279 = vlaneseq
    %v280 = vshrl.u32 %v279, 7
    %v281 = vmov %v280
    %v282 = vld [vmem:[%s275] sm:$0xff]
    %vm285 = vcmp.eq.s32.totalorder %v281, %v278
    %v286 = vsel %vm285, 1.0, %v282
    %287 = vst [vmem:[%s275] sm:$0xff] %v286
    %s288 = smov [#allocation11]
    %v289 = vlaneseq
    %v290 = vand.u32 %v289, 127
    %v291 = vmov %v290
    %v292 = vlaneseq
    %v293 = vshrl.u32 %v292, 7
    %v294 = vmov %v293
    %v295 = vld [vmem:[%s288] sm:$0xff]
    %vm298 = vcmp.eq.s32.totalorder %v294, %v291
    %v299 = vsel %vm298, 1.0, %v295
    %300 = vst [vmem:[%s288] sm:$0xff] %v299
    // While loop
    $region90: #{custom-call.7} parent=1 // loop_pre_header
      _
    $region91: #{custom-call.7} parent=1 // loop_header
      %s302 = sphi 0, %s844
      %v303 = vlaneseq
      %v304 = vand.u32 %v303, 127
      %v305 = vmov %v304
      %v306 = vlaneseq
      %v307 = vshrl.u32 %v306, 7
      %v308 = vmov %v307
      %s309 = smov [#allocation12]
      %v310 = vlaneseq
      %v311 = vand.u32 %v310, 127
      %vm312 = vcmp.ge.s32.totalorder %v311, 0
      %vm313 = vcmp.lt.s32.totalorder %v311, 8
      %vm314 = vmand %vm312, %vm313
      %v315 = vld [vmem:[%s309] sm:$0xff]
      %v316 = vsel %vm314, %v315, 0.0
      %v317 = vmul.f32 %v316, %v316
      %vm320 = vcmp.eq.s32.totalorder %v308, %v305
      %v321 = vsel %vm320, 0.0, %v317
      %v322 = vlaneseq
      %v323 = vand.u32 %v322, 127
      %v324 = vmov %v323
      %v325 = vlaneseq
      %v326 = vshrl.u32 %v325, 7
      %v327 = vmov %v326
      %s328 = smov [#allocation13]
      %v329 = vlaneseq
      %v330 = vand.u32 %v329, 127
      %vm331 = vcmp.ge.s32.totalorder %v330, 0
      %vm332 = vcmp.lt.s32.totalorder %v330, 8
      %vm333 = vmand %vm331, %vm332
      %v334 = vld [vmem:[%s328] sm:$0xff]
      %v335 = vsel %vm333, %v334, 0.0
      %v336 = vmul.f32 %v335, %v335
      %v337 = vadd.f32 %v321, %v336
      %v338 = vadd.f32 %v317, %v336
      %v339 = vlaneseq
      %v340 = vand.u32 %v339, 127
      %v341 = vmov %v340
      %v342 = vlaneseq
      %v343 = vshrl.u32 %v342, 7
      %v344 = vmov %v343
      %s345 = smov [#allocation14]
      %v346 = vlaneseq
      %v347 = vand.u32 %v346, 127
      %vm348 = vcmp.ge.s32.totalorder %v347, 0
      %vm349 = vcmp.lt.s32.totalorder %v347, 8
      %vm350 = vmand %vm348, %vm349
      %v351 = vld [vmem:[%s345] sm:$0xff]
      %v352 = vsel %vm350, %v351, 0.0
      %v353 = vmul.f32 %v352, %v352
      %v354 = vadd.f32 %v337, %v353
      %v355 = vadd.f32 %v338, %v353
      %v356 = vlaneseq
      %v357 = vand.u32 %v356, 127
      %v358 = vmov %v357
      %v359 = vlaneseq
      %v360 = vshrl.u32 %v359, 7
      %v361 = vmov %v360
      %s362 = smov [#allocation15]
      %v363 = vlaneseq
      %v364 = vand.u32 %v363, 127
      %vm365 = vcmp.ge.s32.totalorder %v364, 0
      %vm366 = vcmp.lt.s32.totalorder %v364, 8
      %vm367 = vmand %vm365, %vm366
      %v368 = vld [vmem:[%s362] sm:$0xff]
      %v369 = vsel %vm367, %v368, 0.0
      %v370 = vmul.f32 %v369, %v369
      %vm373 = vcmp.eq.s32.totalorder %v361, %v358
      %v374 = vsel %vm373, 0.0, %v370
      %v375 = vadd.f32 %v354, %v374
      %v376 = vadd.f32 %v355, %v370
      %377 = vadd.xlane.f32.xlu0 %v376
      %v378 = vpop.xlane.xlu0 %377
      %v379 = vrot.slane %v378, 4
      %v380 = vadd.f32 %v378, %v379
      %v381 = vrot.slane %v380, 2
      %v382 = vadd.f32 %v380, %v381
      %v383 = vrot.slane %v382, 1
      %v384 = vadd.f32 %v382, %v383
      %385 = vadd.xlane.f32.xlu0 %v375
      %v386 = vpop.xlane.xlu0 %385
      %v387 = vrot.slane %v386, 4
      %v388 = vadd.f32 %v386, %v387
      %v389 = vrot.slane %v388, 2
      %v390 = vadd.f32 %v388, %v389
      %v391 = vrot.slane %v390, 1
      %v392 = vadd.f32 %v390, %v391
      %s393 = vtos %v392
      %s394 = vtos %v384
      %s395 = smul.f32 1e-10, %s394
      %p396 = scmp.le.f32.partialorder %s393, %s395
      %p397 = scmp.ge.s32.totalorder %s302, 15
      %p398 = por %p396, %p397
    $region92: #{custom-call.7} parent=1 // loop_header_branch
      %846 = sbr.rel (%p398) target = $region96
    $region93: #{custom-call.7} parent=1 // loop_body
      loop: start=0, step=1, limit=15
      $region97: #{custom-call.7} parent=93 // loop_pre_header
        _
      $region98: #{custom-call.7} parent=93 // loop_header
        %s400 = sphi 0, %s404
        %p401 = scmp.ge.s32.totalorder %s400, 15
      $region99: #{custom-call.7} parent=93 // loop_header_branch
        %403 = sbr.rel (%p401) target = $region103
      $region100: #{custom-call.7} parent=93 // loop_body
        #allocation16 [shape = 'f32[1024]{0}', space=vmem, size = 0x1000, scoped, tag = 'a_tl_diag vmem']
        #allocation17 [shape = 'f32[1024]{0}', space=vmem, size = 0x1000, scoped, tag = 'a_tr_diag vmem']
        #allocation18 [shape = 'f32[1024]{0}', space=vmem, size = 0x1000, scoped, tag = 'a_br_diag vmem']
        #allocation19 [shape = 'f32[1024]{0}', space=vmem, size = 0x1000, scoped, tag = 'rt1 vmem']
        #allocation20 [shape = 'f32[1024]{0}', space=vmem, size = 0x1000, scoped, tag = 'rt2 vmem']
        #allocation21 [shape = 'f32[1024]{0}', space=vmem, size = 0x1000, scoped, tag = 'c vmem']
        #allocation22 [shape = 'f32[1024]{0}', space=vmem, size = 0x1000, scoped, tag = 's vmem']
        #allocation23 [shape = 'f32[4096]{0}', space=vmem, size = 0x4000, scoped, tag = 'c broadcast']
        #allocation24 [shape = 'f32[4096]{0}', space=vmem, size = 0x4000, scoped, tag = 's broadcast']
        %s405 = smov [#allocation12]
        %s406 = smov [#allocation16]
        %v407 = vlaneseq
        %v408 = vand.u32 %v407, 127
        %v409 = vmov %v408
        %v410 = vlaneseq
        %v411 = vshrl.u32 %v410, 7
        %v412 = vmov %v411
        %v413 = vld [vmem:[%s405] sm:$0xff]
        %vm416 = vcmp.eq.s32.totalorder %v412, %v409
        %v417 = vsel %vm416, %v413, 0.0
        %v418 = vrot.slane %v417, 4
        %v419 = vadd.f32 %v417, %v418
        %v420 = vrot.slane %v419, 2
        %v421 = vadd.f32 %v419, %v420
        %v422 = vrot.slane %v421, 1
        %v423 = vadd.f32 %v421, %v422
        %424 = vst [vmem:[%s406] sm:$0x1] %v423
        %s425 = smov [#allocation13]
        %s426 = smov [#allocation17]
        %v427 = vlaneseq
        %v428 = vand.u32 %v427, 127
        %v429 = vmov %v428
        %v430 = vlaneseq
        %v431 = vshrl.u32 %v430, 7
        %v432 = vmov %v431
        %v433 = vld [vmem:[%s425] sm:$0xff]
        %vm436 = vcmp.eq.s32.totalorder %v432, %v429
        %v437 = vsel %vm436, %v433, 0.0
        %v438 = vrot.slane %v437, 4
        %v439 = vadd.f32 %v437, %v438
        %v440 = vrot.slane %v439, 2
        %v441 = vadd.f32 %v439, %v440
        %v442 = vrot.slane %v441, 1
        %v443 = vadd.f32 %v441, %v442
        %444 = vst [vmem:[%s426] sm:$0x1] %v443
        %s445 = smov [#allocation15]
        %s446 = smov [#allocation18]
        %v447 = vlaneseq
        %v448 = vand.u32 %v447, 127
        %v449 = vmov %v448
        %v450 = vlaneseq
        %v451 = vshrl.u32 %v450, 7
        %v452 = vmov %v451
        %v453 = vld [vmem:[%s445] sm:$0xff]
        %vm456 = vcmp.eq.s32.totalorder %v452, %v449
        %v457 = vsel %vm456, %v453, 0.0
        %v458 = vrot.slane %v457, 4
        %v459 = vadd.f32 %v457, %v458
        %v460 = vrot.slane %v459, 2
        %v461 = vadd.f32 %v459, %v460
        %v462 = vrot.slane %v461, 1
        %v463 = vadd.f32 %v461, %v462
        %464 = vst [vmem:[%s446] sm:$0x1] %v463
        %s465 = smov [#allocation21]
        %s466 = smov [#allocation22]
        %s467 = smov [#allocation16]
        %v468 = vld [vmem:[%s467] sm:$0xff]
        %s469 = smov [#allocation17]
        %v470 = vld [vmem:[%s469] sm:$0xff]
        %s471 = smov [#allocation18]
        %v472 = vld [vmem:[%s471] sm:$0xff]
        %v473 = vsub.f32 %v472, %v468
        %v474 = vmul.f32 2.0, %v470
        %v475 = vrcp.pop %v474
        %v476 = vmul.f32 %v473, %v475
        %vm477 = vcmp.ge.f32.partialorder %v476, 0.0
        %v478 = vmul.f32 %v476, %v476
        %v479 = vadd.f32 1.0, %v478
        %v480 = vrsqrt.pop %v479
        %v481 = vmul.f32 %v479, %v480
        %vm482 = vcmp.eq.f32.partialorder %v479, inf
        %v483 = vsel %vm482, %v479, %v481
        %vm484 = vcmp.eq.f32.partialorder %v479, 0.0
        %v485 = vand.u32 %v479, 2147483648
        %v486 = vsel %vm484, %v485, %v483
        %v487 = vxor.u32 %v486, 2147483648
        %v488 = vsel %vm477, %v486, %v487
        %v489 = vadd.f32 %v476, %v488
        %v490 = vrcp.pop %v489
        %v491 = vand.u32 2147483647, %v468
        %v492 = vand.u32 2147483647, %v470
        %v493 = vand.u32 2147483647, %v472
        %v494 = vmin.f32 %v491, %v493
        %v495 = vmul.f32 1.1920929e-08, %v494
        %vm496 = vcmp.le.f32.partialorder %v492, %v495
        %v497 = vsel %vm496, 0.0, %v490
        %v498 = vmul.f32 %v497, %v497
        %v499 = vadd.f32 1.0, %v498
        %v500 = vrsqrt.pop %v499
        %v501 = vmul.f32 %v497, %v500
        %v502 = vmul.f32 %v497, %v470
        %v503 = vsub.f32 %v468, %v502
        %v504 = vmul.f32 %v497, %v470
        %v505 = vadd.f32 %v472, %v504
        %s506 = smov [#allocation19]
        %507 = vst [vmem:[%s506] sm:$0xff] %v503
        %s508 = smov [#allocation20]
        %509 = vst [vmem:[%s508] sm:$0xff] %v505
        %s510 = smov %s465
        %511 = vst [vmem:[%s510] sm:$0xff] %v500
        %s512 = smov %s466
        %513 = vst [vmem:[%s512] sm:$0xff] %v501
        %s514 = smov [#allocation21]
        %v515 = vld [vmem:[%s514] ss:$0 sm:$0xff]
        %v516 = vlaneseq
        %v517 = vand.u32 %v516, 127
        %v518 = vmov %v517
        %v519 = vlaneseq
        %v520 = vshrl.u32 %v519, 7
        %v521 = vmov %v520
        %vm523 = vcmp.eq.s32.totalorder %v521, %v518
        %v524 = vsel %vm523, %v515, 0.0
        %525 = vadd.xlane.f32.xlu0 %v524
        %v526 = vpop.xlane.xlu0 %525
        %s527 = smov [#allocation23]
        %528 = vst [vmem:[%s527] sm:$0xff] %v526
        %s529 = smov [#allocation22]
        %v530 = vld [vmem:[%s529] ss:$0 sm:$0xff]
        %v531 = vlaneseq
        %v532 = vand.u32 %v531, 127
        %v533 = vmov %v532
        %v534 = vlaneseq
        %v535 = vshrl.u32 %v534, 7
        %v536 = vmov %v535
        %vm538 = vcmp.eq.s32.totalorder %v536, %v533
        %v539 = vsel %vm538, %v530, 0.0
        %540 = vadd.xlane.f32.xlu0 %v539
        %v541 = vpop.xlane.xlu0 %540
        %s542 = smov [#allocation24]
        %543 = vst [vmem:[%s542] sm:$0xff] %v541
        %s544 = smov [#allocation23]
        %v545 = vld [vmem:[%s544] sm:$0xff]
        %s546 = smov [#allocation24]
        %v547 = vld [vmem:[%s546] sm:$0xff]
        %s548 = smov [#allocation12]
        %s549 = smov [#allocation13]
        %s550 = smov [#allocation14]
        %s551 = smov [#allocation15]
        %v552 = vld [vmem:[%s548] sm:$0xff]
        %v553 = vld [vmem:[%s549] sm:$0xff]
        %v554 = vld [vmem:[%s550] sm:$0xff]
        %v555 = vld [vmem:[%s551] sm:$0xff]
        %v556 = vmul.f32 %v545, %v552
        %v557 = vmul.f32 %v547, %v554
        %v558 = vsub.f32 %v556, %v557
        %v559 = vmul.f32 %v545, %v553
        %v560 = vmul.f32 %v547, %v555
        %v561 = vsub.f32 %v559, %v560
        %v562 = vmul.f32 %v547, %v552
        %v563 = vmul.f32 %v545, %v554
        %v564 = vadd.f32 %v562, %v563
        %v565 = vmul.f32 %v547, %v553
        %v566 = vmul.f32 %v545, %v555
        %v567 = vadd.f32 %v565, %v566
        %568 = vst [vmem:[%s548] sm:$0xff] %v558
        %569 = vst [vmem:[%s549] sm:$0xff] %v561
        %570 = vst [vmem:[%s550] sm:$0xff] %v564
        %571 = vst [vmem:[%s551] sm:$0xff] %v567
        %s572 = smov [#allocation21]
        %v573 = vld [vmem:[%s572] ss:$0 sm:$0xff]
        %s574 = smov [#allocation22]
        %v575 = vld [vmem:[%s574] ss:$0 sm:$0xff]
        %s576 = smov [#allocation12]
        %s577 = smov [#allocation13]
        %s578 = smov [#allocation14]
        %s579 = smov [#allocation15]
        %v580 = vld [vmem:[%s576] sm:$0xff]
        %v581 = vld [vmem:[%s577] sm:$0xff]
        %v582 = vld [vmem:[%s578] sm:$0xff]
        %v583 = vld [vmem:[%s579] sm:$0xff]
        %v584 = vmul.f32 %v573, %v580
        %v585 = vmul.f32 %v575, %v581
        %v586 = vsub.f32 %v584, %v585
        %v587 = vmul.f32 %v575, %v580
        %v588 = vmul.f32 %v573, %v581
        %v589 = vadd.f32 %v587, %v588
        %v590 = vmul.f32 %v573, %v582
        %v591 = vmul.f32 %v575, %v583
        %v592 = vsub.f32 %v590, %v591
        %v593 = vmul.f32 %v575, %v582
        %v594 = vmul.f32 %v573, %v583
        %v595 = vadd.f32 %v593, %v594
        %596 = vst [vmem:[%s576] sm:$0xff] %v586
        %597 = vst [vmem:[%s577] sm:$0xff] %v589
        %598 = vst [vmem:[%s578] sm:$0xff] %v592
        %599 = vst [vmem:[%s579] sm:$0xff] %v595
        %s600 = smov [#allocation12]
        %s601 = smov [#allocation19]
        %v602 = vlaneseq
        %v603 = vand.u32 %v602, 127
        %v604 = vmov %v603
        %v605 = vlaneseq
        %v606 = vshrl.u32 %v605, 7
        %v607 = vmov %v606
        %v608 = vld [vmem:[%s601] ss:$0 sm:$0xff]
        %v609 = vld [vmem:[%s600] sm:$0xff]
        %vm612 = vcmp.eq.s32.totalorder %v607, %v604
        %v613 = vsel %vm612, %v608, %v609
        %614 = vst [vmem:[%s600] sm:$0xff] %v613
        %s615 = smov [#allocation13]
        %v616 = vlaneseq
        %v617 = vand.u32 %v616, 127
        %v618 = vmov %v617
        %v619 = vlaneseq
        %v620 = vshrl.u32 %v619, 7
        %v621 = vmov %v620
        %v622 = vld [vmem:[%s615] sm:$0xff]
        %vm625 = vcmp.eq.s32.totalorder %v621, %v618
        %v626 = vsel %vm625, 0.0, %v622
        %627 = vst [vmem:[%s615] sm:$0xff] %v626
        %s628 = smov [#allocation14]
        %v629 = vlaneseq
        %v630 = vand.u32 %v629, 127
        %v631 = vmov %v630
        %v632 = vlaneseq
        %v633 = vshrl.u32 %v632, 7
        %v634 = vmov %v633
        %v635 = vld [vmem:[%s628] sm:$0xff]
        %vm638 = vcmp.eq.s32.totalorder %v634, %v631
        %v639 = vsel %vm638, 0.0, %v635
        %640 = vst [vmem:[%s628] sm:$0xff] %v639
        %s641 = smov [#allocation15]
        %s642 = smov [#allocation20]
        %v643 = vlaneseq
        %v644 = vand.u32 %v643, 127
        %v645 = vmov %v644
        %v646 = vlaneseq
        %v647 = vshrl.u32 %v646, 7
        %v648 = vmov %v647
        %v649 = vld [vmem:[%s642] ss:$0 sm:$0xff]
        %v650 = vld [vmem:[%s641] sm:$0xff]
        %vm653 = vcmp.eq.s32.totalorder %v648, %v645
        %v654 = vsel %vm653, %v649, %v650
        %655 = vst [vmem:[%s641] sm:$0xff] %v654
        %s656 = smov [#allocation12]
        %s657 = smov [#allocation13]
        %v658 = vld [vmem:[%s657] sm:$0xff]
        %659 = vrot.lane.b32.xlu0 %v658, 1
        %v660 = vpop.permute.xlu0 %659
        %v661 = vld [vmem:[%s656] sm:$0xff]
        %v662 = vld [vmem:[%s656] sm:$0xff]
        %663 = vrot.lane.b32.xlu0 %v662, 1
        %v664 = vpop.permute.xlu0 %663
        %v665 = vlaneseq
        %v666 = vand.u32 %v665, 127
        %vm667 = vcmp.eq.s32.totalorder %v666, 0
        %v668 = vsel %vm667, %v662, %v664
        %v669 = vlaneseq
        %v670 = vand.u32 %v669, 127
        %vm671 = vcmp.eq.s32.totalorder %v670, 1
        %v672 = vsel %vm671, %v660, %v668
        %v673 = vlaneseq
        %v674 = vand.u32 %v673, 127
        %vm675 = vcmp.ge.s32.totalorder %v674, 0
        %vm676 = vcmp.lt.s32.totalorder %v674, 8
        %vm677 = vmand %vm675, %vm676
        %v678 = vsel %vm677, %v672, 0.0
        %v679 = vld [vmem:[%s657] sm:$0xff]
        %680 = vrot.lane.b32.xlu0 %v679, 127
        %v681 = vpop.permute.xlu0 %680
        %v682 = vlaneseq
        %v683 = vand.u32 %v682, 127
        %vm684 = vcmp.eq.s32.totalorder %v683, 7
        %v685 = vsel %vm684, %v661, %v681
        %686 = vst [vmem:[%s656] sm:$0xff] %v678
        %687 = vst [vmem:[%s657] sm:$0xff] %v685
        %s688 = smov [#allocation14]
        %s689 = smov [#allocation15]
        %v690 = vld [vmem:[%s689] sm:$0xff]
        %691 = vrot.lane.b32.xlu0 %v690, 1
        %v692 = vpop.permute.xlu0 %691
        %v693 = vld [vmem:[%s688] sm:$0xff]
        %v694 = vld [vmem:[%s688] sm:$0xff]
        %695 = vrot.lane.b32.xlu0 %v694, 1
        %v696 = vpop.permute.xlu0 %695
        %v697 = vlaneseq
        %v698 = vand.u32 %v697, 127
        %vm699 = vcmp.eq.s32.totalorder %v698, 0
        %v700 = vsel %vm699, %v694, %v696
        %v701 = vlaneseq
        %v702 = vand.u32 %v701, 127
        %vm703 = vcmp.eq.s32.totalorder %v702, 1
        %v704 = vsel %vm703, %v692, %v700
        %v705 = vlaneseq
        %v706 = vand.u32 %v705, 127
        %vm707 = vcmp.ge.s32.totalorder %v706, 0
        %vm708 = vcmp.lt.s32.totalorder %v706, 8
        %vm709 = vmand %vm707, %vm708
        %v710 = vsel %vm709, %v704, 0.0
        %v711 = vld [vmem:[%s689] sm:$0xff]
        %712 = vrot.lane.b32.xlu0 %v711, 127
        %v713 = vpop.permute.xlu0 %712
        %v714 = vlaneseq
        %v715 = vand.u32 %v714, 127
        %vm716 = vcmp.eq.s32.totalorder %v715, 7
        %v717 = vsel %vm716, %v693, %v713
        %718 = vst [vmem:[%s688] sm:$0xff] %v710
        %719 = vst [vmem:[%s689] sm:$0xff] %v717
        %s720 = smov [#allocation12]
        %s721 = smov [#allocation14]
        %v722 = vld [vmem:[%s720] ss:$0 sm:$0xff]
        %s724 = scalar_lea.vmem %s720, 4294967295
        %v725 = vld [vmem:[%s724] sm:$0xfe]
        %v726 = vlaneseq
        %v727 = vshrl.u32 %v726, 7
        %vm728 = vcmp.eq.s32.totalorder %v727, 0
        %v729 = vsel %vm728, %v722, %v725
        %s730 = scalar_lea.vmem %s720, 7
        %v731 = vld [vmem:[%s730] ss:$0 sm:$0xff]
        %732 = vst [vmem:[%s720] sm:$0xff] %v729
        %v733 = vld [vmem:[%s721] ss:$0 sm:$0xff]
        %s734 = scalar_lea.vmem %s720, 1
        %735 = vst [vmem:[%s734] sm:$0x1] %v733
        %s736 = scalar_lea.vmem %s721, 1
        %v737 = vld [vmem:[%s736] sm:$0x7f]
        %v738 = vlaneseq
        %v739 = vshrl.u32 %v738, 7
        %vm740 = vcmp.eq.s32.totalorder %v739, 7
        %v741 = vsel %vm740, %v731, %v737
        %v742 = vld [vmem:[%s721] ss:$0 sm:$0xff]
        %743 = vst [vmem:[%s721] sm:$0xff] %v741
        %s744 = smov [#allocation13]
        %s745 = smov [#allocation15]
        %v746 = vld [vmem:[%s744] ss:$0 sm:$0xff]
        %s748 = scalar_lea.vmem %s744, 4294967295
        %v749 = vld [vmem:[%s748] sm:$0xfe]
        %v750 = vlaneseq
        %v751 = vshrl.u32 %v750, 7
        %vm752 = vcmp.eq.s32.totalorder %v751, 0
        %v753 = vsel %vm752, %v746, %v749
        %s754 = scalar_lea.vmem %s744, 7
        %v755 = vld [vmem:[%s754] ss:$0 sm:$0xff]
        %756 = vst [vmem:[%s744] sm:$0xff] %v753
        %v757 = vld [vmem:[%s745] ss:$0 sm:$0xff]
        %s758 = scalar_lea.vmem %s744, 1
        %759 = vst [vmem:[%s758] sm:$0x1] %v757
        %s760 = scalar_lea.vmem %s745, 1
        %v761 = vld [vmem:[%s760] sm:$0x7f]
        %v762 = vlaneseq
        %v763 = vshrl.u32 %v762, 7
        %vm764 = vcmp.eq.s32.totalorder %v763, 7
        %v765 = vsel %vm764, %v755, %v761
        %v766 = vld [vmem:[%s745] ss:$0 sm:$0xff]
        %767 = vst [vmem:[%s745] sm:$0xff] %v765
        %s768 = smov [#allocation23]
        %v769 = vld [vmem:[%s768] sm:$0xff]
        %s770 = smov [#allocation24]
        %v771 = vld [vmem:[%s770] sm:$0xff]
        %s772 = smov [#allocation8]
        %s773 = smov [#allocation9]
        %s774 = smov [#allocation10]
        %s775 = smov [#allocation11]
        %v776 = vld [vmem:[%s772] sm:$0xff]
        %v777 = vld [vmem:[%s773] sm:$0xff]
        %v778 = vld [vmem:[%s774] sm:$0xff]
        %v779 = vld [vmem:[%s775] sm:$0xff]
        %v780 = vmul.f32 %v769, %v776
        %v781 = vmul.f32 %v771, %v778
        %v782 = vsub.f32 %v780, %v781
        %v783 = vmul.f32 %v769, %v777
        %v784 = vmul.f32 %v771, %v779
        %v785 = vsub.f32 %v783, %v784
        %v786 = vmul.f32 %v771, %v776
        %v787 = vmul.f32 %v769, %v778
        %v788 = vadd.f32 %v786, %v787
        %v789 = vmul.f32 %v771, %v777
        %v790 = vmul.f32 %v769, %v779
        %v791 = vadd.f32 %v789, %v790
        %792 = vst [vmem:[%s772] sm:$0xff] %v782
        %793 = vst [vmem:[%s773] sm:$0xff] %v785
        %794 = vst [vmem:[%s774] sm:$0xff] %v788
        %795 = vst [vmem:[%s775] sm:$0xff] %v791
        %s796 = smov [#allocation8]
        %s797 = smov [#allocation10]
        %v798 = vld [vmem:[%s796] ss:$0 sm:$0xff]
        %s800 = scalar_lea.vmem %s796, 4294967295
        %v801 = vld [vmem:[%s800] sm:$0xfe]
        %v802 = vlaneseq
        %v803 = vshrl.u32 %v802, 7
        %vm804 = vcmp.eq.s32.totalorder %v803, 0
        %v805 = vsel %vm804, %v798, %v801
        %s806 = scalar_lea.vmem %s796, 7
        %v807 = vld [vmem:[%s806] ss:$0 sm:$0xff]
        %808 = vst [vmem:[%s796] sm:$0xff] %v805
        %v809 = vld [vmem:[%s797] ss:$0 sm:$0xff]
        %s810 = scalar_lea.vmem %s796, 1
        %811 = vst [vmem:[%s810] sm:$0x1] %v809
        %s812 = scalar_lea.vmem %s797, 1
        %v813 = vld [vmem:[%s812] sm:$0x7f]
        %v814 = vlaneseq
        %v815 = vshrl.u32 %v814, 7
        %vm816 = vcmp.eq.s32.totalorder %v815, 7
        %v817 = vsel %vm816, %v807, %v813
        %v818 = vld [vmem:[%s797] ss:$0 sm:$0xff]
        %819 = vst [vmem:[%s797] sm:$0xff] %v817
        %s820 = smov [#allocation9]
        %s821 = smov [#allocation11]
        %v822 = vld [vmem:[%s820] ss:$0 sm:$0xff]
        %s824 = scalar_lea.vmem %s820, 4294967295
        %v825 = vld [vmem:[%s824] sm:$0xfe]
        %v826 = vlaneseq
        %v827 = vshrl.u32 %v826, 7
        %vm828 = vcmp.eq.s32.totalorder %v827, 0
        %v829 = vsel %vm828, %v822, %v825
        %s830 = scalar_lea.vmem %s820, 7
        %v831 = vld [vmem:[%s830] ss:$0 sm:$0xff]
        %832 = vst [vmem:[%s820] sm:$0xff] %v829
        %v833 = vld [vmem:[%s821] ss:$0 sm:$0xff]
        %s834 = scalar_lea.vmem %s820, 1
        %835 = vst [vmem:[%s834] sm:$0x1] %v833
        %s836 = scalar_lea.vmem %s821, 1
        %v837 = vld [vmem:[%s836] sm:$0x7f]
        %v838 = vlaneseq
        %v839 = vshrl.u32 %v838, 7
        %vm840 = vcmp.eq.s32.totalorder %v839, 7
        %v841 = vsel %vm840, %v831, %v837
        %v842 = vld [vmem:[%s821] ss:$0 sm:$0xff]
        %843 = vst [vmem:[%s821] sm:$0xff] %v841
      $region101: #{custom-call.7} parent=93 // loop_footer
        %s404 = sadd.s32 1, %s400
      $region102: #{custom-call.7} parent=93 // loop_footer_branch
        %399 = sbr.rel target = $region98
      $region103: #{custom-call.7} parent=93 // loop_exit
        _
      %s844 = sadd.s32 %s302, 1
    $region94: #{custom-call.7} parent=1 // loop_footer
      _
    $region95: #{custom-call.7} parent=1 // loop_footer_branch
      %301 = sbr.rel target = $region91
    $region96: #{custom-call.7} parent=1 // loop_exit
      _
    %s847 = smov [#allocation12]
    %s848 = smov [#allocation4]
    %v849 = vlaneseq
    %v850 = vand.u32 %v849, 127
    %v851 = vmov %v850
    %v852 = vlaneseq
    %v853 = vshrl.u32 %v852, 7
    %v854 = vmov %v853
    %v855 = vld [vmem:[%s847] sm:$0xff]
    %vm858 = vcmp.eq.s32.totalorder %v854, %v851
    %v859 = vsel %vm858, %v855, 0.0
    %v860 = vrot.slane %v859, 4
    %v861 = vadd.f32 %v859, %v860
    %v862 = vrot.slane %v861, 2
    %v863 = vadd.f32 %v861, %v862
    %v864 = vrot.slane %v863, 1
    %v865 = vadd.f32 %v863, %v864
    %866 = vst [vmem:[%s848] sm:$0x1] %v865
    %s867 = smov [#allocation15]
    %s868 = smov [#allocation6]
    %v869 = vlaneseq
    %v870 = vand.u32 %v869, 127
    %v871 = vmov %v870
    %v872 = vlaneseq
    %v873 = vshrl.u32 %v872, 7
    %v874 = vmov %v873
    %v875 = vld [vmem:[%s867] sm:$0xff]
    %vm878 = vcmp.eq.s32.totalorder %v874, %v871
    %v879 = vsel %vm878, %v875, 0.0
    %v880 = vrot.slane %v879, 4
    %v881 = vadd.f32 %v879, %v880
    %v882 = vrot.slane %v881, 2
    %v883 = vadd.f32 %v881, %v882
    %v884 = vrot.slane %v883, 1
    %v885 = vadd.f32 %v883, %v884
    %886 = vst [vmem:[%s868] sm:$0x1] %v885
    %s888 = sshllo.u32 0, 1
    %v890 = vld [vmem:[#allocation4] sm:%s888]
    %s891 = sshllo.u32 0, 1
    %892 = vst [vmem:[#allocation5] sm:%s891] %v890
    %s894 = sshllo.u32 0, 1
    %v896 = vld [vmem:[#allocation6] sm:%s894]
    %s897 = sshllo.u32 0, 1
    %898 = vst [vmem:[#allocation7] sm:%s897] %v896
    // Predicated region
    $region104: #{custom-call.7} parent=1 // pred_check
      _
    $region105: #{custom-call.7} parent=1 // pred_check_branch
      %900 = sbr.rel (0) target = $region107
    $region106: #{custom-call.7} parent=1 // pred_region
      %p902 = scmp.gt.s32.totalorder 1, 0
      // Predicated region
      $region108: #{custom-call.7} parent=106 // pred_check
        %p903 = pneg %p902
      $region109: #{custom-call.7} parent=106 // pred_check_branch
        %905 = sbr.rel (%p903) target = $region111
      $region110: #{custom-call.7} parent=106 // pred_region
        %s906 = sshra.s32 1, 3
        %p907 = scmp.gt.s32.totalorder %s906, 0
        // Predicated region
        $region112: #{custom-call.7} parent=110 // pred_check
          %p908 = pneg %p907
        $region113: #{custom-call.7} parent=110 // pred_check_branch
          %910 = sbr.rel (%p908) target = $region115
        $region114: #{custom-call.7} parent=110 // pred_region
          %s911 = ssub.s32 %s906, 1
          %s912 = smul.u32 %s911, 128
          %s913 = sshra.s32 %s912, 4
          %s914 = scalar_lea.vmem [#allocation5], %s913
          %v915 = vld [vmem:[#allocation5] sm:$0xff]
          // While loop
          $region116: #{custom-call.7} parent=114 // loop_pre_header
            _
          $region117: #{custom-call.7} parent=114 // loop_header
            %s916 = sphi [#allocation5], %s938
            %s917 = sphi %s4, %s939
            %v918 = vphi %v915, %v940
            %s919 = ssub.s32 %s914, 64
            %p920 = scmp.gt.s32.totalorder %s916, %s919
          $region118: #{custom-call.7} parent=114 // loop_header_branch
            %922 = sbr.rel (%p920) target = $region122
          $region119: #{custom-call.7} parent=114 // loop_body
            %923 = vst [vmem:[%s917] sm:$0xff] %v918
            %v924 = vld [vmem:[%s916 + $0x8] sm:$0xff]
            %925 = vst [vmem:[%s917 + $0x8] sm:$0xff] %v924
            %v926 = vld [vmem:[%s916 + $0x10] sm:$0xff]
            %927 = vst [vmem:[%s917 + $0x10] sm:$0xff] %v926
            %v928 = vld [vmem:[%s916 + $0x18] sm:$0xff]
            %929 = vst [vmem:[%s917 + $0x18] sm:$0xff] %v928
            %v930 = vld [vmem:[%s916 + $0x20] sm:$0xff]
            %931 = vst [vmem:[%s917 + $0x20] sm:$0xff] %v930
            %v932 = vld [vmem:[%s916 + $0x28] sm:$0xff]
            %933 = vst [vmem:[%s917 + $0x28] sm:$0xff] %v932
            %v934 = vld [vmem:[%s916 + $0x30] sm:$0xff]
            %935 = vst [vmem:[%s917 + $0x30] sm:$0xff] %v934
            %v936 = vld [vmem:[%s916 + $0x38] sm:$0xff]
            %937 = vst [vmem:[%s917 + $0x38] sm:$0xff] %v936
          $region120: #{custom-call.7} parent=114 // loop_footer
            %s938 = scalar_lea.vmem %s916, 64
            %s939 = scalar_lea.vmem %s917, 64
            %v940 = vld [vmem:[%s916 + $0x40] sm:$0xff]
          $region121: #{custom-call.7} parent=114 // loop_footer_branch
            %941 = sbr.rel target = $region117
          $region122: #{custom-call.7} parent=114 // loop_exit
            _
          // While loop
          $region123: #{custom-call.7} parent=114 // loop_pre_header
            _
          $region124: #{custom-call.7} parent=114 // loop_header
            %s942 = sphi %s916, %s950
            %s943 = sphi %s917, %s951
            %v944 = vphi %v918, %v944
            %p945 = scmp.gt.s32.totalorder %s942, %s914
          $region125: #{custom-call.7} parent=114 // loop_header_branch
            %947 = sbr.rel (%p945) target = $region129
          $region126: #{custom-call.7} parent=114 // loop_body
            %v948 = vld [vmem:[%s942] sm:$0xff]
            %949 = vst [vmem:[%s943] sm:$0xff] %v948
          $region127: #{custom-call.7} parent=114 // loop_footer
            %s950 = scalar_lea.vmem %s942, 8
            %s951 = scalar_lea.vmem %s943, 8
          $region128: #{custom-call.7} parent=114 // loop_footer_branch
            %952 = sbr.rel target = $region124
          $region129: #{custom-call.7} parent=114 // loop_exit
            _
        $region115: #{custom-call.7} parent=110 // pred_fallthru
          _
        %s953 = sand.u32 1, 7
        %s954 = sshllo.u32 0, %s953
        %s955 = smul.u32 %s906, 128
        %s956 = sshra.s32 %s955, 4
        %s957 = scalar_lea.vmem %s4, %s956
        %s958 = smul.u32 %s906, 128
        %s959 = sshra.s32 %s958, 4
        %s960 = scalar_lea.vmem [#allocation5], %s959
        %v961 = vld [vmem:[%s960] sm:%s954]
        %962 = vst [vmem:[%s957] sm:%s954] %v961
      $region111: #{custom-call.7} parent=106 // pred_fallthru
        _
    $region107: #{custom-call.7} parent=1 // pred_fallthru
      _
    // Predicated region
    $region130: #{custom-call.7} parent=1 // pred_check
      _
    $region131: #{custom-call.7} parent=1 // pred_check_branch
      %964 = sbr.rel (0) target = $region133
    $region132: #{custom-call.7} parent=1 // pred_region
      %p966 = scmp.gt.s32.totalorder 1, 0
      // Predicated region
      $region134: #{custom-call.7} parent=132 // pred_check
        %p967 = pneg %p966
      $region135: #{custom-call.7} parent=132 // pred_check_branch
        %969 = sbr.rel (%p967) target = $region137
      $region136: #{custom-call.7} parent=132 // pred_region
        %s970 = sshra.s32 1, 3
        %p971 = scmp.gt.s32.totalorder %s970, 0
        // Predicated region
        $region138: #{custom-call.7} parent=136 // pred_check
          %p972 = pneg %p971
        $region139: #{custom-call.7} parent=136 // pred_check_branch
          %974 = sbr.rel (%p972) target = $region141
        $region140: #{custom-call.7} parent=136 // pred_region
          %s975 = ssub.s32 %s970, 1
          %s976 = smul.u32 %s975, 128
          %s977 = sshra.s32 %s976, 4
          %s978 = scalar_lea.vmem [#allocation7], %s977
          %v979 = vld [vmem:[#allocation7] sm:$0xff]
          // While loop
          $region142: #{custom-call.7} parent=140 // loop_pre_header
            _
          $region143: #{custom-call.7} parent=140 // loop_header
            %s980 = sphi [#allocation7], %s1002
            %s981 = sphi %s5, %s1003
            %v982 = vphi %v979, %v1004
            %s983 = ssub.s32 %s978, 64
            %p984 = scmp.gt.s32.totalorder %s980, %s983
          $region144: #{custom-call.7} parent=140 // loop_header_branch
            %986 = sbr.rel (%p984) target = $region148
          $region145: #{custom-call.7} parent=140 // loop_body
            %987 = vst [vmem:[%s981] sm:$0xff] %v982
            %v988 = vld [vmem:[%s980 + $0x8] sm:$0xff]
            %989 = vst [vmem:[%s981 + $0x8] sm:$0xff] %v988
            %v990 = vld [vmem:[%s980 + $0x10] sm:$0xff]
            %991 = vst [vmem:[%s981 + $0x10] sm:$0xff] %v990
            %v992 = vld [vmem:[%s980 + $0x18] sm:$0xff]
            %993 = vst [vmem:[%s981 + $0x18] sm:$0xff] %v992
            %v994 = vld [vmem:[%s980 + $0x20] sm:$0xff]
            %995 = vst [vmem:[%s981 + $0x20] sm:$0xff] %v994
            %v996 = vld [vmem:[%s980 + $0x28] sm:$0xff]
            %997 = vst [vmem:[%s981 + $0x28] sm:$0xff] %v996
            %v998 = vld [vmem:[%s980 + $0x30] sm:$0xff]
            %999 = vst [vmem:[%s981 + $0x30] sm:$0xff] %v998
            %v1000 = vld [vmem:[%s980 + $0x38] sm:$0xff]
            %1001 = vst [vmem:[%s981 + $0x38] sm:$0xff] %v1000
          $region146: #{custom-call.7} parent=140 // loop_footer
            %s1002 = scalar_lea.vmem %s980, 64
            %s1003 = scalar_lea.vmem %s981, 64
            %v1004 = vld [vmem:[%s980 + $0x40] sm:$0xff]
          $region147: #{custom-call.7} parent=140 // loop_footer_branch
            %1005 = sbr.rel target = $region143
          $region148: #{custom-call.7} parent=140 // loop_exit
            _
          // While loop
          $region149: #{custom-call.7} parent=140 // loop_pre_header
            _
          $region150: #{custom-call.7} parent=140 // loop_header
            %s1006 = sphi %s980, %s1014
            %s1007 = sphi %s981, %s1015
            %v1008 = vphi %v982, %v1008
            %p1009 = scmp.gt.s32.totalorder %s1006, %s978
          $region151: #{custom-call.7} parent=140 // loop_header_branch
            %1011 = sbr.rel (%p1009) target = $region155
          $region152: #{custom-call.7} parent=140 // loop_body
            %v1012 = vld [vmem:[%s1006] sm:$0xff]
            %1013 = vst [vmem:[%s1007] sm:$0xff] %v1012
          $region153: #{custom-call.7} parent=140 // loop_footer
            %s1014 = scalar_lea.vmem %s1006, 8
            %s1015 = scalar_lea.vmem %s1007, 8
          $region154: #{custom-call.7} parent=140 // loop_footer_branch
            %1016 = sbr.rel target = $region150
          $region155: #{custom-call.7} parent=140 // loop_exit
            _
        $region141: #{custom-call.7} parent=136 // pred_fallthru
          _
        %s1017 = sand.u32 1, 7
        %s1018 = sshllo.u32 0, %s1017
        %s1019 = smul.u32 %s970, 128
        %s1020 = sshra.s32 %s1019, 4
        %s1021 = scalar_lea.vmem %s5, %s1020
        %s1022 = smul.u32 %s970, 128
        %s1023 = sshra.s32 %s1022, 4
        %s1024 = scalar_lea.vmem [#allocation7], %s1023
        %v1025 = vld [vmem:[%s1024] sm:%s1018]
        %1026 = vst [vmem:[%s1021] sm:%s1018] %v1025
      $region137: #{custom-call.7} parent=132 // pred_fallthru
        _
    $region133: #{custom-call.7} parent=1 // pred_fallthru
      _
    %p1028 = scmp.gt.s32.totalorder 8, 0
    // Predicated region
    $region156: #{custom-call.7} parent=1 // pred_check
      %p1029 = pneg %p1028
    $region157: #{custom-call.7} parent=1 // pred_check_branch
      %1031 = sbr.rel (%p1029) target = $region159
    $region158: #{custom-call.7} parent=1 // pred_region
      %s1032 = sshra.s32 8, 3
      %p1033 = scmp.gt.s32.totalorder %s1032, 0
      // Predicated region
      $region160: #{custom-call.7} parent=158 // pred_check
        %p1034 = pneg %p1033
      $region161: #{custom-call.7} parent=158 // pred_check_branch
        %1036 = sbr.rel (%p1034) target = $region163
      $region162: #{custom-call.7} parent=158 // pred_region
        %s1037 = ssub.s32 %s1032, 1
        %s1038 = smul.u32 %s1037, 128
        %s1039 = sshra.s32 %s1038, 4
        %s1040 = scalar_lea.vmem [#allocation8], %s1039
        %v1041 = vld [vmem:[#allocation8] sm:$0xff]
        // While loop
        $region164: #{custom-call.7} parent=162 // loop_pre_header
          _
        $region165: #{custom-call.7} parent=162 // loop_header
          %s1042 = sphi [#allocation8], %s1064
          %s1043 = sphi %s6, %s1065
          %v1044 = vphi %v1041, %v1066
          %s1045 = ssub.s32 %s1040, 64
          %p1046 = scmp.gt.s32.totalorder %s1042, %s1045
        $region166: #{custom-call.7} parent=162 // loop_header_branch
          %1048 = sbr.rel (%p1046) target = $region170
        $region167: #{custom-call.7} parent=162 // loop_body
          %1049 = vst [vmem:[%s1043] sm:$0xff] %v1044
          %v1050 = vld [vmem:[%s1042 + $0x8] sm:$0xff]
          %1051 = vst [vmem:[%s1043 + $0x8] sm:$0xff] %v1050
          %v1052 = vld [vmem:[%s1042 + $0x10] sm:$0xff]
          %1053 = vst [vmem:[%s1043 + $0x10] sm:$0xff] %v1052
          %v1054 = vld [vmem:[%s1042 + $0x18] sm:$0xff]
          %1055 = vst [vmem:[%s1043 + $0x18] sm:$0xff] %v1054
          %v1056 = vld [vmem:[%s1042 + $0x20] sm:$0xff]
          %1057 = vst [vmem:[%s1043 + $0x20] sm:$0xff] %v1056
          %v1058 = vld [vmem:[%s1042 + $0x28] sm:$0xff]
          %1059 = vst [vmem:[%s1043 + $0x28] sm:$0xff] %v1058
          %v1060 = vld [vmem:[%s1042 + $0x30] sm:$0xff]
          %1061 = vst [vmem:[%s1043 + $0x30] sm:$0xff] %v1060
          %v1062 = vld [vmem:[%s1042 + $0x38] sm:$0xff]
          %1063 = vst [vmem:[%s1043 + $0x38] sm:$0xff] %v1062
        $region168: #{custom-call.7} parent=162 // loop_footer
          %s1064 = scalar_lea.vmem %s1042, 64
          %s1065 = scalar_lea.vmem %s1043, 64
          %v1066 = vld [vmem:[%s1042 + $0x40] sm:$0xff]
        $region169: #{custom-call.7} parent=162 // loop_footer_branch
          %1067 = sbr.rel target = $region165
        $region170: #{custom-call.7} parent=162 // loop_exit
          _
        // While loop
        $region171: #{custom-call.7} parent=162 // loop_pre_header
          _
        $region172: #{custom-call.7} parent=162 // loop_header
          %s1068 = sphi %s1042, %s1076
          %s1069 = sphi %s1043, %s1077
          %v1070 = vphi %v1044, %v1070
          %p1071 = scmp.gt.s32.totalorder %s1068, %s1040
        $region173: #{custom-call.7} parent=162 // loop_header_branch
          %1073 = sbr.rel (%p1071) target = $region177
        $region174: #{custom-call.7} parent=162 // loop_body
          %v1074 = vld [vmem:[%s1068] sm:$0xff]
          %1075 = vst [vmem:[%s1069] sm:$0xff] %v1074
        $region175: #{custom-call.7} parent=162 // loop_footer
          %s1076 = scalar_lea.vmem %s1068, 8
          %s1077 = scalar_lea.vmem %s1069, 8
        $region176: #{custom-call.7} parent=162 // loop_footer_branch
          %1078 = sbr.rel target = $region172
        $region177: #{custom-call.7} parent=162 // loop_exit
          _
      $region163: #{custom-call.7} parent=158 // pred_fallthru
        _
      %s1079 = sand.u32 8, 7
      %s1080 = sshllo.u32 0, %s1079
      %s1081 = smul.u32 %s1032, 128
      %s1082 = sshra.s32 %s1081, 4
      %s1083 = scalar_lea.vmem %s6, %s1082
      %s1084 = smul.u32 %s1032, 128
      %s1085 = sshra.s32 %s1084, 4
      %s1086 = scalar_lea.vmem [#allocation8], %s1085
      %v1087 = vld [vmem:[%s1086] sm:%s1080]
      %1088 = vst [vmem:[%s1083] sm:%s1080] %v1087
    $region159: #{custom-call.7} parent=1 // pred_fallthru
      _
    %p1090 = scmp.gt.s32.totalorder 8, 0
    // Predicated region
    $region178: #{custom-call.7} parent=1 // pred_check
      %p1091 = pneg %p1090
    $region179: #{custom-call.7} parent=1 // pred_check_branch
      %1093 = sbr.rel (%p1091) target = $region181
    $region180: #{custom-call.7} parent=1 // pred_region
      %s1094 = sshra.s32 8, 3
      %p1095 = scmp.gt.s32.totalorder %s1094, 0
      // Predicated region
      $region182: #{custom-call.7} parent=180 // pred_check
        %p1096 = pneg %p1095
      $region183: #{custom-call.7} parent=180 // pred_check_branch
        %1098 = sbr.rel (%p1096) target = $region185
      $region184: #{custom-call.7} parent=180 // pred_region
        %s1099 = ssub.s32 %s1094, 1
        %s1100 = smul.u32 %s1099, 128
        %s1101 = sshra.s32 %s1100, 4
        %s1102 = scalar_lea.vmem [#allocation9], %s1101
        %v1103 = vld [vmem:[#allocation9] sm:$0xff]
        // While loop
        $region186: #{custom-call.7} parent=184 // loop_pre_header
          _
        $region187: #{custom-call.7} parent=184 // loop_header
          %s1104 = sphi [#allocation9], %s1126
          %s1105 = sphi %s7, %s1127
          %v1106 = vphi %v1103, %v1128
          %s1107 = ssub.s32 %s1102, 64
          %p1108 = scmp.gt.s32.totalorder %s1104, %s1107
        $region188: #{custom-call.7} parent=184 // loop_header_branch
          %1110 = sbr.rel (%p1108) target = $region192
        $region189: #{custom-call.7} parent=184 // loop_body
          %1111 = vst [vmem:[%s1105] sm:$0xff] %v1106
          %v1112 = vld [vmem:[%s1104 + $0x8] sm:$0xff]
          %1113 = vst [vmem:[%s1105 + $0x8] sm:$0xff] %v1112
          %v1114 = vld [vmem:[%s1104 + $0x10] sm:$0xff]
          %1115 = vst [vmem:[%s1105 + $0x10] sm:$0xff] %v1114
          %v1116 = vld [vmem:[%s1104 + $0x18] sm:$0xff]
          %1117 = vst [vmem:[%s1105 + $0x18] sm:$0xff] %v1116
          %v1118 = vld [vmem:[%s1104 + $0x20] sm:$0xff]
          %1119 = vst [vmem:[%s1105 + $0x20] sm:$0xff] %v1118
          %v1120 = vld [vmem:[%s1104 + $0x28] sm:$0xff]
          %1121 = vst [vmem:[%s1105 + $0x28] sm:$0xff] %v1120
          %v1122 = vld [vmem:[%s1104 + $0x30] sm:$0xff]
          %1123 = vst [vmem:[%s1105 + $0x30] sm:$0xff] %v1122
          %v1124 = vld [vmem:[%s1104 + $0x38] sm:$0xff]
          %1125 = vst [vmem:[%s1105 + $0x38] sm:$0xff] %v1124
        $region190: #{custom-call.7} parent=184 // loop_footer
          %s1126 = scalar_lea.vmem %s1104, 64
          %s1127 = scalar_lea.vmem %s1105, 64
          %v1128 = vld [vmem:[%s1104 + $0x40] sm:$0xff]
        $region191: #{custom-call.7} parent=184 // loop_footer_branch
          %1129 = sbr.rel target = $region187
        $region192: #{custom-call.7} parent=184 // loop_exit
          _
        // While loop
        $region193: #{custom-call.7} parent=184 // loop_pre_header
          _
        $region194: #{custom-call.7} parent=184 // loop_header
          %s1130 = sphi %s1104, %s1138
          %s1131 = sphi %s1105, %s1139
          %v1132 = vphi %v1106, %v1132
          %p1133 = scmp.gt.s32.totalorder %s1130, %s1102
        $region195: #{custom-call.7} parent=184 // loop_header_branch
          %1135 = sbr.rel (%p1133) target = $region199
        $region196: #{custom-call.7} parent=184 // loop_body
          %v1136 = vld [vmem:[%s1130] sm:$0xff]
          %1137 = vst [vmem:[%s1131] sm:$0xff] %v1136
        $region197: #{custom-call.7} parent=184 // loop_footer
          %s1138 = scalar_lea.vmem %s1130, 8
          %s1139 = scalar_lea.vmem %s1131, 8
        $region198: #{custom-call.7} parent=184 // loop_footer_branch
          %1140 = sbr.rel target = $region194
        $region199: #{custom-call.7} parent=184 // loop_exit
          _
      $region185: #{custom-call.7} parent=180 // pred_fallthru
        _
      %s1141 = sand.u32 8, 7
      %s1142 = sshllo.u32 0, %s1141
      %s1143 = smul.u32 %s1094, 128
      %s1144 = sshra.s32 %s1143, 4
      %s1145 = scalar_lea.vmem %s7, %s1144
      %s1146 = smul.u32 %s1094, 128
      %s1147 = sshra.s32 %s1146, 4
      %s1148 = scalar_lea.vmem [#allocation9], %s1147
      %v1149 = vld [vmem:[%s1148] sm:%s1142]
      %1150 = vst [vmem:[%s1145] sm:%s1142] %v1149
    $region181: #{custom-call.7} parent=1 // pred_fallthru
      _
    %p1152 = scmp.gt.s32.totalorder 8, 0
    // Predicated region
    $region200: #{custom-call.7} parent=1 // pred_check
      %p1153 = pneg %p1152
    $region201: #{custom-call.7} parent=1 // pred_check_branch
      %1155 = sbr.rel (%p1153) target = $region203
    $region202: #{custom-call.7} parent=1 // pred_region
      %s1156 = sshra.s32 8, 3
      %p1157 = scmp.gt.s32.totalorder %s1156, 0
      // Predicated region
      $region204: #{custom-call.7} parent=202 // pred_check
        %p1158 = pneg %p1157
      $region205: #{custom-call.7} parent=202 // pred_check_branch
        %1160 = sbr.rel (%p1158) target = $region207
      $region206: #{custom-call.7} parent=202 // pred_region
        %s1161 = ssub.s32 %s1156, 1
        %s1162 = smul.u32 %s1161, 128
        %s1163 = sshra.s32 %s1162, 4
        %s1164 = scalar_lea.vmem [#allocation10], %s1163
        %v1165 = vld [vmem:[#allocation10] sm:$0xff]
        // While loop
        $region208: #{custom-call.7} parent=206 // loop_pre_header
          _
        $region209: #{custom-call.7} parent=206 // loop_header
          %s1166 = sphi [#allocation10], %s1188
          %s1167 = sphi %s8, %s1189
          %v1168 = vphi %v1165, %v1190
          %s1169 = ssub.s32 %s1164, 64
          %p1170 = scmp.gt.s32.totalorder %s1166, %s1169
        $region210: #{custom-call.7} parent=206 // loop_header_branch
          %1172 = sbr.rel (%p1170) target = $region214
        $region211: #{custom-call.7} parent=206 // loop_body
          %1173 = vst [vmem:[%s1167] sm:$0xff] %v1168
          %v1174 = vld [vmem:[%s1166 + $0x8] sm:$0xff]
          %1175 = vst [vmem:[%s1167 + $0x8] sm:$0xff] %v1174
          %v1176 = vld [vmem:[%s1166 + $0x10] sm:$0xff]
          %1177 = vst [vmem:[%s1167 + $0x10] sm:$0xff] %v1176
          %v1178 = vld [vmem:[%s1166 + $0x18] sm:$0xff]
          %1179 = vst [vmem:[%s1167 + $0x18] sm:$0xff] %v1178
          %v1180 = vld [vmem:[%s1166 + $0x20] sm:$0xff]
          %1181 = vst [vmem:[%s1167 + $0x20] sm:$0xff] %v1180
          %v1182 = vld [vmem:[%s1166 + $0x28] sm:$0xff]
          %1183 = vst [vmem:[%s1167 + $0x28] sm:$0xff] %v1182
          %v1184 = vld [vmem:[%s1166 + $0x30] sm:$0xff]
          %1185 = vst [vmem:[%s1167 + $0x30] sm:$0xff] %v1184
          %v1186 = vld [vmem:[%s1166 + $0x38] sm:$0xff]
          %1187 = vst [vmem:[%s1167 + $0x38] sm:$0xff] %v1186
        $region212: #{custom-call.7} parent=206 // loop_footer
          %s1188 = scalar_lea.vmem %s1166, 64
          %s1189 = scalar_lea.vmem %s1167, 64
          %v1190 = vld [vmem:[%s1166 + $0x40] sm:$0xff]
        $region213: #{custom-call.7} parent=206 // loop_footer_branch
          %1191 = sbr.rel target = $region209
        $region214: #{custom-call.7} parent=206 // loop_exit
          _
        // While loop
        $region215: #{custom-call.7} parent=206 // loop_pre_header
          _
        $region216: #{custom-call.7} parent=206 // loop_header
          %s1192 = sphi %s1166, %s1200
          %s1193 = sphi %s1167, %s1201
          %v1194 = vphi %v1168, %v1194
          %p1195 = scmp.gt.s32.totalorder %s1192, %s1164
        $region217: #{custom-call.7} parent=206 // loop_header_branch
          %1197 = sbr.rel (%p1195) target = $region221
        $region218: #{custom-call.7} parent=206 // loop_body
          %v1198 = vld [vmem:[%s1192] sm:$0xff]
          %1199 = vst [vmem:[%s1193] sm:$0xff] %v1198
        $region219: #{custom-call.7} parent=206 // loop_footer
          %s1200 = scalar_lea.vmem %s1192, 8
          %s1201 = scalar_lea.vmem %s1193, 8
        $region220: #{custom-call.7} parent=206 // loop_footer_branch
          %1202 = sbr.rel target = $region216
        $region221: #{custom-call.7} parent=206 // loop_exit
          _
      $region207: #{custom-call.7} parent=202 // pred_fallthru
        _
      %s1203 = sand.u32 8, 7
      %s1204 = sshllo.u32 0, %s1203
      %s1205 = smul.u32 %s1156, 128
      %s1206 = sshra.s32 %s1205, 4
      %s1207 = scalar_lea.vmem %s8, %s1206
      %s1208 = smul.u32 %s1156, 128
      %s1209 = sshra.s32 %s1208, 4
      %s1210 = scalar_lea.vmem [#allocation10], %s1209
      %v1211 = vld [vmem:[%s1210] sm:%s1204]
      %1212 = vst [vmem:[%s1207] sm:%s1204] %v1211
    $region203: #{custom-call.7} parent=1 // pred_fallthru
      _
    %p1214 = scmp.gt.s32.totalorder 8, 0
    // Predicated region
    $region222: #{custom-call.7} parent=1 // pred_check
      %p1215 = pneg %p1214
    $region223: #{custom-call.7} parent=1 // pred_check_branch
      %1217 = sbr.rel (%p1215) target = $region225
    $region224: #{custom-call.7} parent=1 // pred_region
      %s1218 = sshra.s32 8, 3
      %p1219 = scmp.gt.s32.totalorder %s1218, 0
      // Predicated region
      $region226: #{custom-call.7} parent=224 // pred_check
        %p1220 = pneg %p1219
      $region227: #{custom-call.7} parent=224 // pred_check_branch
        %1222 = sbr.rel (%p1220) target = $region229
      $region228: #{custom-call.7} parent=224 // pred_region
        %s1223 = ssub.s32 %s1218, 1
        %s1224 = smul.u32 %s1223, 128
        %s1225 = sshra.s32 %s1224, 4
        %s1226 = scalar_lea.vmem [#allocation11], %s1225
        %v1227 = vld [vmem:[#allocation11] sm:$0xff]
        // While loop
        $region230: #{custom-call.7} parent=228 // loop_pre_header
          _
        $region231: #{custom-call.7} parent=228 // loop_header
          %s1228 = sphi [#allocation11], %s1250
          %s1229 = sphi %s9, %s1251
          %v1230 = vphi %v1227, %v1252
          %s1231 = ssub.s32 %s1226, 64
          %p1232 = scmp.gt.s32.totalorder %s1228, %s1231
        $region232: #{custom-call.7} parent=228 // loop_header_branch
          %1234 = sbr.rel (%p1232) target = $region236
        $region233: #{custom-call.7} parent=228 // loop_body
          %1235 = vst [vmem:[%s1229] sm:$0xff] %v1230
          %v1236 = vld [vmem:[%s1228 + $0x8] sm:$0xff]
          %1237 = vst [vmem:[%s1229 + $0x8] sm:$0xff] %v1236
          %v1238 = vld [vmem:[%s1228 + $0x10] sm:$0xff]
          %1239 = vst [vmem:[%s1229 + $0x10] sm:$0xff] %v1238
          %v1240 = vld [vmem:[%s1228 + $0x18] sm:$0xff]
          %1241 = vst [vmem:[%s1229 + $0x18] sm:$0xff] %v1240
          %v1242 = vld [vmem:[%s1228 + $0x20] sm:$0xff]
          %1243 = vst [vmem:[%s1229 + $0x20] sm:$0xff] %v1242
          %v1244 = vld [vmem:[%s1228 + $0x28] sm:$0xff]
          %1245 = vst [vmem:[%s1229 + $0x28] sm:$0xff] %v1244
          %v1246 = vld [vmem:[%s1228 + $0x30] sm:$0xff]
          %1247 = vst [vmem:[%s1229 + $0x30] sm:$0xff] %v1246
          %v1248 = vld [vmem:[%s1228 + $0x38] sm:$0xff]
          %1249 = vst [vmem:[%s1229 + $0x38] sm:$0xff] %v1248
        $region234: #{custom-call.7} parent=228 // loop_footer
          %s1250 = scalar_lea.vmem %s1228, 64
          %s1251 = scalar_lea.vmem %s1229, 64
          %v1252 = vld [vmem:[%s1228 + $0x40] sm:$0xff]
        $region235: #{custom-call.7} parent=228 // loop_footer_branch
          %1253 = sbr.rel target = $region231
        $region236: #{custom-call.7} parent=228 // loop_exit
          _
        // While loop
        $region237: #{custom-call.7} parent=228 // loop_pre_header
          _
        $region238: #{custom-call.7} parent=228 // loop_header
          %s1254 = sphi %s1228, %s1262
          %s1255 = sphi %s1229, %s1263
          %v1256 = vphi %v1230, %v1256
          %p1257 = scmp.gt.s32.totalorder %s1254, %s1226
        $region239: #{custom-call.7} parent=228 // loop_header_branch
          %1259 = sbr.rel (%p1257) target = $region243
        $region240: #{custom-call.7} parent=228 // loop_body
          %v1260 = vld [vmem:[%s1254] sm:$0xff]
          %1261 = vst [vmem:[%s1255] sm:$0xff] %v1260
        $region241: #{custom-call.7} parent=228 // loop_footer
          %s1262 = scalar_lea.vmem %s1254, 8
          %s1263 = scalar_lea.vmem %s1255, 8
        $region242: #{custom-call.7} parent=228 // loop_footer_branch
          %1264 = sbr.rel target = $region238
        $region243: #{custom-call.7} parent=228 // loop_exit
          _
      $region229: #{custom-call.7} parent=224 // pred_fallthru
        _
      %s1265 = sand.u32 8, 7
      %s1266 = sshllo.u32 0, %s1265
      %s1267 = smul.u32 %s1218, 128
      %s1268 = sshra.s32 %s1267, 4
      %s1269 = scalar_lea.vmem %s9, %s1268
      %s1270 = smul.u32 %s1218, 128
      %s1271 = sshra.s32 %s1270, 4
      %s1272 = scalar_lea.vmem [#allocation11], %s1271
      %v1273 = vld [vmem:[%s1272] sm:%s1266]
      %1274 = vst [vmem:[%s1269] sm:%s1266] %v1273
    $region225: #{custom-call.7} parent=1 // pred_fallthru
      _
    // Predicated region
    $region244: #{custom-call.7} parent=1 // pred_check
      _
    $region245: #{custom-call.7} parent=1 // pred_check_branch
      %1276 = sbr.rel (0) target = $region247
    $region246: #{custom-call.7} parent=1 // pred_region
      _
    $region247: #{custom-call.7} parent=1 // pred_fallthru
      _
    // Predicated region
    $region248: #{custom-call.7} parent=1 // pred_check
      _
    $region249: #{custom-call.7} parent=1 // pred_check_branch
      %1278 = sbr.rel (0) target = $region251
    $region250: #{custom-call.7} parent=1 // pred_region
      _
    $region251: #{custom-call.7} parent=1 // pred_fallthru
      _

// kernel: custom-call.4
$region0: #{custom-call.4}
  %s0 = inlined_call_operand.vmem [shape: f32[8,8,8], index: 0, kind: input, shape index: {}]
  %s1 = inlined_call_operand.vmem [shape: f32[8,8,8], index: 1, kind: input, shape index: {}]
  %s2 = inlined_call_operand.vmem [shape: f32[8,8,8], index: 2, kind: input, shape index: {}]
  %s3 = inlined_call_operand.vmem [shape: f32[8,8,8], index: 3, kind: input, shape index: {}]
  %s4 = inlined_call_operand.vmem [shape: f32[8,8], index: 4, kind: output, shape index: {0}]
  %s5 = inlined_call_operand.vmem [shape: f32[8,8], index: 5, kind: output, shape index: {1}]
  %s6 = inlined_call_operand.vmem [shape: f32[8,8,8], index: 6, kind: output, shape index: {2}]
  %s7 = inlined_call_operand.vmem [shape: f32[8,8,8], index: 7, kind: output, shape index: {3}]
  %s8 = inlined_call_operand.vmem [shape: f32[8,8,8], index: 8, kind: output, shape index: {4}]
  %s9 = inlined_call_operand.vmem [shape: f32[8,8,8], index: 9, kind: output, shape index: {5}]
  %10 = xla_tuple %s4, %s5, %s6, %s7, %s8, %s9
  $region1: #{custom-call.4} parent=0
    #allocation0 [shape = 'u8[8192]{0}', space=vmem, size = 0x2000, scoped, tag = 'operand span for operand 0']
    #allocation1 [shape = 'u8[8192]{0}', space=vmem, size = 0x2000, scoped, tag = 'operand span for operand 1']
    #allocation2 [shape = 'u8[8192]{0}', space=vmem, size = 0x2000, scoped, tag = 'operand span for operand 2']
    #allocation3 [shape = 'u8[8192]{0}', space=vmem, size = 0x2000, scoped, tag = 'operand span for operand 3']
    #allocation4 [shape = 'u8[8192]{0}', space=vmem, size = 0x2000, scoped, tag = 'operand span for operand 4']
    #allocation5 [shape = 'u8[8192]{0}', space=vmem, size = 0x2000, scoped, tag = 'operand span for operand 5']
    #allocation6 [shape = 'u8[8192]{0}', space=vmem, size = 0x2000, scoped, tag = 'operand span for operand 6']
    #allocation7 [shape = 'u8[8192]{0}', space=vmem, size = 0x2000, scoped, tag = 'operand span for operand 7']
    #allocation8 [shape = 'u8[8192]{0}', space=vmem, size = 0x2000, scoped, tag = 'operand span for operand 8']
    #allocation9 [shape = 'u8[8192]{0}', space=vmem, size = 0x2000, scoped, tag = 'operand span for operand 9']
    loop: start=0, step=1, limit=10
    $region2: #{custom-call.4} parent=1 // loop_pre_header
      _
    $region3: #{custom-call.4} parent=1 // loop_header
      %s12 = sphi 0, %s16
      %p13 = scmp.ge.s32.totalorder %s12, 10
      %s24 = sphi 0, %s26
      %s27 = sphi 0, %s24
      %s28 = sphi 0, %s27
      %s44 = sphi 0, %s28
      %s52 = sphi 0, %s54
      %s55 = sphi 0, %s52
      %s56 = sphi 0, %s55
      %s72 = sphi 0, %s56
    $region4: #{custom-call.4} parent=1 // loop_header_branch
      %15 = sbr.rel (%p13) target = $region8
    $region5: #{custom-call.4} parent=1 // loop_body
      %s17 = ssub.s32 %s12, 1
      %s18 = ssub.s32 %s12, 2
      %s19 = sadd.s32 %s12, 1
      %s20 = sshrl.u32 %s12, 3
      %s21 = sshrl.u32 %s19, 3
      %s22 = ssub.s32 %s20, %s21
      %p23 = scmp.eq.s32.totalorder %s22, 0
      %s25 = sadd.s32 %s24, 1
      %s26 = scalar_select %p23, %s24, %s25
      %p29 = pneg %p23
      %p30 = scmp.eq.s32.totalorder %s12, 7
      %p31 = por %p29, %p30
      %p32 = scmp.ne.s32.totalorder %s24, %s27
      %p33 = scmp.eq.s32.totalorder %s12, 0
      %p34 = por %p32, %p33
      %p35 = scmp.ne.s32.totalorder %s24, %s27
      %p36 = scmp.eq.s32.totalorder %s17, 7
      %p37 = por %p35, %p36
      %p38 = scmp.ne.s32.totalorder %s27, %s28
      %p39 = scmp.eq.s32.totalorder %s17, 0
      %p40 = por %p38, %p39
      %p41 = scmp.ne.s32.totalorder %s27, %s28
      %p42 = scmp.eq.s32.totalorder %s18, 7
      %p43 = por %p41, %p42
      %p45 = scmp.ne.s32.totalorder %s28, %s44
      %p46 = scmp.eq.s32.totalorder %s18, 0
      %p47 = por %p45, %p46
      %s48 = sshrl.u32 %s12, 3
      %s49 = sshrl.u32 %s19, 3
      %s50 = ssub.s32 %s48, %s49
      %p51 = scmp.eq.s32.totalorder %s50, 0
      %s53 = sadd.s32 %s52, 1
      %s54 = scalar_select %p51, %s52, %s53
      %p57 = pneg %p51
      %p58 = scmp.eq.s32.totalorder %s12, 7
      %p59 = por %p57, %p58
      %p60 = scmp.ne.s32.totalorder %s52, %s55
      %p61 = scmp.eq.s32.totalorder %s12, 0
      %p62 = por %p60, %p61
      %p63 = scmp.ne.s32.totalorder %s52, %s55
      %p64 = scmp.eq.s32.totalorder %s17, 7
      %p65 = por %p63, %p64
      %p66 = scmp.ne.s32.totalorder %s55, %s56
      %p67 = scmp.eq.s32.totalorder %s17, 0
      %p68 = por %p66, %p67
      %p69 = scmp.ne.s32.totalorder %s55, %s56
      %p70 = scmp.eq.s32.totalorder %s18, 7
      %p71 = por %p69, %p70
      %p73 = scmp.ne.s32.totalorder %s56, %s72
      %p74 = scmp.eq.s32.totalorder %s18, 0
      %p75 = por %p73, %p74
      %p76 = scmp.le.s32.totalorder 1, %s12
      %p77 = scmp.lt.s32.totalorder %s12, 9
      %p78 = pnand %p76, %p77
      %p79 = pneg %p78
      // Predicated region
      $region9: #{custom-call.4} parent=5 // pred_check
        _
      $region10: #{custom-call.4} parent=5 // pred_check_branch
        %81 = sbr.rel (%p78) target = $region12
      $region11: #{custom-call.4} parent=5 // pred_region
        %s82 = ssub.s32 %s12, 1
      $region12: #{custom-call.4} parent=5 // pred_fallthru
        _
      %p83 = scmp.lt.s32.totalorder %s12, 8
      // Predicated region
      $region13: #{custom-call.4} parent=5 // pred_check
        %p84 = pneg %p83
      $region14: #{custom-call.4} parent=5 // pred_check_branch
        %86 = sbr.rel (%p84) target = $region16
      $region15: #{custom-call.4} parent=5 // pred_region
        %s87 = sand.u32 %s12, 1
        %s88 = sand.u32 %s12, 1
        %s89 = smul.addr %s88, 8
        %s90 = scalar_lea.vmem [#allocation0], %s89
        %s91 = smul.addr %s12, 8
        %s92 = scalar_lea.vmem %s0, %s91
        // Predicated region
        $region17: #{custom-call.4} parent=15 // pred_check
          _
        $region18: #{custom-call.4} parent=15 // pred_check_branch
          %94 = sbr.rel (0) target = $region20
        $region19: #{custom-call.4} parent=15 // pred_region
          // Predicated region
          $region21: #{custom-call.4} parent=19 // pred_check
            _
          $region22: #{custom-call.4} parent=19 // pred_check_branch
            %96 = sbr.rel (0) target = $region24
          $region23: #{custom-call.4} parent=19 // pred_region
            // Predicated region
            $region36: #{custom-call.4} parent=23 // pred_check
              _
            $region37: #{custom-call.4} parent=23 // pred_check_branch
              %111 = sbr.rel (0) target = $region39
            $region38: #{custom-call.4} parent=23 // pred_region
              loop: start=0, step=1, limit=1
              $region40: #{custom-call.4} parent=38 // loop_pre_header
                _
              $region41: #{custom-call.4} parent=38 // loop_header
                %s113 = sphi 0, %s117
                %p114 = scmp.ge.s32.totalorder %s113, 1
                %s118 = sphi %s92, %s92
                %s119 = sphi %s90, %s90
              $region42: #{custom-call.4} parent=38 // loop_header_branch
                %116 = sbr.rel (%p114) target = $region46
              $region43: #{custom-call.4} parent=38 // loop_body
                %v120 = vld [vmem:[%s118] sm:$0xff]
                %121 = vst [vmem:[%s119] sm:$0xff] %v120
              $region44: #{custom-call.4} parent=38 // loop_footer
                %s117 = sadd.s32 1, %s113
              $region45: #{custom-call.4} parent=38 // loop_footer_branch
                %112 = sbr.rel target = $region41
              $region46: #{custom-call.4} parent=38 // loop_exit
                _
            $region39: #{custom-call.4} parent=23 // pred_fallthru
              _
            // Predicated region
            $region47: #{custom-call.4} parent=23 // pred_check
              _
            $region48: #{custom-call.4} parent=23 // pred_check_branch
              %123 = sbr.rel target = $region50
            $region49: #{custom-call.4} parent=23 // pred_region
              _
            $region50: #{custom-call.4} parent=23 // pred_fallthru
              _
          $region24: #{custom-call.4} parent=19 // pred_fallthru
            _
          // Predicated region
          $region25: #{custom-call.4} parent=19 // pred_check
            _
          $region26: #{custom-call.4} parent=19 // pred_check_branch
            %98 = sbr.rel target = $region28
          $region27: #{custom-call.4} parent=19 // pred_region
            loop: start=0, step=1, limit=1
            $region29: #{custom-call.4} parent=27 // loop_pre_header
              _
            $region30: #{custom-call.4} parent=27 // loop_header
              %s101 = sphi 0, %s105
              %p102 = scmp.ge.s32.totalorder %s101, 1
              %s106 = sphi %s92, %s92
              %s107 = sphi %s90, %s90
            $region31: #{custom-call.4} parent=27 // loop_header_branch
              %104 = sbr.rel (%p102) target = $region35
            $region32: #{custom-call.4} parent=27 // loop_body
              %v108 = vld [vmem:[%s106] sm:$0xff]
              %109 = vst [vmem:[%s107] sm:$0xff] %v108
            $region33: #{custom-call.4} parent=27 // loop_footer
              %s105 = sadd.s32 1, %s101
            $region34: #{custom-call.4} parent=27 // loop_footer_branch
              %100 = sbr.rel target = $region30
            $region35: #{custom-call.4} parent=27 // loop_exit
              _
          $region28: #{custom-call.4} parent=19 // pred_fallthru
            _
        $region20: #{custom-call.4} parent=15 // pred_fallthru
          _
        %124 = vnop
        %s125 = sand.u32 %s12, 1
        %s126 = sand.u32 %s12, 1
        %s127 = smul.addr %s126, 8
        %s128 = scalar_lea.vmem [#allocation1], %s127
        %s129 = smul.addr %s12, 8
        %s130 = scalar_lea.vmem %s1, %s129
        // Predicated region
        $region51: #{custom-call.4} parent=15 // pred_check
          _
        $region52: #{custom-call.4} parent=15 // pred_check_branch
          %132 = sbr.rel (0) target = $region54
        $region53: #{custom-call.4} parent=15 // pred_region
          // Predicated region
          $region55: #{custom-call.4} parent=53 // pred_check
            _
          $region56: #{custom-call.4} parent=53 // pred_check_branch
            %134 = sbr.rel (0) target = $region58
          $region57: #{custom-call.4} parent=53 // pred_region
            // Predicated region
            $region70: #{custom-call.4} parent=57 // pred_check
              _
            $region71: #{custom-call.4} parent=57 // pred_check_branch
              %149 = sbr.rel (0) target = $region73
            $region72: #{custom-call.4} parent=57 // pred_region
              loop: start=0, step=1, limit=1
              $region74: #{custom-call.4} parent=72 // loop_pre_header
                _
              $region75: #{custom-call.4} parent=72 // loop_header
                %s151 = sphi 0, %s155
                %p152 = scmp.ge.s32.totalorder %s151, 1
                %s156 = sphi %s130, %s130
                %s157 = sphi %s128, %s128
              $region76: #{custom-call.4} parent=72 // loop_header_branch
                %154 = sbr.rel (%p152) target = $region80
              $region77: #{custom-call.4} parent=72 // loop_body
                %v158 = vld [vmem:[%s156] sm:$0xff]
                %159 = vst [vmem:[%s157] sm:$0xff] %v158
              $region78: #{custom-call.4} parent=72 // loop_footer
                %s155 = sadd.s32 1, %s151
              $region79: #{custom-call.4} parent=72 // loop_footer_branch
                %150 = sbr.rel target = $region75
              $region80: #{custom-call.4} parent=72 // loop_exit
                _
            $region73: #{custom-call.4} parent=57 // pred_fallthru
              _
            // Predicated region
            $region81: #{custom-call.4} parent=57 // pred_check
              _
            $region82: #{custom-call.4} parent=57 // pred_check_branch
              %161 = sbr.rel target = $region84
            $region83: #{custom-call.4} parent=57 // pred_region
              _
            $region84: #{custom-call.4} parent=57 // pred_fallthru
              _
          $region58: #{custom-call.4} parent=53 // pred_fallthru
            _
          // Predicated region
          $region59: #{custom-call.4} parent=53 // pred_check
            _
          $region60: #{custom-call.4} parent=53 // pred_check_branch
            %136 = sbr.rel target = $region62
          $region61: #{custom-call.4} parent=53 // pred_region
            loop: start=0, step=1, limit=1
            $region63: #{custom-call.4} parent=61 // loop_pre_header
              _
            $region64: #{custom-call.4} parent=61 // loop_header
              %s139 = sphi 0, %s143
              %p140 = scmp.ge.s32.totalorder %s139, 1
              %s144 = sphi %s130, %s130
              %s145 = sphi %s128, %s128
            $region65: #{custom-call.4} parent=61 // loop_header_branch
              %142 = sbr.rel (%p140) target = $region69
            $region66: #{custom-call.4} parent=61 // loop_body
              %v146 = vld [vmem:[%s144] sm:$0xff]
              %147 = vst [vmem:[%s145] sm:$0xff] %v146
            $region67: #{custom-call.4} parent=61 // loop_footer
              %s143 = sadd.s32 1, %s139
            $region68: #{custom-call.4} parent=61 // loop_footer_branch
              %138 = sbr.rel target = $region64
            $region69: #{custom-call.4} parent=61 // loop_exit
              _
          $region62: #{custom-call.4} parent=53 // pred_fallthru
            _
        $region54: #{custom-call.4} parent=15 // pred_fallthru
          _
        %162 = vnop
        %s163 = sand.u32 %s12, 1
        %s164 = sand.u32 %s12, 1
        %s165 = smul.addr %s164, 8
        %s166 = scalar_lea.vmem [#allocation2], %s165
        %s167 = smul.addr %s12, 8
        %s168 = scalar_lea.vmem %s2, %s167
        // Predicated region
        $region85: #{custom-call.4} parent=15 // pred_check
          _
        $region86: #{custom-call.4} parent=15 // pred_check_branch
          %170 = sbr.rel (0) target = $region88
        $region87: #{custom-call.4} parent=15 // pred_region
          // Predicated region
          $region89: #{custom-call.4} parent=87 // pred_check
            _
          $region90: #{custom-call.4} parent=87 // pred_check_branch
            %172 = sbr.rel (0) target = $region92
          $region91: #{custom-call.4} parent=87 // pred_region
            // Predicated region
            $region104: #{custom-call.4} parent=91 // pred_check
              _
            $region105: #{custom-call.4} parent=91 // pred_check_branch
              %187 = sbr.rel (0) target = $region107
            $region106: #{custom-call.4} parent=91 // pred_region
              loop: start=0, step=1, limit=1
              $region108: #{custom-call.4} parent=106 // loop_pre_header
                _
              $region109: #{custom-call.4} parent=106 // loop_header
                %s189 = sphi 0, %s193
                %p190 = scmp.ge.s32.totalorder %s189, 1
                %s194 = sphi %s168, %s168
                %s195 = sphi %s166, %s166
              $region110: #{custom-call.4} parent=106 // loop_header_branch
                %192 = sbr.rel (%p190) target = $region114
              $region111: #{custom-call.4} parent=106 // loop_body
                %v196 = vld [vmem:[%s194] sm:$0xff]
                %197 = vst [vmem:[%s195] sm:$0xff] %v196
              $region112: #{custom-call.4} parent=106 // loop_footer
                %s193 = sadd.s32 1, %s189
              $region113: #{custom-call.4} parent=106 // loop_footer_branch
                %188 = sbr.rel target = $region109
              $region114: #{custom-call.4} parent=106 // loop_exit
                _
            $region107: #{custom-call.4} parent=91 // pred_fallthru
              _
            // Predicated region
            $region115: #{custom-call.4} parent=91 // pred_check
              _
            $region116: #{custom-call.4} parent=91 // pred_check_branch
              %199 = sbr.rel target = $region118
            $region117: #{custom-call.4} parent=91 // pred_region
              _
            $region118: #{custom-call.4} parent=91 // pred_fallthru
              _
          $region92: #{custom-call.4} parent=87 // pred_fallthru
            _
          // Predicated region
          $region93: #{custom-call.4} parent=87 // pred_check
            _
          $region94: #{custom-call.4} parent=87 // pred_check_branch
            %174 = sbr.rel target = $region96
          $region95: #{custom-call.4} parent=87 // pred_region
            loop: start=0, step=1, limit=1
            $region97: #{custom-call.4} parent=95 // loop_pre_header
              _
            $region98: #{custom-call.4} parent=95 // loop_header
              %s177 = sphi 0, %s181
              %p178 = scmp.ge.s32.totalorder %s177, 1
              %s182 = sphi %s168, %s168
              %s183 = sphi %s166, %s166
            $region99: #{custom-call.4} parent=95 // loop_header_branch
              %180 = sbr.rel (%p178) target = $region103
            $region100: #{custom-call.4} parent=95 // loop_body
              %v184 = vld [vmem:[%s182] sm:$0xff]
              %185 = vst [vmem:[%s183] sm:$0xff] %v184
            $region101: #{custom-call.4} parent=95 // loop_footer
              %s181 = sadd.s32 1, %s177
            $region102: #{custom-call.4} parent=95 // loop_footer_branch
              %176 = sbr.rel target = $region98
            $region103: #{custom-call.4} parent=95 // loop_exit
              _
          $region96: #{custom-call.4} parent=87 // pred_fallthru
            _
        $region88: #{custom-call.4} parent=15 // pred_fallthru
          _
        %200 = vnop
        %s201 = sand.u32 %s12, 1
        %s202 = sand.u32 %s12, 1
        %s203 = smul.addr %s202, 8
        %s204 = scalar_lea.vmem [#allocation3], %s203
        %s205 = smul.addr %s12, 8
        %s206 = scalar_lea.vmem %s3, %s205
        // Predicated region
        $region119: #{custom-call.4} parent=15 // pred_check
          _
        $region120: #{custom-call.4} parent=15 // pred_check_branch
          %208 = sbr.rel (0) target = $region122
        $region121: #{custom-call.4} parent=15 // pred_region
          // Predicated region
          $region123: #{custom-call.4} parent=121 // pred_check
            _
          $region124: #{custom-call.4} parent=121 // pred_check_branch
            %210 = sbr.rel (0) target = $region126
          $region125: #{custom-call.4} parent=121 // pred_region
            // Predicated region
            $region138: #{custom-call.4} parent=125 // pred_check
              _
            $region139: #{custom-call.4} parent=125 // pred_check_branch
              %225 = sbr.rel (0) target = $region141
            $region140: #{custom-call.4} parent=125 // pred_region
              loop: start=0, step=1, limit=1
              $region142: #{custom-call.4} parent=140 // loop_pre_header
                _
              $region143: #{custom-call.4} parent=140 // loop_header
                %s227 = sphi 0, %s231
                %p228 = scmp.ge.s32.totalorder %s227, 1
                %s232 = sphi %s206, %s206
                %s233 = sphi %s204, %s204
              $region144: #{custom-call.4} parent=140 // loop_header_branch
                %230 = sbr.rel (%p228) target = $region148
              $region145: #{custom-call.4} parent=140 // loop_body
                %v234 = vld [vmem:[%s232] sm:$0xff]
                %235 = vst [vmem:[%s233] sm:$0xff] %v234
              $region146: #{custom-call.4} parent=140 // loop_footer
                %s231 = sadd.s32 1, %s227
              $region147: #{custom-call.4} parent=140 // loop_footer_branch
                %226 = sbr.rel target = $region143
              $region148: #{custom-call.4} parent=140 // loop_exit
                _
            $region141: #{custom-call.4} parent=125 // pred_fallthru
              _
            // Predicated region
            $region149: #{custom-call.4} parent=125 // pred_check
              _
            $region150: #{custom-call.4} parent=125 // pred_check_branch
              %237 = sbr.rel target = $region152
            $region151: #{custom-call.4} parent=125 // pred_region
              _
            $region152: #{custom-call.4} parent=125 // pred_fallthru
              _
          $region126: #{custom-call.4} parent=121 // pred_fallthru
            _
          // Predicated region
          $region127: #{custom-call.4} parent=121 // pred_check
            _
          $region128: #{custom-call.4} parent=121 // pred_check_branch
            %212 = sbr.rel target = $region130
          $region129: #{custom-call.4} parent=121 // pred_region
            loop: start=0, step=1, limit=1
            $region131: #{custom-call.4} parent=129 // loop_pre_header
              _
            $region132: #{custom-call.4} parent=129 // loop_header
              %s215 = sphi 0, %s219
              %p216 = scmp.ge.s32.totalorder %s215, 1
              %s220 = sphi %s206, %s206
              %s221 = sphi %s204, %s204
            $region133: #{custom-call.4} parent=129 // loop_header_branch
              %218 = sbr.rel (%p216) target = $region137
            $region134: #{custom-call.4} parent=129 // loop_body
              %v222 = vld [vmem:[%s220] sm:$0xff]
              %223 = vst [vmem:[%s221] sm:$0xff] %v222
            $region135: #{custom-call.4} parent=129 // loop_footer
              %s219 = sadd.s32 1, %s215
            $region136: #{custom-call.4} parent=129 // loop_footer_branch
              %214 = sbr.rel target = $region132
            $region137: #{custom-call.4} parent=129 // loop_exit
              _
          $region130: #{custom-call.4} parent=121 // pred_fallthru
            _
        $region122: #{custom-call.4} parent=15 // pred_fallthru
          _
        %238 = vnop
      $region16: #{custom-call.4} parent=5 // pred_fallthru
        _
      %p239 = scmp.le.s32.totalorder 1, %s12
      %p240 = scmp.lt.s32.totalorder %s12, 9
      %p241 = pnand %p239, %p240
      %p242 = pneg %p241
      // Predicated region
      $region153: #{custom-call.4} parent=5 // pred_check
        _
      $region154: #{custom-call.4} parent=5 // pred_check_branch
        %244 = sbr.rel (%p241) target = $region156
      $region155: #{custom-call.4} parent=5 // pred_region
        #allocation10 [shape = 'f32[8,8]{1,0}', space=vmem, size = 0x1000, scoped, tag = 'a top-left matrix']
        #allocation11 [shape = 'f32[8,8]{1,0}', space=vmem, size = 0x1000, scoped, tag = 'a top-right matrix']
        #allocation12 [shape = 'f32[8,8]{1,0}', space=vmem, size = 0x1000, scoped, tag = 'a bottom-left matrix']
        #allocation13 [shape = 'f32[8,8]{1,0}', space=vmem, size = 0x1000, scoped, tag = 'a bottom-right matrix']
        %s245 = ssub.s32 %s12, 1
        %s246 = sand.u32 %s17, 1
        %s247 = sand.u32 %s17, 1
        %s248 = smul.addr %s247, 8
        %s249 = scalar_lea.vmem [#allocation0], %s248
        %s250 = sand.u32 %s17, 1
        %s251 = sand.u32 %s17, 1
        %s252 = smul.addr %s251, 8
        %s253 = scalar_lea.vmem [#allocation1], %s252
        %s254 = sand.u32 %s17, 1
        %s255 = sand.u32 %s17, 1
        %s256 = smul.addr %s255, 8
        %s257 = scalar_lea.vmem [#allocation2], %s256
        %s258 = sand.u32 %s17, 1
        %s259 = sand.u32 %s17, 1
        %s260 = smul.addr %s259, 8
        %s261 = scalar_lea.vmem [#allocation3], %s260
        %s262 = sand.u32 %s17, 1
        %s263 = sand.u32 %s17, 1
        %s264 = smul.addr %s263, 8
        %s265 = scalar_lea.vmem [#allocation0], %s264
        %s266 = sand.u32 %s17, 1
        %s267 = sand.u32 %s17, 1
        %s268 = smul.addr %s267, 8
        %s269 = scalar_lea.vmem [#allocation1], %s268
        %s270 = sand.u32 %s17, 1
        %s271 = sand.u32 %s17, 1
        %s272 = smul.addr %s271, 8
        %s273 = scalar_lea.vmem [#allocation2], %s272
        %s274 = sand.u32 %s17, 1
        %s275 = sand.u32 %s17, 1
        %s276 = smul.addr %s275, 8
        %s277 = scalar_lea.vmem [#allocation3], %s276
        %p278 = pneg %p40
        %p279 = pneg %p37
        %s280 = sand.u32 %s27, 1
        %s281 = sand.u32 %s27, 1
        %s282 = smul.addr %s281, 8
        %s283 = scalar_lea.vmem [#allocation4], %s282
        %p284 = pneg %p68
        %p285 = pneg %p65
        %s286 = sand.u32 %s55, 1
        %s287 = sand.u32 %s55, 1
        %s288 = smul.addr %s287, 8
        %s289 = scalar_lea.vmem [#allocation5], %s288
        %s290 = sand.u32 %s17, 1
        %s291 = sand.u32 %s17, 1
        %s292 = smul.addr %s291, 8
        %s293 = scalar_lea.vmem [#allocation6], %s292
        %s294 = sand.u32 %s17, 1
        %s295 = sand.u32 %s17, 1
        %s296 = smul.addr %s295, 8
        %s297 = scalar_lea.vmem [#allocation7], %s296
        %s298 = sand.u32 %s17, 1
        %s299 = sand.u32 %s17, 1
        %s300 = smul.addr %s299, 8
        %s301 = scalar_lea.vmem [#allocation8], %s300
        %s302 = sand.u32 %s17, 1
        %s303 = sand.u32 %s17, 1
        %s304 = smul.addr %s303, 8
        %s305 = scalar_lea.vmem [#allocation9], %s304
        %s306 = sshrl.u32 %s17, 3
        %s307 = sshrl.u32 %s17, 3
        %s308 = smov [#allocation10]
        %v309 = vld [vmem:[%s249] sm:$0xff]
        %310 = vst [vmem:[%s308] sm:$0xff] %v309
        %s311 = smov [#allocation11]
        %v312 = vld [vmem:[%s253] sm:$0xff]
        %313 = vst [vmem:[%s311] sm:$0xff] %v312
        %s314 = smov [#allocation12]
        %v315 = vld [vmem:[%s257] sm:$0xff]
        %316 = vst [vmem:[%s314] sm:$0xff] %v315
        %s317 = smov [#allocation13]
        %v318 = vld [vmem:[%s261] sm:$0xff]
        %319 = vst [vmem:[%s317] sm:$0xff] %v318
        %320 = vst [vmem:[%s293] sm:$0xff] 0.0
        %321 = vst [vmem:[%s297] sm:$0xff] 0.0
        %322 = vst [vmem:[%s301] sm:$0xff] 0.0
        %323 = vst [vmem:[%s305] sm:$0xff] 0.0
        %s324 = smov %s293
        %v325 = vlaneseq
        %v326 = vand.u32 %v325, 127
        %v327 = vmov %v326
        %v328 = vlaneseq
        %v329 = vshrl.u32 %v328, 7
        %v330 = vmov %v329
        %v331 = vld [vmem:[%s324] sm:$0xff]
        %vm334 = vcmp.eq.s32.totalorder %v330, %v327
        %v335 = vsel %vm334, 1.0, %v331
        %336 = vst [vmem:[%s324] sm:$0xff] %v335
        %s337 = smov %s305
        %v338 = vlaneseq
        %v339 = vand.u32 %v338, 127
        %v340 = vmov %v339
        %v341 = vlaneseq
        %v342 = vshrl.u32 %v341, 7
        %v343 = vmov %v342
        %v344 = vld [vmem:[%s337] sm:$0xff]
        %vm347 = vcmp.eq.s32.totalorder %v343, %v340
        %v348 = vsel %vm347, 1.0, %v344
        %349 = vst [vmem:[%s337] sm:$0xff] %v348
        // While loop
        $region157: #{custom-call.4} parent=155 // loop_pre_header
          _
        $region158: #{custom-call.4} parent=155 // loop_header
          %s351 = sphi 0, %s893
          %v352 = vlaneseq
          %v353 = vand.u32 %v352, 127
          %v354 = vmov %v353
          %v355 = vlaneseq
          %v356 = vshrl.u32 %v355, 7
          %v357 = vmov %v356
          %s358 = smov [#allocation10]
          %v359 = vlaneseq
          %v360 = vand.u32 %v359, 127
          %vm361 = vcmp.ge.s32.totalorder %v360, 0
          %vm362 = vcmp.lt.s32.totalorder %v360, 8
          %vm363 = vmand %vm361, %vm362
          %v364 = vld [vmem:[%s358] sm:$0xff]
          %v365 = vsel %vm363, %v364, 0.0
          %v366 = vmul.f32 %v365, %v365
          %vm369 = vcmp.eq.s32.totalorder %v357, %v354
          %v370 = vsel %vm369, 0.0, %v366
          %v371 = vlaneseq
          %v372 = vand.u32 %v371, 127
          %v373 = vmov %v372
          %v374 = vlaneseq
          %v375 = vshrl.u32 %v374, 7
          %v376 = vmov %v375
          %s377 = smov [#allocation11]
          %v378 = vlaneseq
          %v379 = vand.u32 %v378, 127
          %vm380 = vcmp.ge.s32.totalorder %v379, 0
          %vm381 = vcmp.lt.s32.totalorder %v379, 8
          %vm382 = vmand %vm380, %vm381
          %v383 = vld [vmem:[%s377] sm:$0xff]
          %v384 = vsel %vm382, %v383, 0.0
          %v385 = vmul.f32 %v384, %v384
          %v386 = vadd.f32 %v370, %v385
          %v387 = vadd.f32 %v366, %v385
          %v388 = vlaneseq
          %v389 = vand.u32 %v388, 127
          %v390 = vmov %v389
          %v391 = vlaneseq
          %v392 = vshrl.u32 %v391, 7
          %v393 = vmov %v392
          %s394 = smov [#allocation12]
          %v395 = vlaneseq
          %v396 = vand.u32 %v395, 127
          %vm397 = vcmp.ge.s32.totalorder %v396, 0
          %vm398 = vcmp.lt.s32.totalorder %v396, 8
          %vm399 = vmand %vm397, %vm398
          %v400 = vld [vmem:[%s394] sm:$0xff]
          %v401 = vsel %vm399, %v400, 0.0
          %v402 = vmul.f32 %v401, %v401
          %v403 = vadd.f32 %v386, %v402
          %v404 = vadd.f32 %v387, %v402
          %v405 = vlaneseq
          %v406 = vand.u32 %v405, 127
          %v407 = vmov %v406
          %v408 = vlaneseq
          %v409 = vshrl.u32 %v408, 7
          %v410 = vmov %v409
          %s411 = smov [#allocation13]
          %v412 = vlaneseq
          %v413 = vand.u32 %v412, 127
          %vm414 = vcmp.ge.s32.totalorder %v413, 0
          %vm415 = vcmp.lt.s32.totalorder %v413, 8
          %vm416 = vmand %vm414, %vm415
          %v417 = vld [vmem:[%s411] sm:$0xff]
          %v418 = vsel %vm416, %v417, 0.0
          %v419 = vmul.f32 %v418, %v418
          %vm422 = vcmp.eq.s32.totalorder %v410, %v407
          %v423 = vsel %vm422, 0.0, %v419
          %v424 = vadd.f32 %v403, %v423
          %v425 = vadd.f32 %v404, %v419
          %426 = vadd.xlane.f32.xlu0 %v425
          %v427 = vpop.xlane.xlu0 %426
          %v428 = vrot.slane %v427, 4
          %v429 = vadd.f32 %v427, %v428
          %v430 = vrot.slane %v429, 2
          %v431 = vadd.f32 %v429, %v430
          %v432 = vrot.slane %v431, 1
          %v433 = vadd.f32 %v431, %v432
          %434 = vadd.xlane.f32.xlu0 %v424
          %v435 = vpop.xlane.xlu0 %434
          %v436 = vrot.slane %v435, 4
          %v437 = vadd.f32 %v435, %v436
          %v438 = vrot.slane %v437, 2
          %v439 = vadd.f32 %v437, %v438
          %v440 = vrot.slane %v439, 1
          %v441 = vadd.f32 %v439, %v440
          %s442 = vtos %v441
          %s443 = vtos %v433
          %s444 = smul.f32 1e-10, %s443
          %p445 = scmp.le.f32.partialorder %s442, %s444
          %p446 = scmp.ge.s32.totalorder %s351, 15
          %p447 = por %p445, %p446
        $region159: #{custom-call.4} parent=155 // loop_header_branch
          %895 = sbr.rel (%p447) target = $region163
        $region160: #{custom-call.4} parent=155 // loop_body
          loop: start=0, step=1, limit=15
          $region164: #{custom-call.4} parent=160 // loop_pre_header
            _
          $region165: #{custom-call.4} parent=160 // loop_header
            %s449 = sphi 0, %s453
            %p450 = scmp.ge.s32.totalorder %s449, 15
          $region166: #{custom-call.4} parent=160 // loop_header_branch
            %452 = sbr.rel (%p450) target = $region170
          $region167: #{custom-call.4} parent=160 // loop_body
            #allocation14 [shape = 'f32[1024]{0}', space=vmem, size = 0x1000, scoped, tag = 'a_tl_diag vmem']
            #allocation15 [shape = 'f32[1024]{0}', space=vmem, size = 0x1000, scoped, tag = 'a_tr_diag vmem']
            #allocation16 [shape = 'f32[1024]{0}', space=vmem, size = 0x1000, scoped, tag = 'a_br_diag vmem']
            #allocation17 [shape = 'f32[1024]{0}', space=vmem, size = 0x1000, scoped, tag = 'rt1 vmem']
            #allocation18 [shape = 'f32[1024]{0}', space=vmem, size = 0x1000, scoped, tag = 'rt2 vmem']
            #allocation19 [shape = 'f32[1024]{0}', space=vmem, size = 0x1000, scoped, tag = 'c vmem']
            #allocation20 [shape = 'f32[1024]{0}', space=vmem, size = 0x1000, scoped, tag = 's vmem']
            #allocation21 [shape = 'f32[4096]{0}', space=vmem, size = 0x4000, scoped, tag = 'c broadcast']
            #allocation22 [shape = 'f32[4096]{0}', space=vmem, size = 0x4000, scoped, tag = 's broadcast']
            %s454 = smov [#allocation10]
            %s455 = smov [#allocation14]
            %v456 = vlaneseq
            %v457 = vand.u32 %v456, 127
            %v458 = vmov %v457
            %v459 = vlaneseq
            %v460 = vshrl.u32 %v459, 7
            %v461 = vmov %v460
            %v462 = vld [vmem:[%s454] sm:$0xff]
            %vm465 = vcmp.eq.s32.totalorder %v461, %v458
            %v466 = vsel %vm465, %v462, 0.0
            %v467 = vrot.slane %v466, 4
            %v468 = vadd.f32 %v466, %v467
            %v469 = vrot.slane %v468, 2
            %v470 = vadd.f32 %v468, %v469
            %v471 = vrot.slane %v470, 1
            %v472 = vadd.f32 %v470, %v471
            %473 = vst [vmem:[%s455] sm:$0x1] %v472
            %s474 = smov [#allocation11]
            %s475 = smov [#allocation15]
            %v476 = vlaneseq
            %v477 = vand.u32 %v476, 127
            %v478 = vmov %v477
            %v479 = vlaneseq
            %v480 = vshrl.u32 %v479, 7
            %v481 = vmov %v480
            %v482 = vld [vmem:[%s474] sm:$0xff]
            %vm485 = vcmp.eq.s32.totalorder %v481, %v478
            %v486 = vsel %vm485, %v482, 0.0
            %v487 = vrot.slane %v486, 4
            %v488 = vadd.f32 %v486, %v487
            %v489 = vrot.slane %v488, 2
            %v490 = vadd.f32 %v488, %v489
            %v491 = vrot.slane %v490, 1
            %v492 = vadd.f32 %v490, %v491
            %493 = vst [vmem:[%s475] sm:$0x1] %v492
            %s494 = smov [#allocation13]
            %s495 = smov [#allocation16]
            %v496 = vlaneseq
            %v497 = vand.u32 %v496, 127
            %v498 = vmov %v497
            %v499 = vlaneseq
            %v500 = vshrl.u32 %v499, 7
            %v501 = vmov %v500
            %v502 = vld [vmem:[%s494] sm:$0xff]
            %vm505 = vcmp.eq.s32.totalorder %v501, %v498
            %v506 = vsel %vm505, %v502, 0.0
            %v507 = vrot.slane %v506, 4
            %v508 = vadd.f32 %v506, %v507
            %v509 = vrot.slane %v508, 2
            %v510 = vadd.f32 %v508, %v509
            %v511 = vrot.slane %v510, 1
            %v512 = vadd.f32 %v510, %v511
            %513 = vst [vmem:[%s495] sm:$0x1] %v512
            %s514 = smov [#allocation19]
            %s515 = smov [#allocation20]
            %s516 = smov [#allocation14]
            %v517 = vld [vmem:[%s516] sm:$0xff]
            %s518 = smov [#allocation15]
            %v519 = vld [vmem:[%s518] sm:$0xff]
            %s520 = smov [#allocation16]
            %v521 = vld [vmem:[%s520] sm:$0xff]
            %v522 = vsub.f32 %v521, %v517
            %v523 = vmul.f32 2.0, %v519
            %v524 = vrcp.pop %v523
            %v525 = vmul.f32 %v522, %v524
            %vm526 = vcmp.ge.f32.partialorder %v525, 0.0
            %v527 = vmul.f32 %v525, %v525
            %v528 = vadd.f32 1.0, %v527
            %v529 = vrsqrt.pop %v528
            %v530 = vmul.f32 %v528, %v529
            %vm531 = vcmp.eq.f32.partialorder %v528, inf
            %v532 = vsel %vm531, %v528, %v530
            %vm533 = vcmp.eq.f32.partialorder %v528, 0.0
            %v534 = vand.u32 %v528, 2147483648
            %v535 = vsel %vm533, %v534, %v532
            %v536 = vxor.u32 %v535, 2147483648
            %v537 = vsel %vm526, %v535, %v536
            %v538 = vadd.f32 %v525, %v537
            %v539 = vrcp.pop %v538
            %v540 = vand.u32 2147483647, %v517
            %v541 = vand.u32 2147483647, %v519
            %v542 = vand.u32 2147483647, %v521
            %v543 = vmin.f32 %v540, %v542
            %v544 = vmul.f32 1.1920929e-08, %v543
            %vm545 = vcmp.le.f32.partialorder %v541, %v544
            %v546 = vsel %vm545, 0.0, %v539
            %v547 = vmul.f32 %v546, %v546
            %v548 = vadd.f32 1.0, %v547
            %v549 = vrsqrt.pop %v548
            %v550 = vmul.f32 %v546, %v549
            %v551 = vmul.f32 %v546, %v519
            %v552 = vsub.f32 %v517, %v551
            %v553 = vmul.f32 %v546, %v519
            %v554 = vadd.f32 %v521, %v553
            %s555 = smov [#allocation17]
            %556 = vst [vmem:[%s555] sm:$0xff] %v552
            %s557 = smov [#allocation18]
            %558 = vst [vmem:[%s557] sm:$0xff] %v554
            %s559 = smov %s514
            %560 = vst [vmem:[%s559] sm:$0xff] %v549
            %s561 = smov %s515
            %562 = vst [vmem:[%s561] sm:$0xff] %v550
            %s563 = smov [#allocation19]
            %v564 = vld [vmem:[%s563] ss:$0 sm:$0xff]
            %v565 = vlaneseq
            %v566 = vand.u32 %v565, 127
            %v567 = vmov %v566
            %v568 = vlaneseq
            %v569 = vshrl.u32 %v568, 7
            %v570 = vmov %v569
            %vm572 = vcmp.eq.s32.totalorder %v570, %v567
            %v573 = vsel %vm572, %v564, 0.0
            %574 = vadd.xlane.f32.xlu0 %v573
            %v575 = vpop.xlane.xlu0 %574
            %s576 = smov [#allocation21]
            %577 = vst [vmem:[%s576] sm:$0xff] %v575
            %s578 = smov [#allocation20]
            %v579 = vld [vmem:[%s578] ss:$0 sm:$0xff]
            %v580 = vlaneseq
            %v581 = vand.u32 %v580, 127
            %v582 = vmov %v581
            %v583 = vlaneseq
            %v584 = vshrl.u32 %v583, 7
            %v585 = vmov %v584
            %vm587 = vcmp.eq.s32.totalorder %v585, %v582
            %v588 = vsel %vm587, %v579, 0.0
            %589 = vadd.xlane.f32.xlu0 %v588
            %v590 = vpop.xlane.xlu0 %589
            %s591 = smov [#allocation22]
            %592 = vst [vmem:[%s591] sm:$0xff] %v590
            %s593 = smov [#allocation21]
            %v594 = vld [vmem:[%s593] sm:$0xff]
            %s595 = smov [#allocation22]
            %v596 = vld [vmem:[%s595] sm:$0xff]
            %s597 = smov [#allocation10]
            %s598 = smov [#allocation11]
            %s599 = smov [#allocation12]
            %s600 = smov [#allocation13]
            %v601 = vld [vmem:[%s597] sm:$0xff]
            %v602 = vld [vmem:[%s598] sm:$0xff]
            %v603 = vld [vmem:[%s599] sm:$0xff]
            %v604 = vld [vmem:[%s600] sm:$0xff]
            %v605 = vmul.f32 %v594, %v601
            %v606 = vmul.f32 %v596, %v603
            %v607 = vsub.f32 %v605, %v606
            %v608 = vmul.f32 %v594, %v602
            %v609 = vmul.f32 %v596, %v604
            %v610 = vsub.f32 %v608, %v609
            %v611 = vmul.f32 %v596, %v601
            %v612 = vmul.f32 %v594, %v603
            %v613 = vadd.f32 %v611, %v612
            %v614 = vmul.f32 %v596, %v602
            %v615 = vmul.f32 %v594, %v604
            %v616 = vadd.f32 %v614, %v615
            %617 = vst [vmem:[%s597] sm:$0xff] %v607
            %618 = vst [vmem:[%s598] sm:$0xff] %v610
            %619 = vst [vmem:[%s599] sm:$0xff] %v613
            %620 = vst [vmem:[%s600] sm:$0xff] %v616
            %s621 = smov [#allocation19]
            %v622 = vld [vmem:[%s621] ss:$0 sm:$0xff]
            %s623 = smov [#allocation20]
            %v624 = vld [vmem:[%s623] ss:$0 sm:$0xff]
            %s625 = smov [#allocation10]
            %s626 = smov [#allocation11]
            %s627 = smov [#allocation12]
            %s628 = smov [#allocation13]
            %v629 = vld [vmem:[%s625] sm:$0xff]
            %v630 = vld [vmem:[%s626] sm:$0xff]
            %v631 = vld [vmem:[%s627] sm:$0xff]
            %v632 = vld [vmem:[%s628] sm:$0xff]
            %v633 = vmul.f32 %v622, %v629
            %v634 = vmul.f32 %v624, %v630
            %v635 = vsub.f32 %v633, %v634
            %v636 = vmul.f32 %v624, %v629
            %v637 = vmul.f32 %v622, %v630
            %v638 = vadd.f32 %v636, %v637
            %v639 = vmul.f32 %v622, %v631
            %v640 = vmul.f32 %v624, %v632
            %v641 = vsub.f32 %v639, %v640
            %v642 = vmul.f32 %v624, %v631
            %v643 = vmul.f32 %v622, %v632
            %v644 = vadd.f32 %v642, %v643
            %645 = vst [vmem:[%s625] sm:$0xff] %v635
            %646 = vst [vmem:[%s626] sm:$0xff] %v638
            %647 = vst [vmem:[%s627] sm:$0xff] %v641
            %648 = vst [vmem:[%s628] sm:$0xff] %v644
            %s649 = smov [#allocation10]
            %s650 = smov [#allocation17]
            %v651 = vlaneseq
            %v652 = vand.u32 %v651, 127
            %v653 = vmov %v652
            %v654 = vlaneseq
            %v655 = vshrl.u32 %v654, 7
            %v656 = vmov %v655
            %v657 = vld [vmem:[%s650] ss:$0 sm:$0xff]
            %v658 = vld [vmem:[%s649] sm:$0xff]
            %vm661 = vcmp.eq.s32.totalorder %v656, %v653
            %v662 = vsel %vm661, %v657, %v658
            %663 = vst [vmem:[%s649] sm:$0xff] %v662
            %s664 = smov [#allocation11]
            %v665 = vlaneseq
            %v666 = vand.u32 %v665, 127
            %v667 = vmov %v666
            %v668 = vlaneseq
            %v669 = vshrl.u32 %v668, 7
            %v670 = vmov %v669
            %v671 = vld [vmem:[%s664] sm:$0xff]
            %vm674 = vcmp.eq.s32.totalorder %v670, %v667
            %v675 = vsel %vm674, 0.0, %v671
            %676 = vst [vmem:[%s664] sm:$0xff] %v675
            %s677 = smov [#allocation12]
            %v678 = vlaneseq
            %v679 = vand.u32 %v678, 127
            %v680 = vmov %v679
            %v681 = vlaneseq
            %v682 = vshrl.u32 %v681, 7
            %v683 = vmov %v682
            %v684 = vld [vmem:[%s677] sm:$0xff]
            %vm687 = vcmp.eq.s32.totalorder %v683, %v680
            %v688 = vsel %vm687, 0.0, %v684
            %689 = vst [vmem:[%s677] sm:$0xff] %v688
            %s690 = smov [#allocation13]
            %s691 = smov [#allocation18]
            %v692 = vlaneseq
            %v693 = vand.u32 %v692, 127
            %v694 = vmov %v693
            %v695 = vlaneseq
            %v696 = vshrl.u32 %v695, 7
            %v697 = vmov %v696
            %v698 = vld [vmem:[%s691] ss:$0 sm:$0xff]
            %v699 = vld [vmem:[%s690] sm:$0xff]
            %vm702 = vcmp.eq.s32.totalorder %v697, %v694
            %v703 = vsel %vm702, %v698, %v699
            %704 = vst [vmem:[%s690] sm:$0xff] %v703
            %s705 = smov [#allocation10]
            %s706 = smov [#allocation11]
            %v707 = vld [vmem:[%s706] sm:$0xff]
            %708 = vrot.lane.b32.xlu0 %v707, 1
            %v709 = vpop.permute.xlu0 %708
            %v710 = vld [vmem:[%s705] sm:$0xff]
            %v711 = vld [vmem:[%s705] sm:$0xff]
            %712 = vrot.lane.b32.xlu0 %v711, 1
            %v713 = vpop.permute.xlu0 %712
            %v714 = vlaneseq
            %v715 = vand.u32 %v714, 127
            %vm716 = vcmp.eq.s32.totalorder %v715, 0
            %v717 = vsel %vm716, %v711, %v713
            %v718 = vlaneseq
            %v719 = vand.u32 %v718, 127
            %vm720 = vcmp.eq.s32.totalorder %v719, 1
            %v721 = vsel %vm720, %v709, %v717
            %v722 = vlaneseq
            %v723 = vand.u32 %v722, 127
            %vm724 = vcmp.ge.s32.totalorder %v723, 0
            %vm725 = vcmp.lt.s32.totalorder %v723, 8
            %vm726 = vmand %vm724, %vm725
            %v727 = vsel %vm726, %v721, 0.0
            %v728 = vld [vmem:[%s706] sm:$0xff]
            %729 = vrot.lane.b32.xlu0 %v728, 127
            %v730 = vpop.permute.xlu0 %729
            %v731 = vlaneseq
            %v732 = vand.u32 %v731, 127
            %vm733 = vcmp.eq.s32.totalorder %v732, 7
            %v734 = vsel %vm733, %v710, %v730
            %735 = vst [vmem:[%s705] sm:$0xff] %v727
            %736 = vst [vmem:[%s706] sm:$0xff] %v734
            %s737 = smov [#allocation12]
            %s738 = smov [#allocation13]
            %v739 = vld [vmem:[%s738] sm:$0xff]
            %740 = vrot.lane.b32.xlu0 %v739, 1
            %v741 = vpop.permute.xlu0 %740
            %v742 = vld [vmem:[%s737] sm:$0xff]
            %v743 = vld [vmem:[%s737] sm:$0xff]
            %744 = vrot.lane.b32.xlu0 %v743, 1
            %v745 = vpop.permute.xlu0 %744
            %v746 = vlaneseq
            %v747 = vand.u32 %v746, 127
            %vm748 = vcmp.eq.s32.totalorder %v747, 0
            %v749 = vsel %vm748, %v743, %v745
            %v750 = vlaneseq
            %v751 = vand.u32 %v750, 127
            %vm752 = vcmp.eq.s32.totalorder %v751, 1
            %v753 = vsel %vm752, %v741, %v749
            %v754 = vlaneseq
            %v755 = vand.u32 %v754, 127
            %vm756 = vcmp.ge.s32.totalorder %v755, 0
            %vm757 = vcmp.lt.s32.totalorder %v755, 8
            %vm758 = vmand %vm756, %vm757
            %v759 = vsel %vm758, %v753, 0.0
            %v760 = vld [vmem:[%s738] sm:$0xff]
            %761 = vrot.lane.b32.xlu0 %v760, 127
            %v762 = vpop.permute.xlu0 %761
            %v763 = vlaneseq
            %v764 = vand.u32 %v763, 127
            %vm765 = vcmp.eq.s32.totalorder %v764, 7
            %v766 = vsel %vm765, %v742, %v762
            %767 = vst [vmem:[%s737] sm:$0xff] %v759
            %768 = vst [vmem:[%s738] sm:$0xff] %v766
            %s769 = smov [#allocation10]
            %s770 = smov [#allocation12]
            %v771 = vld [vmem:[%s769] ss:$0 sm:$0xff]
            %s773 = scalar_lea.vmem %s769, 4294967295
            %v774 = vld [vmem:[%s773] sm:$0xfe]
            %v775 = vlaneseq
            %v776 = vshrl.u32 %v775, 7
            %vm777 = vcmp.eq.s32.totalorder %v776, 0
            %v778 = vsel %vm777, %v771, %v774
            %s779 = scalar_lea.vmem %s769, 7
            %v780 = vld [vmem:[%s779] ss:$0 sm:$0xff]
            %781 = vst [vmem:[%s769] sm:$0xff] %v778
            %v782 = vld [vmem:[%s770] ss:$0 sm:$0xff]
            %s783 = scalar_lea.vmem %s769, 1
            %784 = vst [vmem:[%s783] sm:$0x1] %v782
            %s785 = scalar_lea.vmem %s770, 1
            %v786 = vld [vmem:[%s785] sm:$0x7f]
            %v787 = vlaneseq
            %v788 = vshrl.u32 %v787, 7
            %vm789 = vcmp.eq.s32.totalorder %v788, 7
            %v790 = vsel %vm789, %v780, %v786
            %v791 = vld [vmem:[%s770] ss:$0 sm:$0xff]
            %792 = vst [vmem:[%s770] sm:$0xff] %v790
            %s793 = smov [#allocation11]
            %s794 = smov [#allocation13]
            %v795 = vld [vmem:[%s793] ss:$0 sm:$0xff]
            %s797 = scalar_lea.vmem %s793, 4294967295
            %v798 = vld [vmem:[%s797] sm:$0xfe]
            %v799 = vlaneseq
            %v800 = vshrl.u32 %v799, 7
            %vm801 = vcmp.eq.s32.totalorder %v800, 0
            %v802 = vsel %vm801, %v795, %v798
            %s803 = scalar_lea.vmem %s793, 7
            %v804 = vld [vmem:[%s803] ss:$0 sm:$0xff]
            %805 = vst [vmem:[%s793] sm:$0xff] %v802
            %v806 = vld [vmem:[%s794] ss:$0 sm:$0xff]
            %s807 = scalar_lea.vmem %s793, 1
            %808 = vst [vmem:[%s807] sm:$0x1] %v806
            %s809 = scalar_lea.vmem %s794, 1
            %v810 = vld [vmem:[%s809] sm:$0x7f]
            %v811 = vlaneseq
            %v812 = vshrl.u32 %v811, 7
            %vm813 = vcmp.eq.s32.totalorder %v812, 7
            %v814 = vsel %vm813, %v804, %v810
            %v815 = vld [vmem:[%s794] ss:$0 sm:$0xff]
            %816 = vst [vmem:[%s794] sm:$0xff] %v814
            %s817 = smov [#allocation21]
            %v818 = vld [vmem:[%s817] sm:$0xff]
            %s819 = smov [#allocation22]
            %v820 = vld [vmem:[%s819] sm:$0xff]
            %s821 = smov %s293
            %s822 = smov %s297
            %s823 = smov %s301
            %s824 = smov %s305
            %v825 = vld [vmem:[%s821] sm:$0xff]
            %v826 = vld [vmem:[%s822] sm:$0xff]
            %v827 = vld [vmem:[%s823] sm:$0xff]
            %v828 = vld [vmem:[%s824] sm:$0xff]
            %v829 = vmul.f32 %v818, %v825
            %v830 = vmul.f32 %v820, %v827
            %v831 = vsub.f32 %v829, %v830
            %v832 = vmul.f32 %v818, %v826
            %v833 = vmul.f32 %v820, %v828
            %v834 = vsub.f32 %v832, %v833
            %v835 = vmul.f32 %v820, %v825
            %v836 = vmul.f32 %v818, %v827
            %v837 = vadd.f32 %v835, %v836
            %v838 = vmul.f32 %v820, %v826
            %v839 = vmul.f32 %v818, %v828
            %v840 = vadd.f32 %v838, %v839
            %841 = vst [vmem:[%s821] sm:$0xff] %v831
            %842 = vst [vmem:[%s822] sm:$0xff] %v834
            %843 = vst [vmem:[%s823] sm:$0xff] %v837
            %844 = vst [vmem:[%s824] sm:$0xff] %v840
            %s845 = smov %s293
            %s846 = smov %s301
            %v847 = vld [vmem:[%s845] ss:$0 sm:$0xff]
            %s849 = scalar_lea.vmem %s845, 4294967295
            %v850 = vld [vmem:[%s849] sm:$0xfe]
            %v851 = vlaneseq
            %v852 = vshrl.u32 %v851, 7
            %vm853 = vcmp.eq.s32.totalorder %v852, 0
            %v854 = vsel %vm853, %v847, %v850
            %s855 = scalar_lea.vmem %s845, 7
            %v856 = vld [vmem:[%s855] ss:$0 sm:$0xff]
            %857 = vst [vmem:[%s845] sm:$0xff] %v854
            %v858 = vld [vmem:[%s846] ss:$0 sm:$0xff]
            %s859 = scalar_lea.vmem %s845, 1
            %860 = vst [vmem:[%s859] sm:$0x1] %v858
            %s861 = scalar_lea.vmem %s846, 1
            %v862 = vld [vmem:[%s861] sm:$0x7f]
            %v863 = vlaneseq
            %v864 = vshrl.u32 %v863, 7
            %vm865 = vcmp.eq.s32.totalorder %v864, 7
            %v866 = vsel %vm865, %v856, %v862
            %v867 = vld [vmem:[%s846] ss:$0 sm:$0xff]
            %868 = vst [vmem:[%s846] sm:$0xff] %v866
            %s869 = smov %s297
            %s870 = smov %s305
            %v871 = vld [vmem:[%s869] ss:$0 sm:$0xff]
            %s873 = scalar_lea.vmem %s869, 4294967295
            %v874 = vld [vmem:[%s873] sm:$0xfe]
            %v875 = vlaneseq
            %v876 = vshrl.u32 %v875, 7
            %vm877 = vcmp.eq.s32.totalorder %v876, 0
            %v878 = vsel %vm877, %v871, %v874
            %s879 = scalar_lea.vmem %s869, 7
            %v880 = vld [vmem:[%s879] ss:$0 sm:$0xff]
            %881 = vst [vmem:[%s869] sm:$0xff] %v878
            %v882 = vld [vmem:[%s870] ss:$0 sm:$0xff]
            %s883 = scalar_lea.vmem %s869, 1
            %884 = vst [vmem:[%s883] sm:$0x1] %v882
            %s885 = scalar_lea.vmem %s870, 1
            %v886 = vld [vmem:[%s885] sm:$0x7f]
            %v887 = vlaneseq
            %v888 = vshrl.u32 %v887, 7
            %vm889 = vcmp.eq.s32.totalorder %v888, 7
            %v890 = vsel %vm889, %v880, %v886
            %v891 = vld [vmem:[%s870] ss:$0 sm:$0xff]
            %892 = vst [vmem:[%s870] sm:$0xff] %v890
          $region168: #{custom-call.4} parent=160 // loop_footer
            %s453 = sadd.s32 1, %s449
          $region169: #{custom-call.4} parent=160 // loop_footer_branch
            %448 = sbr.rel target = $region165
          $region170: #{custom-call.4} parent=160 // loop_exit
            _
          %s893 = sadd.s32 %s351, 1
        $region161: #{custom-call.4} parent=155 // loop_footer
          _
        $region162: #{custom-call.4} parent=155 // loop_footer_branch
          %350 = sbr.rel target = $region158
        $region163: #{custom-call.4} parent=155 // loop_exit
          _
        %s896 = sand.u32 %s17, 7
        %s897 = scalar_lea.vmem %s283, %s896 [#allocation4]
        %s898 = sand.u32 %s17, 7
        %s899 = scalar_lea.vmem %s289, %s898 [#allocation5]
        %s900 = smov [#allocation10]
        %s901 = smov %s897
        %v902 = vlaneseq
        %v903 = vand.u32 %v902, 127
        %v904 = vmov %v903
        %v905 = vlaneseq
        %v906 = vshrl.u32 %v905, 7
        %v907 = vmov %v906
        %v908 = vld [vmem:[%s900] sm:$0xff]
        %vm911 = vcmp.eq.s32.totalorder %v907, %v904
        %v912 = vsel %vm911, %v908, 0.0
        %v913 = vrot.slane %v912, 4
        %v914 = vadd.f32 %v912, %v913
        %v915 = vrot.slane %v914, 2
        %v916 = vadd.f32 %v914, %v915
        %v917 = vrot.slane %v916, 1
        %v918 = vadd.f32 %v916, %v917
        %919 = vst [vmem:[%s901] sm:$0x1] %v918
        %s920 = smov [#allocation13]
        %s921 = smov %s899
        %v922 = vlaneseq
        %v923 = vand.u32 %v922, 127
        %v924 = vmov %v923
        %v925 = vlaneseq
        %v926 = vshrl.u32 %v925, 7
        %v927 = vmov %v926
        %v928 = vld [vmem:[%s920] sm:$0xff]
        %vm931 = vcmp.eq.s32.totalorder %v927, %v924
        %v932 = vsel %vm931, %v928, 0.0
        %v933 = vrot.slane %v932, 4
        %v934 = vadd.f32 %v932, %v933
        %v935 = vrot.slane %v934, 2
        %v936 = vadd.f32 %v934, %v935
        %v937 = vrot.slane %v936, 1
        %v938 = vadd.f32 %v936, %v937
        %939 = vst [vmem:[%s921] sm:$0x1] %v938
        %s940 = sand.u32 %s27, 1
        %s941 = sand.u32 %s27, 1
        %s942 = smul.addr %s941, 8
        %s943 = scalar_lea.vmem [#allocation4], %s942
        %s944 = sand.u32 %s55, 1
        %s945 = sand.u32 %s55, 1
        %s946 = smul.addr %s945, 8
        %s947 = scalar_lea.vmem [#allocation5], %s946
        %s948 = sand.u32 %s17, 1
        %s949 = sand.u32 %s17, 1
        %s950 = smul.addr %s949, 8
        %s951 = scalar_lea.vmem [#allocation6], %s950
        %s952 = sand.u32 %s17, 1
        %s953 = sand.u32 %s17, 1
        %s954 = smul.addr %s953, 8
        %s955 = scalar_lea.vmem [#allocation7], %s954
        %s956 = sand.u32 %s17, 1
        %s957 = sand.u32 %s17, 1
        %s958 = smul.addr %s957, 8
        %s959 = scalar_lea.vmem [#allocation8], %s958
        %s960 = sand.u32 %s17, 1
        %s961 = sand.u32 %s17, 1
        %s962 = smul.addr %s961, 8
        %s963 = scalar_lea.vmem [#allocation9], %s962
        // Predicated region
        $region171: #{custom-call.4} parent=155 // pred_check
          %p964 = pneg %p37
        $region172: #{custom-call.4} parent=155 // pred_check_branch
          %966 = sbr.rel (%p964) target = $region174
        $region173: #{custom-call.4} parent=155 // pred_region
          %s967 = sshrl.u32 %s17, 3
          %s968 = smul.addr %s967, 8
          %s969 = scalar_lea.vmem %s4, %s968
          // Predicated region
          $region175: #{custom-call.4} parent=173 // pred_check
            _
          $region176: #{custom-call.4} parent=173 // pred_check_branch
            %971 = sbr.rel (0) target = $region178
          $region177: #{custom-call.4} parent=173 // pred_region
            // Predicated region
            $region179: #{custom-call.4} parent=177 // pred_check
              _
            $region180: #{custom-call.4} parent=177 // pred_check_branch
              %973 = sbr.rel (0) target = $region182
            $region181: #{custom-call.4} parent=177 // pred_region
              // Predicated region
              $region194: #{custom-call.4} parent=181 // pred_check
                _
              $region195: #{custom-call.4} parent=181 // pred_check_branch
                %988 = sbr.rel (0) target = $region197
              $region196: #{custom-call.4} parent=181 // pred_region
                loop: start=0, step=1, limit=1
                $region198: #{custom-call.4} parent=196 // loop_pre_header
                  _
                $region199: #{custom-call.4} parent=196 // loop_header
                  %s990 = sphi 0, %s994
                  %p991 = scmp.ge.s32.totalorder %s990, 1
                  %s995 = sphi %s943, %s943
                  %s996 = sphi %s969, %s969
                $region200: #{custom-call.4} parent=196 // loop_header_branch
                  %993 = sbr.rel (%p991) target = $region204
                $region201: #{custom-call.4} parent=196 // loop_body
                  %v997 = vld [vmem:[%s995] sm:$0xff]
                  %998 = vst [vmem:[%s996] sm:$0xff] %v997
                $region202: #{custom-call.4} parent=196 // loop_footer
                  %s994 = sadd.s32 1, %s990
                $region203: #{custom-call.4} parent=196 // loop_footer_branch
                  %989 = sbr.rel target = $region199
                $region204: #{custom-call.4} parent=196 // loop_exit
                  _
              $region197: #{custom-call.4} parent=181 // pred_fallthru
                _
              // Predicated region
              $region205: #{custom-call.4} parent=181 // pred_check
                _
              $region206: #{custom-call.4} parent=181 // pred_check_branch
                %1000 = sbr.rel target = $region208
              $region207: #{custom-call.4} parent=181 // pred_region
                _
              $region208: #{custom-call.4} parent=181 // pred_fallthru
                _
            $region182: #{custom-call.4} parent=177 // pred_fallthru
              _
            // Predicated region
            $region183: #{custom-call.4} parent=177 // pred_check
              _
            $region184: #{custom-call.4} parent=177 // pred_check_branch
              %975 = sbr.rel target = $region186
            $region185: #{custom-call.4} parent=177 // pred_region
              loop: start=0, step=1, limit=1
              $region187: #{custom-call.4} parent=185 // loop_pre_header
                _
              $region188: #{custom-call.4} parent=185 // loop_header
                %s978 = sphi 0, %s982
                %p979 = scmp.ge.s32.totalorder %s978, 1
                %s983 = sphi %s943, %s943
                %s984 = sphi %s969, %s969
              $region189: #{custom-call.4} parent=185 // loop_header_branch
                %981 = sbr.rel (%p979) target = $region193
              $region190: #{custom-call.4} parent=185 // loop_body
                %v985 = vld [vmem:[%s983] sm:$0xff]
                %986 = vst [vmem:[%s984] sm:$0xff] %v985
              $region191: #{custom-call.4} parent=185 // loop_footer
                %s982 = sadd.s32 1, %s978
              $region192: #{custom-call.4} parent=185 // loop_footer_branch
                %977 = sbr.rel target = $region188
              $region193: #{custom-call.4} parent=185 // loop_exit
                _
            $region186: #{custom-call.4} parent=177 // pred_fallthru
              _
          $region178: #{custom-call.4} parent=173 // pred_fallthru
            _
          %1001 = vnop
        $region174: #{custom-call.4} parent=155 // pred_fallthru
          _
        // Predicated region
        $region209: #{custom-call.4} parent=155 // pred_check
          %p1002 = pneg %p65
        $region210: #{custom-call.4} parent=155 // pred_check_branch
          %1004 = sbr.rel (%p1002) target = $region212
        $region211: #{custom-call.4} parent=155 // pred_region
          %s1005 = sshrl.u32 %s17, 3
          %s1006 = smul.addr %s1005, 8
          %s1007 = scalar_lea.vmem %s5, %s1006
          // Predicated region
          $region213: #{custom-call.4} parent=211 // pred_check
            _
          $region214: #{custom-call.4} parent=211 // pred_check_branch
            %1009 = sbr.rel (0) target = $region216
          $region215: #{custom-call.4} parent=211 // pred_region
            // Predicated region
            $region217: #{custom-call.4} parent=215 // pred_check
              _
            $region218: #{custom-call.4} parent=215 // pred_check_branch
              %1011 = sbr.rel (0) target = $region220
            $region219: #{custom-call.4} parent=215 // pred_region
              // Predicated region
              $region232: #{custom-call.4} parent=219 // pred_check
                _
              $region233: #{custom-call.4} parent=219 // pred_check_branch
                %1026 = sbr.rel (0) target = $region235
              $region234: #{custom-call.4} parent=219 // pred_region
                loop: start=0, step=1, limit=1
                $region236: #{custom-call.4} parent=234 // loop_pre_header
                  _
                $region237: #{custom-call.4} parent=234 // loop_header
                  %s1028 = sphi 0, %s1032
                  %p1029 = scmp.ge.s32.totalorder %s1028, 1
                  %s1033 = sphi %s947, %s947
                  %s1034 = sphi %s1007, %s1007
                $region238: #{custom-call.4} parent=234 // loop_header_branch
                  %1031 = sbr.rel (%p1029) target = $region242
                $region239: #{custom-call.4} parent=234 // loop_body
                  %v1035 = vld [vmem:[%s1033] sm:$0xff]
                  %1036 = vst [vmem:[%s1034] sm:$0xff] %v1035
                $region240: #{custom-call.4} parent=234 // loop_footer
                  %s1032 = sadd.s32 1, %s1028
                $region241: #{custom-call.4} parent=234 // loop_footer_branch
                  %1027 = sbr.rel target = $region237
                $region242: #{custom-call.4} parent=234 // loop_exit
                  _
              $region235: #{custom-call.4} parent=219 // pred_fallthru
                _
              // Predicated region
              $region243: #{custom-call.4} parent=219 // pred_check
                _
              $region244: #{custom-call.4} parent=219 // pred_check_branch
                %1038 = sbr.rel target = $region246
              $region245: #{custom-call.4} parent=219 // pred_region
                _
              $region246: #{custom-call.4} parent=219 // pred_fallthru
                _
            $region220: #{custom-call.4} parent=215 // pred_fallthru
              _
            // Predicated region
            $region221: #{custom-call.4} parent=215 // pred_check
              _
            $region222: #{custom-call.4} parent=215 // pred_check_branch
              %1013 = sbr.rel target = $region224
            $region223: #{custom-call.4} parent=215 // pred_region
              loop: start=0, step=1, limit=1
              $region225: #{custom-call.4} parent=223 // loop_pre_header
                _
              $region226: #{custom-call.4} parent=223 // loop_header
                %s1016 = sphi 0, %s1020
                %p1017 = scmp.ge.s32.totalorder %s1016, 1
                %s1021 = sphi %s947, %s947
                %s1022 = sphi %s1007, %s1007
              $region227: #{custom-call.4} parent=223 // loop_header_branch
                %1019 = sbr.rel (%p1017) target = $region231
              $region228: #{custom-call.4} parent=223 // loop_body
                %v1023 = vld [vmem:[%s1021] sm:$0xff]
                %1024 = vst [vmem:[%s1022] sm:$0xff] %v1023
              $region229: #{custom-call.4} parent=223 // loop_footer
                %s1020 = sadd.s32 1, %s1016
              $region230: #{custom-call.4} parent=223 // loop_footer_branch
                %1015 = sbr.rel target = $region226
              $region231: #{custom-call.4} parent=223 // loop_exit
                _
            $region224: #{custom-call.4} parent=215 // pred_fallthru
              _
          $region216: #{custom-call.4} parent=211 // pred_fallthru
            _
          %1039 = vnop
        $region212: #{custom-call.4} parent=155 // pred_fallthru
          _
        %s1040 = smul.addr %s17, 8
        %s1041 = scalar_lea.vmem %s6, %s1040
        // Predicated region
        $region247: #{custom-call.4} parent=155 // pred_check
          _
        $region248: #{custom-call.4} parent=155 // pred_check_branch
          %1043 = sbr.rel (0) target = $region250
        $region249: #{custom-call.4} parent=155 // pred_region
          // Predicated region
          $region251: #{custom-call.4} parent=249 // pred_check
            _
          $region252: #{custom-call.4} parent=249 // pred_check_branch
            %1045 = sbr.rel (0) target = $region254
          $region253: #{custom-call.4} parent=249 // pred_region
            // Predicated region
            $region266: #{custom-call.4} parent=253 // pred_check
              _
            $region267: #{custom-call.4} parent=253 // pred_check_branch
              %1060 = sbr.rel (0) target = $region269
            $region268: #{custom-call.4} parent=253 // pred_region
              loop: start=0, step=1, limit=1
              $region270: #{custom-call.4} parent=268 // loop_pre_header
                _
              $region271: #{custom-call.4} parent=268 // loop_header
                %s1062 = sphi 0, %s1066
                %p1063 = scmp.ge.s32.totalorder %s1062, 1
                %s1067 = sphi %s951, %s951
                %s1068 = sphi %s1041, %s1041
              $region272: #{custom-call.4} parent=268 // loop_header_branch
                %1065 = sbr.rel (%p1063) target = $region276
              $region273: #{custom-call.4} parent=268 // loop_body
                %v1069 = vld [vmem:[%s1067] sm:$0xff]
                %1070 = vst [vmem:[%s1068] sm:$0xff] %v1069
              $region274: #{custom-call.4} parent=268 // loop_footer
                %s1066 = sadd.s32 1, %s1062
              $region275: #{custom-call.4} parent=268 // loop_footer_branch
                %1061 = sbr.rel target = $region271
              $region276: #{custom-call.4} parent=268 // loop_exit
                _
            $region269: #{custom-call.4} parent=253 // pred_fallthru
              _
            // Predicated region
            $region277: #{custom-call.4} parent=253 // pred_check
              _
            $region278: #{custom-call.4} parent=253 // pred_check_branch
              %1072 = sbr.rel target = $region280
            $region279: #{custom-call.4} parent=253 // pred_region
              _
            $region280: #{custom-call.4} parent=253 // pred_fallthru
              _
          $region254: #{custom-call.4} parent=249 // pred_fallthru
            _
          // Predicated region
          $region255: #{custom-call.4} parent=249 // pred_check
            _
          $region256: #{custom-call.4} parent=249 // pred_check_branch
            %1047 = sbr.rel target = $region258
          $region257: #{custom-call.4} parent=249 // pred_region
            loop: start=0, step=1, limit=1
            $region259: #{custom-call.4} parent=257 // loop_pre_header
              _
            $region260: #{custom-call.4} parent=257 // loop_header
              %s1050 = sphi 0, %s1054
              %p1051 = scmp.ge.s32.totalorder %s1050, 1
              %s1055 = sphi %s951, %s951
              %s1056 = sphi %s1041, %s1041
            $region261: #{custom-call.4} parent=257 // loop_header_branch
              %1053 = sbr.rel (%p1051) target = $region265
            $region262: #{custom-call.4} parent=257 // loop_body
              %v1057 = vld [vmem:[%s1055] sm:$0xff]
              %1058 = vst [vmem:[%s1056] sm:$0xff] %v1057
            $region263: #{custom-call.4} parent=257 // loop_footer
              %s1054 = sadd.s32 1, %s1050
            $region264: #{custom-call.4} parent=257 // loop_footer_branch
              %1049 = sbr.rel target = $region260
            $region265: #{custom-call.4} parent=257 // loop_exit
              _
          $region258: #{custom-call.4} parent=249 // pred_fallthru
            _
        $region250: #{custom-call.4} parent=155 // pred_fallthru
          _
        %1073 = vnop
        %s1074 = smul.addr %s17, 8
        %s1075 = scalar_lea.vmem %s7, %s1074
        // Predicated region
        $region281: #{custom-call.4} parent=155 // pred_check
          _
        $region282: #{custom-call.4} parent=155 // pred_check_branch
          %1077 = sbr.rel (0) target = $region284
        $region283: #{custom-call.4} parent=155 // pred_region
          // Predicated region
          $region285: #{custom-call.4} parent=283 // pred_check
            _
          $region286: #{custom-call.4} parent=283 // pred_check_branch
            %1079 = sbr.rel (0) target = $region288
          $region287: #{custom-call.4} parent=283 // pred_region
            // Predicated region
            $region300: #{custom-call.4} parent=287 // pred_check
              _
            $region301: #{custom-call.4} parent=287 // pred_check_branch
              %1094 = sbr.rel (0) target = $region303
            $region302: #{custom-call.4} parent=287 // pred_region
              loop: start=0, step=1, limit=1
              $region304: #{custom-call.4} parent=302 // loop_pre_header
                _
              $region305: #{custom-call.4} parent=302 // loop_header
                %s1096 = sphi 0, %s1100
                %p1097 = scmp.ge.s32.totalorder %s1096, 1
                %s1101 = sphi %s955, %s955
                %s1102 = sphi %s1075, %s1075
              $region306: #{custom-call.4} parent=302 // loop_header_branch
                %1099 = sbr.rel (%p1097) target = $region310
              $region307: #{custom-call.4} parent=302 // loop_body
                %v1103 = vld [vmem:[%s1101] sm:$0xff]
                %1104 = vst [vmem:[%s1102] sm:$0xff] %v1103
              $region308: #{custom-call.4} parent=302 // loop_footer
                %s1100 = sadd.s32 1, %s1096
              $region309: #{custom-call.4} parent=302 // loop_footer_branch
                %1095 = sbr.rel target = $region305
              $region310: #{custom-call.4} parent=302 // loop_exit
                _
            $region303: #{custom-call.4} parent=287 // pred_fallthru
              _
            // Predicated region
            $region311: #{custom-call.4} parent=287 // pred_check
              _
            $region312: #{custom-call.4} parent=287 // pred_check_branch
              %1106 = sbr.rel target = $region314
            $region313: #{custom-call.4} parent=287 // pred_region
              _
            $region314: #{custom-call.4} parent=287 // pred_fallthru
              _
          $region288: #{custom-call.4} parent=283 // pred_fallthru
            _
          // Predicated region
          $region289: #{custom-call.4} parent=283 // pred_check
            _
          $region290: #{custom-call.4} parent=283 // pred_check_branch
            %1081 = sbr.rel target = $region292
          $region291: #{custom-call.4} parent=283 // pred_region
            loop: start=0, step=1, limit=1
            $region293: #{custom-call.4} parent=291 // loop_pre_header
              _
            $region294: #{custom-call.4} parent=291 // loop_header
              %s1084 = sphi 0, %s1088
              %p1085 = scmp.ge.s32.totalorder %s1084, 1
              %s1089 = sphi %s955, %s955
              %s1090 = sphi %s1075, %s1075
            $region295: #{custom-call.4} parent=291 // loop_header_branch
              %1087 = sbr.rel (%p1085) target = $region299
            $region296: #{custom-call.4} parent=291 // loop_body
              %v1091 = vld [vmem:[%s1089] sm:$0xff]
              %1092 = vst [vmem:[%s1090] sm:$0xff] %v1091
            $region297: #{custom-call.4} parent=291 // loop_footer
              %s1088 = sadd.s32 1, %s1084
            $region298: #{custom-call.4} parent=291 // loop_footer_branch
              %1083 = sbr.rel target = $region294
            $region299: #{custom-call.4} parent=291 // loop_exit
              _
          $region292: #{custom-call.4} parent=283 // pred_fallthru
            _
        $region284: #{custom-call.4} parent=155 // pred_fallthru
          _
        %1107 = vnop
        %s1108 = smul.addr %s17, 8
        %s1109 = scalar_lea.vmem %s8, %s1108
        // Predicated region
        $region315: #{custom-call.4} parent=155 // pred_check
          _
        $region316: #{custom-call.4} parent=155 // pred_check_branch
          %1111 = sbr.rel (0) target = $region318
        $region317: #{custom-call.4} parent=155 // pred_region
          // Predicated region
          $region319: #{custom-call.4} parent=317 // pred_check
            _
          $region320: #{custom-call.4} parent=317 // pred_check_branch
            %1113 = sbr.rel (0) target = $region322
          $region321: #{custom-call.4} parent=317 // pred_region
            // Predicated region
            $region334: #{custom-call.4} parent=321 // pred_check
              _
            $region335: #{custom-call.4} parent=321 // pred_check_branch
              %1128 = sbr.rel (0) target = $region337
            $region336: #{custom-call.4} parent=321 // pred_region
              loop: start=0, step=1, limit=1
              $region338: #{custom-call.4} parent=336 // loop_pre_header
                _
              $region339: #{custom-call.4} parent=336 // loop_header
                %s1130 = sphi 0, %s1134
                %p1131 = scmp.ge.s32.totalorder %s1130, 1
                %s1135 = sphi %s959, %s959
                %s1136 = sphi %s1109, %s1109
              $region340: #{custom-call.4} parent=336 // loop_header_branch
                %1133 = sbr.rel (%p1131) target = $region344
              $region341: #{custom-call.4} parent=336 // loop_body
                %v1137 = vld [vmem:[%s1135] sm:$0xff]
                %1138 = vst [vmem:[%s1136] sm:$0xff] %v1137
              $region342: #{custom-call.4} parent=336 // loop_footer
                %s1134 = sadd.s32 1, %s1130
              $region343: #{custom-call.4} parent=336 // loop_footer_branch
                %1129 = sbr.rel target = $region339
              $region344: #{custom-call.4} parent=336 // loop_exit
                _
            $region337: #{custom-call.4} parent=321 // pred_fallthru
              _
            // Predicated region
            $region345: #{custom-call.4} parent=321 // pred_check
              _
            $region346: #{custom-call.4} parent=321 // pred_check_branch
              %1140 = sbr.rel target = $region348
            $region347: #{custom-call.4} parent=321 // pred_region
              _
            $region348: #{custom-call.4} parent=321 // pred_fallthru
              _
          $region322: #{custom-call.4} parent=317 // pred_fallthru
            _
          // Predicated region
          $region323: #{custom-call.4} parent=317 // pred_check
            _
          $region324: #{custom-call.4} parent=317 // pred_check_branch
            %1115 = sbr.rel target = $region326
          $region325: #{custom-call.4} parent=317 // pred_region
            loop: start=0, step=1, limit=1
            $region327: #{custom-call.4} parent=325 // loop_pre_header
              _
            $region328: #{custom-call.4} parent=325 // loop_header
              %s1118 = sphi 0, %s1122
              %p1119 = scmp.ge.s32.totalorder %s1118, 1
              %s1123 = sphi %s959, %s959
              %s1124 = sphi %s1109, %s1109
            $region329: #{custom-call.4} parent=325 // loop_header_branch
              %1121 = sbr.rel (%p1119) target = $region333
            $region330: #{custom-call.4} parent=325 // loop_body
              %v1125 = vld [vmem:[%s1123] sm:$0xff]
              %1126 = vst [vmem:[%s1124] sm:$0xff] %v1125
            $region331: #{custom-call.4} parent=325 // loop_footer
              %s1122 = sadd.s32 1, %s1118
            $region332: #{custom-call.4} parent=325 // loop_footer_branch
              %1117 = sbr.rel target = $region328
            $region333: #{custom-call.4} parent=325 // loop_exit
              _
          $region326: #{custom-call.4} parent=317 // pred_fallthru
            _
        $region318: #{custom-call.4} parent=155 // pred_fallthru
          _
        %1141 = vnop
        %s1142 = smul.addr %s17, 8
        %s1143 = scalar_lea.vmem %s9, %s1142
        // Predicated region
        $region349: #{custom-call.4} parent=155 // pred_check
          _
        $region350: #{custom-call.4} parent=155 // pred_check_branch
          %1145 = sbr.rel (0) target = $region352
        $region351: #{custom-call.4} parent=155 // pred_region
          // Predicated region
          $region353: #{custom-call.4} parent=351 // pred_check
            _
          $region354: #{custom-call.4} parent=351 // pred_check_branch
            %1147 = sbr.rel (0) target = $region356
          $region355: #{custom-call.4} parent=351 // pred_region
            // Predicated region
            $region368: #{custom-call.4} parent=355 // pred_check
              _
            $region369: #{custom-call.4} parent=355 // pred_check_branch
              %1162 = sbr.rel (0) target = $region371
            $region370: #{custom-call.4} parent=355 // pred_region
              loop: start=0, step=1, limit=1
              $region372: #{custom-call.4} parent=370 // loop_pre_header
                _
              $region373: #{custom-call.4} parent=370 // loop_header
                %s1164 = sphi 0, %s1168
                %p1165 = scmp.ge.s32.totalorder %s1164, 1
                %s1169 = sphi %s963, %s963
                %s1170 = sphi %s1143, %s1143
              $region374: #{custom-call.4} parent=370 // loop_header_branch
                %1167 = sbr.rel (%p1165) target = $region378
              $region375: #{custom-call.4} parent=370 // loop_body
                %v1171 = vld [vmem:[%s1169] sm:$0xff]
                %1172 = vst [vmem:[%s1170] sm:$0xff] %v1171
              $region376: #{custom-call.4} parent=370 // loop_footer
                %s1168 = sadd.s32 1, %s1164
              $region377: #{custom-call.4} parent=370 // loop_footer_branch
                %1163 = sbr.rel target = $region373
              $region378: #{custom-call.4} parent=370 // loop_exit
                _
            $region371: #{custom-call.4} parent=355 // pred_fallthru
              _
            // Predicated region
            $region379: #{custom-call.4} parent=355 // pred_check
              _
            $region380: #{custom-call.4} parent=355 // pred_check_branch
              %1174 = sbr.rel target = $region382
            $region381: #{custom-call.4} parent=355 // pred_region
              _
            $region382: #{custom-call.4} parent=355 // pred_fallthru
              _
          $region356: #{custom-call.4} parent=351 // pred_fallthru
            _
          // Predicated region
          $region357: #{custom-call.4} parent=351 // pred_check
            _
          $region358: #{custom-call.4} parent=351 // pred_check_branch
            %1149 = sbr.rel target = $region360
          $region359: #{custom-call.4} parent=351 // pred_region
            loop: start=0, step=1, limit=1
            $region361: #{custom-call.4} parent=359 // loop_pre_header
              _
            $region362: #{custom-call.4} parent=359 // loop_header
              %s1152 = sphi 0, %s1156
              %p1153 = scmp.ge.s32.totalorder %s1152, 1
              %s1157 = sphi %s963, %s963
              %s1158 = sphi %s1143, %s1143
            $region363: #{custom-call.4} parent=359 // loop_header_branch
              %1155 = sbr.rel (%p1153) target = $region367
            $region364: #{custom-call.4} parent=359 // loop_body
              %v1159 = vld [vmem:[%s1157] sm:$0xff]
              %1160 = vst [vmem:[%s1158] sm:$0xff] %v1159
            $region365: #{custom-call.4} parent=359 // loop_footer
              %s1156 = sadd.s32 1, %s1152
            $region366: #{custom-call.4} parent=359 // loop_footer_branch
              %1151 = sbr.rel target = $region362
            $region367: #{custom-call.4} parent=359 // loop_exit
              _
          $region360: #{custom-call.4} parent=351 // pred_fallthru
            _
        $region352: #{custom-call.4} parent=155 // pred_fallthru
          _
        %1175 = vnop
      $region156: #{custom-call.4} parent=5 // pred_fallthru
        _
      %p1176 = scmp.le.s32.totalorder 2, %s12
      // Predicated region
      $region383: #{custom-call.4} parent=5 // pred_check
        %p1177 = pneg %p1176
      $region384: #{custom-call.4} parent=5 // pred_check_branch
        %1179 = sbr.rel (%p1177) target = $region386
      $region385: #{custom-call.4} parent=5 // pred_region
        %s1180 = ssub.s32 %s12, 2
        // Predicated region
        $region387: #{custom-call.4} parent=385 // pred_check
          %p1181 = pneg %p43
        $region388: #{custom-call.4} parent=385 // pred_check_branch
          %1183 = sbr.rel (%p1181) target = $region390
        $region389: #{custom-call.4} parent=385 // pred_region
          %s1184 = sand.u32 %s28, 1
          %s1185 = sand.u32 %s28, 1
          %s1186 = smul.addr %s1185, 8
          %s1187 = scalar_lea.vmem [#allocation4], %s1186
        $region390: #{custom-call.4} parent=385 // pred_fallthru
          _
        // Predicated region
        $region391: #{custom-call.4} parent=385 // pred_check
          %p1188 = pneg %p71
        $region392: #{custom-call.4} parent=385 // pred_check_branch
          %1190 = sbr.rel (%p1188) target = $region394
        $region393: #{custom-call.4} parent=385 // pred_region
          %s1191 = sand.u32 %s56, 1
          %s1192 = sand.u32 %s56, 1
          %s1193 = smul.addr %s1192, 8
          %s1194 = scalar_lea.vmem [#allocation5], %s1193
        $region394: #{custom-call.4} parent=385 // pred_fallthru
          _
        %s1195 = sand.u32 %s18, 1
        %s1196 = sand.u32 %s18, 1
        %s1197 = smul.addr %s1196, 8
        %s1198 = scalar_lea.vmem [#allocation6], %s1197
        %s1199 = sand.u32 %s18, 1
        %s1200 = sand.u32 %s18, 1
        %s1201 = smul.addr %s1200, 8
        %s1202 = scalar_lea.vmem [#allocation7], %s1201
        %s1203 = sand.u32 %s18, 1
        %s1204 = sand.u32 %s18, 1
        %s1205 = smul.addr %s1204, 8
        %s1206 = scalar_lea.vmem [#allocation8], %s1205
        %s1207 = sand.u32 %s18, 1
        %s1208 = sand.u32 %s18, 1
        %s1209 = smul.addr %s1208, 8
        %s1210 = scalar_lea.vmem [#allocation9], %s1209
      $region386: #{custom-call.4} parent=5 // pred_fallthru
        _
    $region6: #{custom-call.4} parent=1 // loop_footer
      %s16 = sadd.s32 1, %s12
    $region7: #{custom-call.4} parent=1 // loop_footer_branch
      %11 = sbr.rel target = $region3
    $region8: #{custom-call.4} parent=1 // loop_exit
      _

// kernel: a_call__.3
$region0: #{a_call__.3}
  #allocation0 [shape = 'u32[]', space=smem, size = 0x4, offset = 0x4, fixed_abs, tag = 'smem constant byte address 0x4 - core index']
  #allocation1 [shape = 'u32[144,128]{1,0:T(1,128)}', space=vmem, size = 0x12000, scoped, tag = 'internal scratch']
  %s0 = inlined_call_operand.vmem [shape: f32[16,16], index: 0, kind: input, shape index: {}]
  %s1 = inlined_call_operand.vmem [shape: f32[8,16,16], index: 1, kind: input, shape index: {}]
  %s2 = inlined_call_operand.vmem [shape: f32[8,16,16], index: 2, kind: output, shape index: {}]
  %s3 = sld [smem:[#allocation0]]
  $region18: #{a_call__.3} parent=0
    _
  %s5 = ssub.s32 1, %s3
  %s6 = scalar_select 0, %s5, %s3
  // Predicated region
  $region2: #{a_call__.3} parent=0 // pred_check
    _
  $region3: #{a_call__.3} parent=0 // pred_check_branch
    %8 = sbr.rel (0) target = $region5
  $region4: #{a_call__.3} parent=0 // pred_region
    _
  $region5: #{a_call__.3} parent=0 // pred_fallthru
    _
  // Predicated region
  $region6: #{a_call__.3} parent=0 // pred_check
    _
  $region7: #{a_call__.3} parent=0 // pred_check_branch
    %10 = sbr.rel (0) target = $region9
  $region8: #{a_call__.3} parent=0 // pred_region
    _
  $region9: #{a_call__.3} parent=0 // pred_fallthru
    _
  %v11 = vld [vmem:[%s0] sm:$0xff]
  %v12 = vld [vmem:[%s0 + $0x8] sm:$0xff]
  %v13 = vld [vmem:[%s1] sm:$0xff]
  %v14 = vld [vmem:[%s1 + $0x8] sm:$0xff]
  %v15 = vld [vmem:[%s1 + $0x10] sm:$0xff]
  %v16 = vld [vmem:[%s1 + $0x18] sm:$0xff]
  %v17 = vld [vmem:[%s1 + $0x20] sm:$0xff]
  %v18 = vld [vmem:[%s1 + $0x28] sm:$0xff]
  %v19 = vld [vmem:[%s1 + $0x30] sm:$0xff]
  %v20 = vld [vmem:[%s1 + $0x38] sm:$0xff]
  %v21 = vld [vmem:[%s1 + $0x40] sm:$0xff]
  %v22 = vld [vmem:[%s1 + $0x48] sm:$0xff]
  %v23 = vld [vmem:[%s1 + $0x50] sm:$0xff]
  %v24 = vld [vmem:[%s1 + $0x58] sm:$0xff]
  %v25 = vld [vmem:[%s1 + $0x60] sm:$0xff]
  %v26 = vld [vmem:[%s1 + $0x68] sm:$0xff]
  %v27 = vld [vmem:[%s1 + $0x70] sm:$0xff]
  %v28 = vld [vmem:[%s1 + $0x78] sm:$0xff]
  %vm29 = vcmask 130048
  %v31 = vsel %vm29, %v13, 0
  %v34 = vsel %vm29, %v14, 0
  %36 = vmatprep.subr.mxu0 0.0
  %37 = vmatpush1.msra.mxu0 %v11
  %38 = vmatprep.subr.mxu0 0.0
  %39 = vmatpush1.msra.mxu0 %v12
  %40 = vmatprep.subr.mxu0 0.0
  %41 = vmatpush1.msra.mxu0 0.0
  %42 = vmatprep.subr.mxu0 0.0
  %43 = vmatpush1.msra.mxu0 0.0
  %44 = vmatprep.subr.mxu0 0.0
  %45 = vmatpush1.msra.mxu0 0.0
  %46 = vmatprep.subr.mxu0 0.0
  %47 = vmatpush1.msra.mxu0 0.0
  %48 = vmatprep.subr.mxu0 0.0
  %49 = vmatpush1.msra.mxu0 0.0
  %50 = vmatprep.subr.mxu0 0.0
  %51 = vmatpush1.msra.mxu0 0.0
  %52 = vmatprep.subr.mxu0 0.0
  %53 = vmatpush1.msra.mxu0 0.0
  %54 = vmatprep.subr.mxu0 0.0
  %55 = vmatpush1.msra.mxu0 0.0
  %56 = vmatprep.subr.mxu0 0.0
  %57 = vmatpush1.msra.mxu0 0.0
  %58 = vmatprep.subr.mxu0 0.0
  %59 = vmatpush1.msra.mxu0 0.0
  %60 = vmatprep.subr.mxu0 0.0
  %61 = vmatpush1.msra.mxu0 0.0
  %62 = vmatprep.subr.mxu0 0.0
  %63 = vmatpush1.msra.mxu0 0.0
  %64 = vmatprep.subr.mxu0 0.0
  %65 = vmatpush1.msra.mxu0 0.0
  %66 = vmatprep.subr.mxu0 0.0
  %67 = vmatpush1.msra.mxu0 0.0
  %68 = vmatprep.subr.mxu0 0.0
  %69 = vmatpush1.msra.mxu0 0.0
  %70 = vmatprep.subr.mxu0 0.0
  %71 = vmatpush1.msra.mxu0 0.0
  %72 = vmatprep.subr.mxu0 0.0
  %73 = vmatpush1.msra.mxu0 0.0
  %74 = vmatprep.subr.mxu0 0.0
  %75 = vmatpush1.msra.mxu0 0.0
  %76 = vmatprep.subr.mxu0 0.0
  %77 = vmatpush1.msra.mxu0 0.0
  %78 = vmatprep.subr.mxu0 0.0
  %79 = vmatpush1.msra.mxu0 0.0
  %80 = vmatprep.subr.mxu0 0.0
  %81 = vmatpush1.msra.mxu0 0.0
  %82 = vmatprep.subr.mxu0 0.0
  %83 = vmatpush1.msra.mxu0 0.0
  %84 = vmatprep.subr.mxu0 0.0
  %85 = vmatpush1.msra.mxu0 0.0
  %86 = vmatprep.subr.mxu0 0.0
  %87 = vmatpush1.msra.mxu0 0.0
  %88 = vmatprep.subr.mxu0 0.0
  %89 = vmatpush1.msra.mxu0 0.0
  %90 = vmatprep.subr.mxu0 0.0
  %91 = vmatpush1.msra.mxu0 0.0
  %92 = vmatprep.subr.mxu0 0.0
  %93 = vmatpush1.msra.mxu0 0.0
  %94 = vmatprep.subr.mxu0 0.0
  %95 = vmatpush1.msra.mxu0 0.0
  %96 = vmatprep.subr.mxu0 0.0
  %97 = vmatpush1.msra.mxu0 0.0
  %98 = vmatprep.subr.mxu0 0.0
  %99 = vmatpush1.msra.mxu0 0.0
  %100 = vmatprep.mubr.f32.mxu0 0.0
  %101 = vmatmul.mubr.f32.gmra.mrb[0].mxu0 %v31
  %v102 = vpop.f32.mrb[0].mxu0
  %v103 = vadd.f32 0.0, %v102
  %v104 = vpop.f32.mrb[0].mxu0
  %105 = vmatprep.mubr.f32.mxu0 0.0
  %106 = vmatmul.mubr.f32.gmra.mrb[0].mxu0 %v34
  %v107 = vpop.f32.mrb[0].mxu0
  %v108 = vadd.f32 0.0, %v107
  %v109 = vpop.f32.mrb[0].mxu0
  %110 = vdwg.mxu0
  %v112 = vsel %vm29, %v15, 0
  %v115 = vsel %vm29, %v16, 0
  %117 = vmatprep.subr.mxu0 0.0
  %118 = vmatpush1.msra.mxu0 %v11
  %119 = vmatprep.subr.mxu0 0.0
  %120 = vmatpush1.msra.mxu0 %v12
  %121 = vmatprep.subr.mxu0 0.0
  %122 = vmatpush1.msra.mxu0 0.0
  %123 = vmatprep.subr.mxu0 0.0
  %124 = vmatpush1.msra.mxu0 0.0
  %125 = vmatprep.subr.mxu0 0.0
  %126 = vmatpush1.msra.mxu0 0.0
  %127 = vmatprep.subr.mxu0 0.0
  %128 = vmatpush1.msra.mxu0 0.0
  %129 = vmatprep.subr.mxu0 0.0
  %130 = vmatpush1.msra.mxu0 0.0
  %131 = vmatprep.subr.mxu0 0.0
  %132 = vmatpush1.msra.mxu0 0.0
  %133 = vmatprep.subr.mxu0 0.0
  %134 = vmatpush1.msra.mxu0 0.0
  %135 = vmatprep.subr.mxu0 0.0
  %136 = vmatpush1.msra.mxu0 0.0
  %137 = vmatprep.subr.mxu0 0.0
  %138 = vmatpush1.msra.mxu0 0.0
  %139 = vmatprep.subr.mxu0 0.0
  %140 = vmatpush1.msra.mxu0 0.0
  %141 = vmatprep.subr.mxu0 0.0
  %142 = vmatpush1.msra.mxu0 0.0
  %143 = vmatprep.subr.mxu0 0.0
  %144 = vmatpush1.msra.mxu0 0.0
  %145 = vmatprep.subr.mxu0 0.0
  %146 = vmatpush1.msra.mxu0 0.0
  %147 = vmatprep.subr.mxu0 0.0
  %148 = vmatpush1.msra.mxu0 0.0
  %149 = vmatprep.subr.mxu0 0.0
  %150 = vmatpush1.msra.mxu0 0.0
  %151 = vmatprep.subr.mxu0 0.0
  %152 = vmatpush1.msra.mxu0 0.0
  %153 = vmatprep.subr.mxu0 0.0
  %154 = vmatpush1.msra.mxu0 0.0
  %155 = vmatprep.subr.mxu0 0.0
  %156 = vmatpush1.msra.mxu0 0.0
  %157 = vmatprep.subr.mxu0 0.0
  %158 = vmatpush1.msra.mxu0 0.0
  %159 = vmatprep.subr.mxu0 0.0
  %160 = vmatpush1.msra.mxu0 0.0
  %161 = vmatprep.subr.mxu0 0.0
  %162 = vmatpush1.msra.mxu0 0.0
  %163 = vmatprep.subr.mxu0 0.0
  %164 = vmatpush1.msra.mxu0 0.0
  %165 = vmatprep.subr.mxu0 0.0
  %166 = vmatpush1.msra.mxu0 0.0
  %167 = vmatprep.subr.mxu0 0.0
  %168 = vmatpush1.msra.mxu0 0.0
  %169 = vmatprep.subr.mxu0 0.0
  %170 = vmatpush1.msra.mxu0 0.0
  %171 = vmatprep.subr.mxu0 0.0
  %172 = vmatpush1.msra.mxu0 0.0
  %173 = vmatprep.subr.mxu0 0.0
  %174 = vmatpush1.msra.mxu0 0.0
  %175 = vmatprep.subr.mxu0 0.0
  %176 = vmatpush1.msra.mxu0 0.0
  %177 = vmatprep.subr.mxu0 0.0
  %178 = vmatpush1.msra.mxu0 0.0
  %179 = vmatprep.subr.mxu0 0.0
  %180 = vmatpush1.msra.mxu0 0.0
  %181 = vmatprep.mubr.f32.mxu0 0.0
  %182 = vmatmul.mubr.f32.gmra.mrb[0].mxu0 %v112
  %v183 = vpop.f32.mrb[0].mxu0
  %v184 = vadd.f32 0.0, %v183
  %v185 = vpop.f32.mrb[0].mxu0
  %186 = vmatprep.mubr.f32.mxu0 0.0
  %187 = vmatmul.mubr.f32.gmra.mrb[0].mxu0 %v115
  %v188 = vpop.f32.mrb[0].mxu0
  %v189 = vadd.f32 0.0, %v188
  %v190 = vpop.f32.mrb[0].mxu0
  %191 = vdwg.mxu0
  %v193 = vsel %vm29, %v17, 0
  %v196 = vsel %vm29, %v18, 0
  %198 = vmatprep.subr.mxu0 0.0
  %199 = vmatpush1.msra.mxu0 %v11
  %200 = vmatprep.subr.mxu0 0.0
  %201 = vmatpush1.msra.mxu0 %v12
  %202 = vmatprep.subr.mxu0 0.0
  %203 = vmatpush1.msra.mxu0 0.0
  %204 = vmatprep.subr.mxu0 0.0
  %205 = vmatpush1.msra.mxu0 0.0
  %206 = vmatprep.subr.mxu0 0.0
  %207 = vmatpush1.msra.mxu0 0.0
  %208 = vmatprep.subr.mxu0 0.0
  %209 = vmatpush1.msra.mxu0 0.0
  %210 = vmatprep.subr.mxu0 0.0
  %211 = vmatpush1.msra.mxu0 0.0
  %212 = vmatprep.subr.mxu0 0.0
  %213 = vmatpush1.msra.mxu0 0.0
  %214 = vmatprep.subr.mxu0 0.0
  %215 = vmatpush1.msra.mxu0 0.0
  %216 = vmatprep.subr.mxu0 0.0
  %217 = vmatpush1.msra.mxu0 0.0
  %218 = vmatprep.subr.mxu0 0.0
  %219 = vmatpush1.msra.mxu0 0.0
  %220 = vmatprep.subr.mxu0 0.0
  %221 = vmatpush1.msra.mxu0 0.0
  %222 = vmatprep.subr.mxu0 0.0
  %223 = vmatpush1.msra.mxu0 0.0
  %224 = vmatprep.subr.mxu0 0.0
  %225 = vmatpush1.msra.mxu0 0.0
  %226 = vmatprep.subr.mxu0 0.0
  %227 = vmatpush1.msra.mxu0 0.0
  %228 = vmatprep.subr.mxu0 0.0
  %229 = vmatpush1.msra.mxu0 0.0
  %230 = vmatprep.subr.mxu0 0.0
  %231 = vmatpush1.msra.mxu0 0.0
  %232 = vmatprep.subr.mxu0 0.0
  %233 = vmatpush1.msra.mxu0 0.0
  %234 = vmatprep.subr.mxu0 0.0
  %235 = vmatpush1.msra.mxu0 0.0
  %236 = vmatprep.subr.mxu0 0.0
  %237 = vmatpush1.msra.mxu0 0.0
  %238 = vmatprep.subr.mxu0 0.0
  %239 = vmatpush1.msra.mxu0 0.0
  %240 = vmatprep.subr.mxu0 0.0
  %241 = vmatpush1.msra.mxu0 0.0
  %242 = vmatprep.subr.mxu0 0.0
  %243 = vmatpush1.msra.mxu0 0.0
  %244 = vmatprep.subr.mxu0 0.0
  %245 = vmatpush1.msra.mxu0 0.0
  %246 = vmatprep.subr.mxu0 0.0
  %247 = vmatpush1.msra.mxu0 0.0
  %248 = vmatprep.subr.mxu0 0.0
  %249 = vmatpush1.msra.mxu0 0.0
  %250 = vmatprep.subr.mxu0 0.0
  %251 = vmatpush1.msra.mxu0 0.0
  %252 = vmatprep.subr.mxu0 0.0
  %253 = vmatpush1.msra.mxu0 0.0
  %254 = vmatprep.subr.mxu0 0.0
  %255 = vmatpush1.msra.mxu0 0.0
  %256 = vmatprep.subr.mxu0 0.0
  %257 = vmatpush1.msra.mxu0 0.0
  %258 = vmatprep.subr.mxu0 0.0
  %259 = vmatpush1.msra.mxu0 0.0
  %260 = vmatprep.subr.mxu0 0.0
  %261 = vmatpush1.msra.mxu0 0.0
  %262 = vmatprep.mubr.f32.mxu0 0.0
  %263 = vmatmul.mubr.f32.gmra.mrb[0].mxu0 %v193
  %v264 = vpop.f32.mrb[0].mxu0
  %v265 = vadd.f32 0.0, %v264
  %v266 = vpop.f32.mrb[0].mxu0
  %267 = vmatprep.mubr.f32.mxu0 0.0
  %268 = vmatmul.mubr.f32.gmra.mrb[0].mxu0 %v196
  %v269 = vpop.f32.mrb[0].mxu0
  %v270 = vadd.f32 0.0, %v269
  %v271 = vpop.f32.mrb[0].mxu0
  %272 = vdwg.mxu0
  %v274 = vsel %vm29, %v19, 0
  %v277 = vsel %vm29, %v20, 0
  %279 = vmatprep.subr.mxu0 0.0
  %280 = vmatpush1.msra.mxu0 %v11
  %281 = vmatprep.subr.mxu0 0.0
  %282 = vmatpush1.msra.mxu0 %v12
  %283 = vmatprep.subr.mxu0 0.0
  %284 = vmatpush1.msra.mxu0 0.0
  %285 = vmatprep.subr.mxu0 0.0
  %286 = vmatpush1.msra.mxu0 0.0
  %287 = vmatprep.subr.mxu0 0.0
  %288 = vmatpush1.msra.mxu0 0.0
  %289 = vmatprep.subr.mxu0 0.0
  %290 = vmatpush1.msra.mxu0 0.0
  %291 = vmatprep.subr.mxu0 0.0
  %292 = vmatpush1.msra.mxu0 0.0
  %293 = vmatprep.subr.mxu0 0.0
  %294 = vmatpush1.msra.mxu0 0.0
  %295 = vmatprep.subr.mxu0 0.0
  %296 = vmatpush1.msra.mxu0 0.0
  %297 = vmatprep.subr.mxu0 0.0
  %298 = vmatpush1.msra.mxu0 0.0
  %299 = vmatprep.subr.mxu0 0.0
  %300 = vmatpush1.msra.mxu0 0.0
  %301 = vmatprep.subr.mxu0 0.0
  %302 = vmatpush1.msra.mxu0 0.0
  %303 = vmatprep.subr.mxu0 0.0
  %304 = vmatpush1.msra.mxu0 0.0
  %305 = vmatprep.subr.mxu0 0.0
  %306 = vmatpush1.msra.mxu0 0.0
  %307 = vmatprep.subr.mxu0 0.0
  %308 = vmatpush1.msra.mxu0 0.0
  %309 = vmatprep.subr.mxu0 0.0
  %310 = vmatpush1.msra.mxu0 0.0
  %311 = vmatprep.subr.mxu0 0.0
  %312 = vmatpush1.msra.mxu0 0.0
  %313 = vmatprep.subr.mxu0 0.0
  %314 = vmatpush1.msra.mxu0 0.0
  %315 = vmatprep.subr.mxu0 0.0
  %316 = vmatpush1.msra.mxu0 0.0
  %317 = vmatprep.subr.mxu0 0.0
  %318 = vmatpush1.msra.mxu0 0.0
  %319 = vmatprep.subr.mxu0 0.0
  %320 = vmatpush1.msra.mxu0 0.0
  %321 = vmatprep.subr.mxu0 0.0
  %322 = vmatpush1.msra.mxu0 0.0
  %323 = vmatprep.subr.mxu0 0.0
  %324 = vmatpush1.msra.mxu0 0.0
  %325 = vmatprep.subr.mxu0 0.0
  %326 = vmatpush1.msra.mxu0 0.0
  %327 = vmatprep.subr.mxu0 0.0
  %328 = vmatpush1.msra.mxu0 0.0
  %329 = vmatprep.subr.mxu0 0.0
  %330 = vmatpush1.msra.mxu0 0.0
  %331 = vmatprep.subr.mxu0 0.0
  %332 = vmatpush1.msra.mxu0 0.0
  %333 = vmatprep.subr.mxu0 0.0
  %334 = vmatpush1.msra.mxu0 0.0
  %335 = vmatprep.subr.mxu0 0.0
  %336 = vmatpush1.msra.mxu0 0.0
  %337 = vmatprep.subr.mxu0 0.0
  %338 = vmatpush1.msra.mxu0 0.0
  %339 = vmatprep.subr.mxu0 0.0
  %340 = vmatpush1.msra.mxu0 0.0
  %341 = vmatprep.subr.mxu0 0.0
  %342 = vmatpush1.msra.mxu0 0.0
  %343 = vmatprep.mubr.f32.mxu0 0.0
  %344 = vmatmul.mubr.f32.gmra.mrb[0].mxu0 %v274
  %v345 = vpop.f32.mrb[0].mxu0
  %v346 = vadd.f32 0.0, %v345
  %v347 = vpop.f32.mrb[0].mxu0
  %348 = vmatprep.mubr.f32.mxu0 0.0
  %349 = vmatmul.mubr.f32.gmra.mrb[0].mxu0 %v277
  %v350 = vpop.f32.mrb[0].mxu0
  %v351 = vadd.f32 0.0, %v350
  %v352 = vpop.f32.mrb[0].mxu0
  %353 = vdwg.mxu0
  %v355 = vsel %vm29, %v21, 0
  %v358 = vsel %vm29, %v22, 0
  %360 = vmatprep.subr.mxu0 0.0
  %361 = vmatpush1.msra.mxu0 %v11
  %362 = vmatprep.subr.mxu0 0.0
  %363 = vmatpush1.msra.mxu0 %v12
  %364 = vmatprep.subr.mxu0 0.0
  %365 = vmatpush1.msra.mxu0 0.0
  %366 = vmatprep.subr.mxu0 0.0
  %367 = vmatpush1.msra.mxu0 0.0
  %368 = vmatprep.subr.mxu0 0.0
  %369 = vmatpush1.msra.mxu0 0.0
  %370 = vmatprep.subr.mxu0 0.0
  %371 = vmatpush1.msra.mxu0 0.0
  %372 = vmatprep.subr.mxu0 0.0
  %373 = vmatpush1.msra.mxu0 0.0
  %374 = vmatprep.subr.mxu0 0.0
  %375 = vmatpush1.msra.mxu0 0.0
  %376 = vmatprep.subr.mxu0 0.0
  %377 = vmatpush1.msra.mxu0 0.0
  %378 = vmatprep.subr.mxu0 0.0
  %379 = vmatpush1.msra.mxu0 0.0
  %380 = vmatprep.subr.mxu0 0.0
  %381 = vmatpush1.msra.mxu0 0.0
  %382 = vmatprep.subr.mxu0 0.0
  %383 = vmatpush1.msra.mxu0 0.0
  %384 = vmatprep.subr.mxu0 0.0
  %385 = vmatpush1.msra.mxu0 0.0
  %386 = vmatprep.subr.mxu0 0.0
  %387 = vmatpush1.msra.mxu0 0.0
  %388 = vmatprep.subr.mxu0 0.0
  %389 = vmatpush1.msra.mxu0 0.0
  %390 = vmatprep.subr.mxu0 0.0
  %391 = vmatpush1.msra.mxu0 0.0
  %392 = vmatprep.subr.mxu0 0.0
  %393 = vmatpush1.msra.mxu0 0.0
  %394 = vmatprep.subr.mxu0 0.0
  %395 = vmatpush1.msra.mxu0 0.0
  %396 = vmatprep.subr.mxu0 0.0
  %397 = vmatpush1.msra.mxu0 0.0
  %398 = vmatprep.subr.mxu0 0.0
  %399 = vmatpush1.msra.mxu0 0.0
  %400 = vmatprep.subr.mxu0 0.0
  %401 = vmatpush1.msra.mxu0 0.0
  %402 = vmatprep.subr.mxu0 0.0
  %403 = vmatpush1.msra.mxu0 0.0
  %404 = vmatprep.subr.mxu0 0.0
  %405 = vmatpush1.msra.mxu0 0.0
  %406 = vmatprep.subr.mxu0 0.0
  %407 = vmatpush1.msra.mxu0 0.0
  %408 = vmatprep.subr.mxu0 0.0
  %409 = vmatpush1.msra.mxu0 0.0
  %410 = vmatprep.subr.mxu0 0.0
  %411 = vmatpush1.msra.mxu0 0.0
  %412 = vmatprep.subr.mxu0 0.0
  %413 = vmatpush1.msra.mxu0 0.0
  %414 = vmatprep.subr.mxu0 0.0
  %415 = vmatpush1.msra.mxu0 0.0
  %416 = vmatprep.subr.mxu0 0.0
  %417 = vmatpush1.msra.mxu0 0.0
  %418 = vmatprep.subr.mxu0 0.0
  %419 = vmatpush1.msra.mxu0 0.0
  %420 = vmatprep.subr.mxu0 0.0
  %421 = vmatpush1.msra.mxu0 0.0
  %422 = vmatprep.subr.mxu0 0.0
  %423 = vmatpush1.msra.mxu0 0.0
  %424 = vmatprep.mubr.f32.mxu0 0.0
  %425 = vmatmul.mubr.f32.gmra.mrb[0].mxu0 %v355
  %v426 = vpop.f32.mrb[0].mxu0
  %v427 = vadd.f32 0.0, %v426
  %v428 = vpop.f32.mrb[0].mxu0
  %429 = vmatprep.mubr.f32.mxu0 0.0
  %430 = vmatmul.mubr.f32.gmra.mrb[0].mxu0 %v358
  %v431 = vpop.f32.mrb[0].mxu0
  %v432 = vadd.f32 0.0, %v431
  %v433 = vpop.f32.mrb[0].mxu0
  %434 = vdwg.mxu0
  %v436 = vsel %vm29, %v23, 0
  %v439 = vsel %vm29, %v24, 0
  %441 = vmatprep.subr.mxu0 0.0
  %442 = vmatpush1.msra.mxu0 %v11
  %443 = vmatprep.subr.mxu0 0.0
  %444 = vmatpush1.msra.mxu0 %v12
  %445 = vmatprep.subr.mxu0 0.0
  %446 = vmatpush1.msra.mxu0 0.0
  %447 = vmatprep.subr.mxu0 0.0
  %448 = vmatpush1.msra.mxu0 0.0
  %449 = vmatprep.subr.mxu0 0.0
  %450 = vmatpush1.msra.mxu0 0.0
  %451 = vmatprep.subr.mxu0 0.0
  %452 = vmatpush1.msra.mxu0 0.0
  %453 = vmatprep.subr.mxu0 0.0
  %454 = vmatpush1.msra.mxu0 0.0
  %455 = vmatprep.subr.mxu0 0.0
  %456 = vmatpush1.msra.mxu0 0.0
  %457 = vmatprep.subr.mxu0 0.0
  %458 = vmatpush1.msra.mxu0 0.0
  %459 = vmatprep.subr.mxu0 0.0
  %460 = vmatpush1.msra.mxu0 0.0
  %461 = vmatprep.subr.mxu0 0.0
  %462 = vmatpush1.msra.mxu0 0.0
  %463 = vmatprep.subr.mxu0 0.0
  %464 = vmatpush1.msra.mxu0 0.0
  %465 = vmatprep.subr.mxu0 0.0
  %466 = vmatpush1.msra.mxu0 0.0
  %467 = vmatprep.subr.mxu0 0.0
  %468 = vmatpush1.msra.mxu0 0.0
  %469 = vmatprep.subr.mxu0 0.0
  %470 = vmatpush1.msra.mxu0 0.0
  %471 = vmatprep.subr.mxu0 0.0
  %472 = vmatpush1.msra.mxu0 0.0
  %473 = vmatprep.subr.mxu0 0.0
  %474 = vmatpush1.msra.mxu0 0.0
  %475 = vmatprep.subr.mxu0 0.0
  %476 = vmatpush1.msra.mxu0 0.0
  %477 = vmatprep.subr.mxu0 0.0
  %478 = vmatpush1.msra.mxu0 0.0
  %479 = vmatprep.subr.mxu0 0.0
  %480 = vmatpush1.msra.mxu0 0.0
  %481 = vmatprep.subr.mxu0 0.0
  %482 = vmatpush1.msra.mxu0 0.0
  %483 = vmatprep.subr.mxu0 0.0
  %484 = vmatpush1.msra.mxu0 0.0
  %485 = vmatprep.subr.mxu0 0.0
  %486 = vmatpush1.msra.mxu0 0.0
  %487 = vmatprep.subr.mxu0 0.0
  %488 = vmatpush1.msra.mxu0 0.0
  %489 = vmatprep.subr.mxu0 0.0
  %490 = vmatpush1.msra.mxu0 0.0
  %491 = vmatprep.subr.mxu0 0.0
  %492 = vmatpush1.msra.mxu0 0.0
  %493 = vmatprep.subr.mxu0 0.0
  %494 = vmatpush1.msra.mxu0 0.0
  %495 = vmatprep.subr.mxu0 0.0
  %496 = vmatpush1.msra.mxu0 0.0
  %497 = vmatprep.subr.mxu0 0.0
  %498 = vmatpush1.msra.mxu0 0.0
  %499 = vmatprep.subr.mxu0 0.0
  %500 = vmatpush1.msra.mxu0 0.0
  %501 = vmatprep.subr.mxu0 0.0
  %502 = vmatpush1.msra.mxu0 0.0
  %503 = vmatprep.subr.mxu0 0.0
  %504 = vmatpush1.msra.mxu0 0.0
  %505 = vmatprep.mubr.f32.mxu0 0.0
  %506 = vmatmul.mubr.f32.gmra.mrb[0].mxu0 %v436
  %v507 = vpop.f32.mrb[0].mxu0
  %v508 = vadd.f32 0.0, %v507
  %v509 = vpop.f32.mrb[0].mxu0
  %510 = vmatprep.mubr.f32.mxu0 0.0
  %511 = vmatmul.mubr.f32.gmra.mrb[0].mxu0 %v439
  %v512 = vpop.f32.mrb[0].mxu0
  %v513 = vadd.f32 0.0, %v512
  %v514 = vpop.f32.mrb[0].mxu0
  %515 = vdwg.mxu0
  %v517 = vsel %vm29, %v25, 0
  %v520 = vsel %vm29, %v26, 0
  %522 = vmatprep.subr.mxu0 0.0
  %523 = vmatpush1.msra.mxu0 %v11
  %524 = vmatprep.subr.mxu0 0.0
  %525 = vmatpush1.msra.mxu0 %v12
  %526 = vmatprep.subr.mxu0 0.0
  %527 = vmatpush1.msra.mxu0 0.0
  %528 = vmatprep.subr.mxu0 0.0
  %529 = vmatpush1.msra.mxu0 0.0
  %530 = vmatprep.subr.mxu0 0.0
  %531 = vmatpush1.msra.mxu0 0.0
  %532 = vmatprep.subr.mxu0 0.0
  %533 = vmatpush1.msra.mxu0 0.0
  %534 = vmatprep.subr.mxu0 0.0
  %535 = vmatpush1.msra.mxu0 0.0
  %536 = vmatprep.subr.mxu0 0.0
  %537 = vmatpush1.msra.mxu0 0.0
  %538 = vmatprep.subr.mxu0 0.0
  %539 = vmatpush1.msra.mxu0 0.0
  %540 = vmatprep.subr.mxu0 0.0
  %541 = vmatpush1.msra.mxu0 0.0
  %542 = vmatprep.subr.mxu0 0.0
  %543 = vmatpush1.msra.mxu0 0.0
  %544 = vmatprep.subr.mxu0 0.0
  %545 = vmatpush1.msra.mxu0 0.0
  %546 = vmatprep.subr.mxu0 0.0
  %547 = vmatpush1.msra.mxu0 0.0
  %548 = vmatprep.subr.mxu0 0.0
  %549 = vmatpush1.msra.mxu0 0.0
  %550 = vmatprep.subr.mxu0 0.0
  %551 = vmatpush1.msra.mxu0 0.0
  %552 = vmatprep.subr.mxu0 0.0
  %553 = vmatpush1.msra.mxu0 0.0
  %554 = vmatprep.subr.mxu0 0.0
  %555 = vmatpush1.msra.mxu0 0.0
  %556 = vmatprep.subr.mxu0 0.0
  %557 = vmatpush1.msra.mxu0 0.0
  %558 = vmatprep.subr.mxu0 0.0
  %559 = vmatpush1.msra.mxu0 0.0
  %560 = vmatprep.subr.mxu0 0.0
  %561 = vmatpush1.msra.mxu0 0.0
  %562 = vmatprep.subr.mxu0 0.0
  %563 = vmatpush1.msra.mxu0 0.0
  %564 = vmatprep.subr.mxu0 0.0
  %565 = vmatpush1.msra.mxu0 0.0
  %566 = vmatprep.subr.mxu0 0.0
  %567 = vmatpush1.msra.mxu0 0.0
  %568 = vmatprep.subr.mxu0 0.0
  %569 = vmatpush1.msra.mxu0 0.0
  %570 = vmatprep.subr.mxu0 0.0
  %571 = vmatpush1.msra.mxu0 0.0
  %572 = vmatprep.subr.mxu0 0.0
  %573 = vmatpush1.msra.mxu0 0.0
  %574 = vmatprep.subr.mxu0 0.0
  %575 = vmatpush1.msra.mxu0 0.0
  %576 = vmatprep.subr.mxu0 0.0
  %577 = vmatpush1.msra.mxu0 0.0
  %578 = vmatprep.subr.mxu0 0.0
  %579 = vmatpush1.msra.mxu0 0.0
  %580 = vmatprep.subr.mxu0 0.0
  %581 = vmatpush1.msra.mxu0 0.0
  %582 = vmatprep.subr.mxu0 0.0
  %583 = vmatpush1.msra.mxu0 0.0
  %584 = vmatprep.subr.mxu0 0.0
  %585 = vmatpush1.msra.mxu0 0.0
  %586 = vmatprep.mubr.f32.mxu0 0.0
  %587 = vmatmul.mubr.f32.gmra.mrb[0].mxu0 %v517
  %v588 = vpop.f32.mrb[0].mxu0
  %v589 = vadd.f32 0.0, %v588
  %v590 = vpop.f32.mrb[0].mxu0
  %591 = vmatprep.mubr.f32.mxu0 0.0
  %592 = vmatmul.mubr.f32.gmra.mrb[0].mxu0 %v520
  %v593 = vpop.f32.mrb[0].mxu0
  %v594 = vadd.f32 0.0, %v593
  %v595 = vpop.f32.mrb[0].mxu0
  %596 = vdwg.mxu0
  %v598 = vsel %vm29, %v27, 0
  %v601 = vsel %vm29, %v28, 0
  %603 = vmatprep.subr.mxu0 0.0
  %604 = vmatpush1.msra.mxu0 %v11
  %605 = vmatprep.subr.mxu0 0.0
  %606 = vmatpush1.msra.mxu0 %v12
  %607 = vmatprep.subr.mxu0 0.0
  %608 = vmatpush1.msra.mxu0 0.0
  %609 = vmatprep.subr.mxu0 0.0
  %610 = vmatpush1.msra.mxu0 0.0
  %611 = vmatprep.subr.mxu0 0.0
  %612 = vmatpush1.msra.mxu0 0.0
  %613 = vmatprep.subr.mxu0 0.0
  %614 = vmatpush1.msra.mxu0 0.0
  %615 = vmatprep.subr.mxu0 0.0
  %616 = vmatpush1.msra.mxu0 0.0
  %617 = vmatprep.subr.mxu0 0.0
  %618 = vmatpush1.msra.mxu0 0.0
  %619 = vmatprep.subr.mxu0 0.0
  %620 = vmatpush1.msra.mxu0 0.0
  %621 = vmatprep.subr.mxu0 0.0
  %622 = vmatpush1.msra.mxu0 0.0
  %623 = vmatprep.subr.mxu0 0.0
  %624 = vmatpush1.msra.mxu0 0.0
  %625 = vmatprep.subr.mxu0 0.0
  %626 = vmatpush1.msra.mxu0 0.0
  %627 = vmatprep.subr.mxu0 0.0
  %628 = vmatpush1.msra.mxu0 0.0
  %629 = vmatprep.subr.mxu0 0.0
  %630 = vmatpush1.msra.mxu0 0.0
  %631 = vmatprep.subr.mxu0 0.0
  %632 = vmatpush1.msra.mxu0 0.0
  %633 = vmatprep.subr.mxu0 0.0
  %634 = vmatpush1.msra.mxu0 0.0
  %635 = vmatprep.subr.mxu0 0.0
  %636 = vmatpush1.msra.mxu0 0.0
  %637 = vmatprep.subr.mxu0 0.0
  %638 = vmatpush1.msra.mxu0 0.0
  %639 = vmatprep.subr.mxu0 0.0
  %640 = vmatpush1.msra.mxu0 0.0
  %641 = vmatprep.subr.mxu0 0.0
  %642 = vmatpush1.msra.mxu0 0.0
  %643 = vmatprep.subr.mxu0 0.0
  %644 = vmatpush1.msra.mxu0 0.0
  %645 = vmatprep.subr.mxu0 0.0
  %646 = vmatpush1.msra.mxu0 0.0
  %647 = vmatprep.subr.mxu0 0.0
  %648 = vmatpush1.msra.mxu0 0.0
  %649 = vmatprep.subr.mxu0 0.0
  %650 = vmatpush1.msra.mxu0 0.0
  %651 = vmatprep.subr.mxu0 0.0
  %652 = vmatpush1.msra.mxu0 0.0
  %653 = vmatprep.subr.mxu0 0.0
  %654 = vmatpush1.msra.mxu0 0.0
  %655 = vmatprep.subr.mxu0 0.0
  %656 = vmatpush1.msra.mxu0 0.0
  %657 = vmatprep.subr.mxu0 0.0
  %658 = vmatpush1.msra.mxu0 0.0
  %659 = vmatprep.subr.mxu0 0.0
  %660 = vmatpush1.msra.mxu0 0.0
  %661 = vmatprep.subr.mxu0 0.0
  %662 = vmatpush1.msra.mxu0 0.0
  %663 = vmatprep.subr.mxu0 0.0
  %664 = vmatpush1.msra.mxu0 0.0
  %665 = vmatprep.subr.mxu0 0.0
  %666 = vmatpush1.msra.mxu0 0.0
  %667 = vmatprep.mubr.f32.mxu0 0.0
  %668 = vmatmul.mubr.f32.gmra.mrb[0].mxu0 %v598
  %v669 = vpop.f32.mrb[0].mxu0
  %v670 = vadd.f32 0.0, %v669
  %v671 = vpop.f32.mrb[0].mxu0
  %672 = vmatprep.mubr.f32.mxu0 0.0
  %673 = vmatmul.mubr.f32.gmra.mrb[0].mxu0 %v601
  %v674 = vpop.f32.mrb[0].mxu0
  %v675 = vadd.f32 0.0, %v674
  %v676 = vpop.f32.mrb[0].mxu0
  %677 = vdwg.mxu0
  %v679 = vsel %vm29, %v11, 0
  %v682 = vsel %vm29, %v12, 0
  %684 = vmatprep.subr.mxu0 0.0
  %685 = vmatpush1.msra.mxu0 %v103
  %686 = vmatprep.subr.mxu0 0.0
  %687 = vmatpush1.msra.mxu0 %v108
  %688 = vmatprep.subr.mxu0 0.0
  %689 = vmatpush1.msra.mxu0 0.0
  %690 = vmatprep.subr.mxu0 0.0
  %691 = vmatpush1.msra.mxu0 0.0
  %692 = vmatprep.subr.mxu0 0.0
  %693 = vmatpush1.msra.mxu0 0.0
  %694 = vmatprep.subr.mxu0 0.0
  %695 = vmatpush1.msra.mxu0 0.0
  %696 = vmatprep.subr.mxu0 0.0
  %697 = vmatpush1.msra.mxu0 0.0
  %698 = vmatprep.subr.mxu0 0.0
  %699 = vmatpush1.msra.mxu0 0.0
  %700 = vmatprep.subr.mxu0 0.0
  %701 = vmatpush1.msra.mxu0 0.0
  %702 = vmatprep.subr.mxu0 0.0
  %703 = vmatpush1.msra.mxu0 0.0
  %704 = vmatprep.subr.mxu0 0.0
  %705 = vmatpush1.msra.mxu0 0.0
  %706 = vmatprep.subr.mxu0 0.0
  %707 = vmatpush1.msra.mxu0 0.0
  %708 = vmatprep.subr.mxu0 0.0
  %709 = vmatpush1.msra.mxu0 0.0
  %710 = vmatprep.subr.mxu0 0.0
  %711 = vmatpush1.msra.mxu0 0.0
  %712 = vmatprep.subr.mxu0 0.0
  %713 = vmatpush1.msra.mxu0 0.0
  %714 = vmatprep.subr.mxu0 0.0
  %715 = vmatpush1.msra.mxu0 0.0
  %716 = vmatprep.subr.mxu0 0.0
  %717 = vmatpush1.msra.mxu0 0.0
  %718 = vmatprep.subr.mxu0 0.0
  %719 = vmatpush1.msra.mxu0 0.0
  %720 = vmatprep.subr.mxu0 0.0
  %721 = vmatpush1.msra.mxu0 0.0
  %722 = vmatprep.subr.mxu0 0.0
  %723 = vmatpush1.msra.mxu0 0.0
  %724 = vmatprep.subr.mxu0 0.0
  %725 = vmatpush1.msra.mxu0 0.0
  %726 = vmatprep.subr.mxu0 0.0
  %727 = vmatpush1.msra.mxu0 0.0
  %728 = vmatprep.subr.mxu0 0.0
  %729 = vmatpush1.msra.mxu0 0.0
  %730 = vmatprep.subr.mxu0 0.0
  %731 = vmatpush1.msra.mxu0 0.0
  %732 = vmatprep.subr.mxu0 0.0
  %733 = vmatpush1.msra.mxu0 0.0
  %734 = vmatprep.subr.mxu0 0.0
  %735 = vmatpush1.msra.mxu0 0.0
  %736 = vmatprep.subr.mxu0 0.0
  %737 = vmatpush1.msra.mxu0 0.0
  %738 = vmatprep.subr.mxu0 0.0
  %739 = vmatpush1.msra.mxu0 0.0
  %740 = vmatprep.subr.mxu0 0.0
  %741 = vmatpush1.msra.mxu0 0.0
  %742 = vmatprep.subr.mxu0 0.0
  %743 = vmatpush1.msra.mxu0 0.0
  %744 = vmatprep.subr.mxu0 0.0
  %745 = vmatpush1.msra.mxu0 0.0
  %746 = vmatprep.subr.mxu0 0.0
  %747 = vmatpush1.msra.mxu0 0.0
  %748 = vmatprep.mubr.f32.mxu0 0.0
  %749 = vmatmul.mubr.f32.gmra.mrb[0].mxu0 %v679
  %v750 = vpop.f32.mrb[0].mxu0
  %v751 = vadd.f32 0.0, %v750
  %v752 = vpop.f32.mrb[0].mxu0
  %753 = vmatprep.mubr.f32.mxu0 0.0
  %754 = vmatmul.mubr.f32.gmra.mrb[0].mxu0 %v682
  %v755 = vpop.f32.mrb[0].mxu0
  %v756 = vadd.f32 0.0, %v755
  %v757 = vpop.f32.mrb[0].mxu0
  %758 = vdwg.mxu0
  %759 = vmatprep.subr.mxu0 0.0
  %760 = vmatpush1.msra.mxu0 %v184
  %761 = vmatprep.subr.mxu0 0.0
  %762 = vmatpush1.msra.mxu0 %v189
  %763 = vmatprep.subr.mxu0 0.0
  %764 = vmatpush1.msra.mxu0 0.0
  %765 = vmatprep.subr.mxu0 0.0
  %766 = vmatpush1.msra.mxu0 0.0
  %767 = vmatprep.subr.mxu0 0.0
  %768 = vmatpush1.msra.mxu0 0.0
  %769 = vmatprep.subr.mxu0 0.0
  %770 = vmatpush1.msra.mxu0 0.0
  %771 = vmatprep.subr.mxu0 0.0
  %772 = vmatpush1.msra.mxu0 0.0
  %773 = vmatprep.subr.mxu0 0.0
  %774 = vmatpush1.msra.mxu0 0.0
  %775 = vmatprep.subr.mxu0 0.0
  %776 = vmatpush1.msra.mxu0 0.0
  %777 = vmatprep.subr.mxu0 0.0
  %778 = vmatpush1.msra.mxu0 0.0
  %779 = vmatprep.subr.mxu0 0.0
  %780 = vmatpush1.msra.mxu0 0.0
  %781 = vmatprep.subr.mxu0 0.0
  %782 = vmatpush1.msra.mxu0 0.0
  %783 = vmatprep.subr.mxu0 0.0
  %784 = vmatpush1.msra.mxu0 0.0
  %785 = vmatprep.subr.mxu0 0.0
  %786 = vmatpush1.msra.mxu0 0.0
  %787 = vmatprep.subr.mxu0 0.0
  %788 = vmatpush1.msra.mxu0 0.0
  %789 = vmatprep.subr.mxu0 0.0
  %790 = vmatpush1.msra.mxu0 0.0
  %791 = vmatprep.subr.mxu0 0.0
  %792 = vmatpush1.msra.mxu0 0.0
  %793 = vmatprep.subr.mxu0 0.0
  %794 = vmatpush1.msra.mxu0 0.0
  %795 = vmatprep.subr.mxu0 0.0
  %796 = vmatpush1.msra.mxu0 0.0
  %797 = vmatprep.subr.mxu0 0.0
  %798 = vmatpush1.msra.mxu0 0.0
  %799 = vmatprep.subr.mxu0 0.0
  %800 = vmatpush1.msra.mxu0 0.0
  %801 = vmatprep.subr.mxu0 0.0
  %802 = vmatpush1.msra.mxu0 0.0
  %803 = vmatprep.subr.mxu0 0.0
  %804 = vmatpush1.msra.mxu0 0.0
  %805 = vmatprep.subr.mxu0 0.0
  %806 = vmatpush1.msra.mxu0 0.0
  %807 = vmatprep.subr.mxu0 0.0
  %808 = vmatpush1.msra.mxu0 0.0
  %809 = vmatprep.subr.mxu0 0.0
  %810 = vmatpush1.msra.mxu0 0.0
  %811 = vmatprep.subr.mxu0 0.0
  %812 = vmatpush1.msra.mxu0 0.0
  %813 = vmatprep.subr.mxu0 0.0
  %814 = vmatpush1.msra.mxu0 0.0
  %815 = vmatprep.subr.mxu0 0.0
  %816 = vmatpush1.msra.mxu0 0.0
  %817 = vmatprep.subr.mxu0 0.0
  %818 = vmatpush1.msra.mxu0 0.0
  %819 = vmatprep.subr.mxu0 0.0
  %820 = vmatpush1.msra.mxu0 0.0
  %821 = vmatprep.subr.mxu0 0.0
  %822 = vmatpush1.msra.mxu0 0.0
  %823 = vmatprep.mubr.f32.mxu0 0.0
  %824 = vmatmul.mubr.f32.gmra.mrb[0].mxu0 %v679
  %v825 = vpop.f32.mrb[0].mxu0
  %v826 = vadd.f32 0.0, %v825
  %v827 = vpop.f32.mrb[0].mxu0
  %828 = vmatprep.mubr.f32.mxu0 0.0
  %829 = vmatmul.mubr.f32.gmra.mrb[0].mxu0 %v682
  %v830 = vpop.f32.mrb[0].mxu0
  %v831 = vadd.f32 0.0, %v830
  %v832 = vpop.f32.mrb[0].mxu0
  %833 = vdwg.mxu0
  %834 = vmatprep.subr.mxu0 0.0
  %835 = vmatpush1.msra.mxu0 %v265
  %836 = vmatprep.subr.mxu0 0.0
  %837 = vmatpush1.msra.mxu0 %v270
  %838 = vmatprep.subr.mxu0 0.0
  %839 = vmatpush1.msra.mxu0 0.0
  %840 = vmatprep.subr.mxu0 0.0
  %841 = vmatpush1.msra.mxu0 0.0
  %842 = vmatprep.subr.mxu0 0.0
  %843 = vmatpush1.msra.mxu0 0.0
  %844 = vmatprep.subr.mxu0 0.0
  %845 = vmatpush1.msra.mxu0 0.0
  %846 = vmatprep.subr.mxu0 0.0
  %847 = vmatpush1.msra.mxu0 0.0
  %848 = vmatprep.subr.mxu0 0.0
  %849 = vmatpush1.msra.mxu0 0.0
  %850 = vmatprep.subr.mxu0 0.0
  %851 = vmatpush1.msra.mxu0 0.0
  %852 = vmatprep.subr.mxu0 0.0
  %853 = vmatpush1.msra.mxu0 0.0
  %854 = vmatprep.subr.mxu0 0.0
  %855 = vmatpush1.msra.mxu0 0.0
  %856 = vmatprep.subr.mxu0 0.0
  %857 = vmatpush1.msra.mxu0 0.0
  %858 = vmatprep.subr.mxu0 0.0
  %859 = vmatpush1.msra.mxu0 0.0
  %860 = vmatprep.subr.mxu0 0.0
  %861 = vmatpush1.msra.mxu0 0.0
  %862 = vmatprep.subr.mxu0 0.0
  %863 = vmatpush1.msra.mxu0 0.0
  %864 = vmatprep.subr.mxu0 0.0
  %865 = vmatpush1.msra.mxu0 0.0
  %866 = vmatprep.subr.mxu0 0.0
  %867 = vmatpush1.msra.mxu0 0.0
  %868 = vmatprep.subr.mxu0 0.0
  %869 = vmatpush1.msra.mxu0 0.0
  %870 = vmatprep.subr.mxu0 0.0
  %871 = vmatpush1.msra.mxu0 0.0
  %872 = vmatprep.subr.mxu0 0.0
  %873 = vmatpush1.msra.mxu0 0.0
  %874 = vmatprep.subr.mxu0 0.0
  %875 = vmatpush1.msra.mxu0 0.0
  %876 = vmatprep.subr.mxu0 0.0
  %877 = vmatpush1.msra.mxu0 0.0
  %878 = vmatprep.subr.mxu0 0.0
  %879 = vmatpush1.msra.mxu0 0.0
  %880 = vmatprep.subr.mxu0 0.0
  %881 = vmatpush1.msra.mxu0 0.0
  %882 = vmatprep.subr.mxu0 0.0
  %883 = vmatpush1.msra.mxu0 0.0
  %884 = vmatprep.subr.mxu0 0.0
  %885 = vmatpush1.msra.mxu0 0.0
  %886 = vmatprep.subr.mxu0 0.0
  %887 = vmatpush1.msra.mxu0 0.0
  %888 = vmatprep.subr.mxu0 0.0
  %889 = vmatpush1.msra.mxu0 0.0
  %890 = vmatprep.subr.mxu0 0.0
  %891 = vmatpush1.msra.mxu0 0.0
  %892 = vmatprep.subr.mxu0 0.0
  %893 = vmatpush1.msra.mxu0 0.0
  %894 = vmatprep.subr.mxu0 0.0
  %895 = vmatpush1.msra.mxu0 0.0
  %896 = vmatprep.subr.mxu0 0.0
  %897 = vmatpush1.msra.mxu0 0.0
  %898 = vmatprep.mubr.f32.mxu0 0.0
  %899 = vmatmul.mubr.f32.gmra.mrb[0].mxu0 %v679
  %v900 = vpop.f32.mrb[0].mxu0
  %v901 = vadd.f32 0.0, %v900
  %v902 = vpop.f32.mrb[0].mxu0
  %903 = vmatprep.mubr.f32.mxu0 0.0
  %904 = vmatmul.mubr.f32.gmra.mrb[0].mxu0 %v682
  %v905 = vpop.f32.mrb[0].mxu0
  %v906 = vadd.f32 0.0, %v905
  %v907 = vpop.f32.mrb[0].mxu0
  %908 = vdwg.mxu0
  %909 = vmatprep.subr.mxu0 0.0
  %910 = vmatpush1.msra.mxu0 %v346
  %911 = vmatprep.subr.mxu0 0.0
  %912 = vmatpush1.msra.mxu0 %v351
  %913 = vmatprep.subr.mxu0 0.0
  %914 = vmatpush1.msra.mxu0 0.0
  %915 = vmatprep.subr.mxu0 0.0
  %916 = vmatpush1.msra.mxu0 0.0
  %917 = vmatprep.subr.mxu0 0.0
  %918 = vmatpush1.msra.mxu0 0.0
  %919 = vmatprep.subr.mxu0 0.0
  %920 = vmatpush1.msra.mxu0 0.0
  %921 = vmatprep.subr.mxu0 0.0
  %922 = vmatpush1.msra.mxu0 0.0
  %923 = vmatprep.subr.mxu0 0.0
  %924 = vmatpush1.msra.mxu0 0.0
  %925 = vmatprep.subr.mxu0 0.0
  %926 = vmatpush1.msra.mxu0 0.0
  %927 = vmatprep.subr.mxu0 0.0
  %928 = vmatpush1.msra.mxu0 0.0
  %929 = vmatprep.subr.mxu0 0.0
  %930 = vmatpush1.msra.mxu0 0.0
  %931 = vmatprep.subr.mxu0 0.0
  %932 = vmatpush1.msra.mxu0 0.0
  %933 = vmatprep.subr.mxu0 0.0
  %934 = vmatpush1.msra.mxu0 0.0
  %935 = vmatprep.subr.mxu0 0.0
  %936 = vmatpush1.msra.mxu0 0.0
  %937 = vmatprep.subr.mxu0 0.0
  %938 = vmatpush1.msra.mxu0 0.0
  %939 = vmatprep.subr.mxu0 0.0
  %940 = vmatpush1.msra.mxu0 0.0
  %941 = vmatprep.subr.mxu0 0.0
  %942 = vmatpush1.msra.mxu0 0.0
  %943 = vmatprep.subr.mxu0 0.0
  %944 = vmatpush1.msra.mxu0 0.0
  %945 = vmatprep.subr.mxu0 0.0
  %946 = vmatpush1.msra.mxu0 0.0
  %947 = vmatprep.subr.mxu0 0.0
  %948 = vmatpush1.msra.mxu0 0.0
  %949 = vmatprep.subr.mxu0 0.0
  %950 = vmatpush1.msra.mxu0 0.0
  %951 = vmatprep.subr.mxu0 0.0
  %952 = vmatpush1.msra.mxu0 0.0
  %953 = vmatprep.subr.mxu0 0.0
  %954 = vmatpush1.msra.mxu0 0.0
  %955 = vmatprep.subr.mxu0 0.0
  %956 = vmatpush1.msra.mxu0 0.0
  %957 = vmatprep.subr.mxu0 0.0
  %958 = vmatpush1.msra.mxu0 0.0
  %959 = vmatprep.subr.mxu0 0.0
  %960 = vmatpush1.msra.mxu0 0.0
  %961 = vmatprep.subr.mxu0 0.0
  %962 = vmatpush1.msra.mxu0 0.0
  %963 = vmatprep.subr.mxu0 0.0
  %964 = vmatpush1.msra.mxu0 0.0
  %965 = vmatprep.subr.mxu0 0.0
  %966 = vmatpush1.msra.mxu0 0.0
  %967 = vmatprep.subr.mxu0 0.0
  %968 = vmatpush1.msra.mxu0 0.0
  %969 = vmatprep.subr.mxu0 0.0
  %970 = vmatpush1.msra.mxu0 0.0
  %971 = vmatprep.subr.mxu0 0.0
  %972 = vmatpush1.msra.mxu0 0.0
  %973 = vmatprep.mubr.f32.mxu0 0.0
  %974 = vmatmul.mubr.f32.gmra.mrb[0].mxu0 %v679
  %v975 = vpop.f32.mrb[0].mxu0
  %v976 = vadd.f32 0.0, %v975
  %v977 = vpop.f32.mrb[0].mxu0
  %978 = vmatprep.mubr.f32.mxu0 0.0
  %979 = vmatmul.mubr.f32.gmra.mrb[0].mxu0 %v682
  %v980 = vpop.f32.mrb[0].mxu0
  %v981 = vadd.f32 0.0, %v980
  %v982 = vpop.f32.mrb[0].mxu0
  %983 = vdwg.mxu0
  %984 = vmatprep.subr.mxu0 0.0
  %985 = vmatpush1.msra.mxu0 %v427
  %986 = vmatprep.subr.mxu0 0.0
  %987 = vmatpush1.msra.mxu0 %v432
  %988 = vmatprep.subr.mxu0 0.0
  %989 = vmatpush1.msra.mxu0 0.0
  %990 = vmatprep.subr.mxu0 0.0
  %991 = vmatpush1.msra.mxu0 0.0
  %992 = vmatprep.subr.mxu0 0.0
  %993 = vmatpush1.msra.mxu0 0.0
  %994 = vmatprep.subr.mxu0 0.0
  %995 = vmatpush1.msra.mxu0 0.0
  %996 = vmatprep.subr.mxu0 0.0
  %997 = vmatpush1.msra.mxu0 0.0
  %998 = vmatprep.subr.mxu0 0.0
  %999 = vmatpush1.msra.mxu0 0.0
  %1000 = vmatprep.subr.mxu0 0.0
  %1001 = vmatpush1.msra.mxu0 0.0
  %1002 = vmatprep.subr.mxu0 0.0
  %1003 = vmatpush1.msra.mxu0 0.0
  %1004 = vmatprep.subr.mxu0 0.0
  %1005 = vmatpush1.msra.mxu0 0.0
  %1006 = vmatprep.subr.mxu0 0.0
  %1007 = vmatpush1.msra.mxu0 0.0
  %1008 = vmatprep.subr.mxu0 0.0
  %1009 = vmatpush1.msra.mxu0 0.0
  %1010 = vmatprep.subr.mxu0 0.0
  %1011 = vmatpush1.msra.mxu0 0.0
  %1012 = vmatprep.subr.mxu0 0.0
  %1013 = vmatpush1.msra.mxu0 0.0
  %1014 = vmatprep.subr.mxu0 0.0
  %1015 = vmatpush1.msra.mxu0 0.0
  %1016 = vmatprep.subr.mxu0 0.0
  %1017 = vmatpush1.msra.mxu0 0.0
  %1018 = vmatprep.subr.mxu0 0.0
  %1019 = vmatpush1.msra.mxu0 0.0
  %1020 = vmatprep.subr.mxu0 0.0
  %1021 = vmatpush1.msra.mxu0 0.0
  %1022 = vmatprep.subr.mxu0 0.0
  %1023 = vmatpush1.msra.mxu0 0.0
  %1024 = vmatprep.subr.mxu0 0.0
  %1025 = vmatpush1.msra.mxu0 0.0
  %1026 = vmatprep.subr.mxu0 0.0
  %1027 = vmatpush1.msra.mxu0 0.0
  %1028 = vmatprep.subr.mxu0 0.0
  %1029 = vmatpush1.msra.mxu0 0.0
  %1030 = vmatprep.subr.mxu0 0.0
  %1031 = vmatpush1.msra.mxu0 0.0
  %1032 = vmatprep.subr.mxu0 0.0
  %1033 = vmatpush1.msra.mxu0 0.0
  %1034 = vmatprep.subr.mxu0 0.0
  %1035 = vmatpush1.msra.mxu0 0.0
  %1036 = vmatprep.subr.mxu0 0.0
  %1037 = vmatpush1.msra.mxu0 0.0
  %1038 = vmatprep.subr.mxu0 0.0
  %1039 = vmatpush1.msra.mxu0 0.0
  %1040 = vmatprep.subr.mxu0 0.0
  %1041 = vmatpush1.msra.mxu0 0.0
  %1042 = vmatprep.subr.mxu0 0.0
  %1043 = vmatpush1.msra.mxu0 0.0
  %1044 = vmatprep.subr.mxu0 0.0
  %1045 = vmatpush1.msra.mxu0 0.0
  %1046 = vmatprep.subr.mxu0 0.0
  %1047 = vmatpush1.msra.mxu0 0.0
  %1048 = vmatprep.mubr.f32.mxu0 0.0
  %1049 = vmatmul.mubr.f32.gmra.mrb[0].mxu0 %v679
  %v1050 = vpop.f32.mrb[0].mxu0
  %v1051 = vadd.f32 0.0, %v1050
  %v1052 = vpop.f32.mrb[0].mxu0
  %1053 = vmatprep.mubr.f32.mxu0 0.0
  %1054 = vmatmul.mubr.f32.gmra.mrb[0].mxu0 %v682
  %v1055 = vpop.f32.mrb[0].mxu0
  %v1056 = vadd.f32 0.0, %v1055
  %v1057 = vpop.f32.mrb[0].mxu0
  %1058 = vdwg.mxu0
  %1059 = vmatprep.subr.mxu0 0.0
  %1060 = vmatpush1.msra.mxu0 %v508
  %1061 = vmatprep.subr.mxu0 0.0
  %1062 = vmatpush1.msra.mxu0 %v513
  %1063 = vmatprep.subr.mxu0 0.0
  %1064 = vmatpush1.msra.mxu0 0.0
  %1065 = vmatprep.subr.mxu0 0.0
  %1066 = vmatpush1.msra.mxu0 0.0
  %1067 = vmatprep.subr.mxu0 0.0
  %1068 = vmatpush1.msra.mxu0 0.0
  %1069 = vmatprep.subr.mxu0 0.0
  %1070 = vmatpush1.msra.mxu0 0.0
  %1071 = vmatprep.subr.mxu0 0.0
  %1072 = vmatpush1.msra.mxu0 0.0
  %1073 = vmatprep.subr.mxu0 0.0
  %1074 = vmatpush1.msra.mxu0 0.0
  %1075 = vmatprep.subr.mxu0 0.0
  %1076 = vmatpush1.msra.mxu0 0.0
  %1077 = vmatprep.subr.mxu0 0.0
  %1078 = vmatpush1.msra.mxu0 0.0
  %1079 = vmatprep.subr.mxu0 0.0
  %1080 = vmatpush1.msra.mxu0 0.0
  %1081 = vmatprep.subr.mxu0 0.0
  %1082 = vmatpush1.msra.mxu0 0.0
  %1083 = vmatprep.subr.mxu0 0.0
  %1084 = vmatpush1.msra.mxu0 0.0
  %1085 = vmatprep.subr.mxu0 0.0
  %1086 = vmatpush1.msra.mxu0 0.0
  %1087 = vmatprep.subr.mxu0 0.0
  %1088 = vmatpush1.msra.mxu0 0.0
  %1089 = vmatprep.subr.mxu0 0.0
  %1090 = vmatpush1.msra.mxu0 0.0
  %1091 = vmatprep.subr.mxu0 0.0
  %1092 = vmatpush1.msra.mxu0 0.0
  %1093 = vmatprep.subr.mxu0 0.0
  %1094 = vmatpush1.msra.mxu0 0.0
  %1095 = vmatprep.subr.mxu0 0.0
  %1096 = vmatpush1.msra.mxu0 0.0
  %1097 = vmatprep.subr.mxu0 0.0
  %1098 = vmatpush1.msra.mxu0 0.0
  %1099 = vmatprep.subr.mxu0 0.0
  %1100 = vmatpush1.msra.mxu0 0.0
  %1101 = vmatprep.subr.mxu0 0.0
  %1102 = vmatpush1.msra.mxu0 0.0
  %1103 = vmatprep.subr.mxu0 0.0
  %1104 = vmatpush1.msra.mxu0 0.0
  %1105 = vmatprep.subr.mxu0 0.0
  %1106 = vmatpush1.msra.mxu0 0.0
  %1107 = vmatprep.subr.mxu0 0.0
  %1108 = vmatpush1.msra.mxu0 0.0
  %1109 = vmatprep.subr.mxu0 0.0
  %1110 = vmatpush1.msra.mxu0 0.0
  %1111 = vmatprep.subr.mxu0 0.0
  %1112 = vmatpush1.msra.mxu0 0.0
  %1113 = vmatprep.subr.mxu0 0.0
  %1114 = vmatpush1.msra.mxu0 0.0
  %1115 = vmatprep.subr.mxu0 0.0
  %1116 = vmatpush1.msra.mxu0 0.0
  %1117 = vmatprep.subr.mxu0 0.0
  %1118 = vmatpush1.msra.mxu0 0.0
  %1119 = vmatprep.subr.mxu0 0.0
  %1120 = vmatpush1.msra.mxu0 0.0
  %1121 = vmatprep.subr.mxu0 0.0
  %1122 = vmatpush1.msra.mxu0 0.0
  %1123 = vmatprep.mubr.f32.mxu0 0.0
  %1124 = vmatmul.mubr.f32.gmra.mrb[0].mxu0 %v679
  %v1125 = vpop.f32.mrb[0].mxu0
  %v1126 = vadd.f32 0.0, %v1125
  %v1127 = vpop.f32.mrb[0].mxu0
  %1128 = vmatprep.mubr.f32.mxu0 0.0
  %1129 = vmatmul.mubr.f32.gmra.mrb[0].mxu0 %v682
  %v1130 = vpop.f32.mrb[0].mxu0
  %v1131 = vadd.f32 0.0, %v1130
  %v1132 = vpop.f32.mrb[0].mxu0
  %1133 = vdwg.mxu0
  %1134 = vmatprep.subr.mxu0 0.0
  %1135 = vmatpush1.msra.mxu0 %v589
  %1136 = vmatprep.subr.mxu0 0.0
  %1137 = vmatpush1.msra.mxu0 %v594
  %1138 = vmatprep.subr.mxu0 0.0
  %1139 = vmatpush1.msra.mxu0 0.0
  %1140 = vmatprep.subr.mxu0 0.0
  %1141 = vmatpush1.msra.mxu0 0.0
  %1142 = vmatprep.subr.mxu0 0.0
  %1143 = vmatpush1.msra.mxu0 0.0
  %1144 = vmatprep.subr.mxu0 0.0
  %1145 = vmatpush1.msra.mxu0 0.0
  %1146 = vmatprep.subr.mxu0 0.0
  %1147 = vmatpush1.msra.mxu0 0.0
  %1148 = vmatprep.subr.mxu0 0.0
  %1149 = vmatpush1.msra.mxu0 0.0
  %1150 = vmatprep.subr.mxu0 0.0
  %1151 = vmatpush1.msra.mxu0 0.0
  %1152 = vmatprep.subr.mxu0 0.0
  %1153 = vmatpush1.msra.mxu0 0.0
  %1154 = vmatprep.subr.mxu0 0.0
  %1155 = vmatpush1.msra.mxu0 0.0
  %1156 = vmatprep.subr.mxu0 0.0
  %1157 = vmatpush1.msra.mxu0 0.0
  %1158 = vmatprep.subr.mxu0 0.0
  %1159 = vmatpush1.msra.mxu0 0.0
  %1160 = vmatprep.subr.mxu0 0.0
  %1161 = vmatpush1.msra.mxu0 0.0
  %1162 = vmatprep.subr.mxu0 0.0
  %1163 = vmatpush1.msra.mxu0 0.0
  %1164 = vmatprep.subr.mxu0 0.0
  %1165 = vmatpush1.msra.mxu0 0.0
  %1166 = vmatprep.subr.mxu0 0.0
  %1167 = vmatpush1.msra.mxu0 0.0
  %1168 = vmatprep.subr.mxu0 0.0
  %1169 = vmatpush1.msra.mxu0 0.0
  %1170 = vmatprep.subr.mxu0 0.0
  %1171 = vmatpush1.msra.mxu0 0.0
  %1172 = vmatprep.subr.mxu0 0.0
  %1173 = vmatpush1.msra.mxu0 0.0
  %1174 = vmatprep.subr.mxu0 0.0
  %1175 = vmatpush1.msra.mxu0 0.0
  %1176 = vmatprep.subr.mxu0 0.0
  %1177 = vmatpush1.msra.mxu0 0.0
  %1178 = vmatprep.subr.mxu0 0.0
  %1179 = vmatpush1.msra.mxu0 0.0
  %1180 = vmatprep.subr.mxu0 0.0
  %1181 = vmatpush1.msra.mxu0 0.0
  %1182 = vmatprep.subr.mxu0 0.0
  %1183 = vmatpush1.msra.mxu0 0.0
  %1184 = vmatprep.subr.mxu0 0.0
  %1185 = vmatpush1.msra.mxu0 0.0
  %1186 = vmatprep.subr.mxu0 0.0
  %1187 = vmatpush1.msra.mxu0 0.0
  %1188 = vmatprep.subr.mxu0 0.0
  %1189 = vmatpush1.msra.mxu0 0.0
  %1190 = vmatprep.subr.mxu0 0.0
  %1191 = vmatpush1.msra.mxu0 0.0
  %1192 = vmatprep.subr.mxu0 0.0
  %1193 = vmatpush1.msra.mxu0 0.0
  %1194 = vmatprep.subr.mxu0 0.0
  %1195 = vmatpush1.msra.mxu0 0.0
  %1196 = vmatprep.subr.mxu0 0.0
  %1197 = vmatpush1.msra.mxu0 0.0
  %1198 = vmatprep.mubr.f32.mxu0 0.0
  %1199 = vmatmul.mubr.f32.gmra.mrb[0].mxu0 %v679
  %v1200 = vpop.f32.mrb[0].mxu0
  %v1201 = vadd.f32 0.0, %v1200
  %v1202 = vpop.f32.mrb[0].mxu0
  %1203 = vmatprep.mubr.f32.mxu0 0.0
  %1204 = vmatmul.mubr.f32.gmra.mrb[0].mxu0 %v682
  %v1205 = vpop.f32.mrb[0].mxu0
  %v1206 = vadd.f32 0.0, %v1205
  %v1207 = vpop.f32.mrb[0].mxu0
  %1208 = vdwg.mxu0
  %1209 = vmatprep.subr.mxu0 0.0
  %1210 = vmatpush1.msra.mxu0 %v670
  %1211 = vmatprep.subr.mxu0 0.0
  %1212 = vmatpush1.msra.mxu0 %v675
  %1213 = vmatprep.subr.mxu0 0.0
  %1214 = vmatpush1.msra.mxu0 0.0
  %1215 = vmatprep.subr.mxu0 0.0
  %1216 = vmatpush1.msra.mxu0 0.0
  %1217 = vmatprep.subr.mxu0 0.0
  %1218 = vmatpush1.msra.mxu0 0.0
  %1219 = vmatprep.subr.mxu0 0.0
  %1220 = vmatpush1.msra.mxu0 0.0
  %1221 = vmatprep.subr.mxu0 0.0
  %1222 = vmatpush1.msra.mxu0 0.0
  %1223 = vmatprep.subr.mxu0 0.0
  %1224 = vmatpush1.msra.mxu0 0.0
  %1225 = vmatprep.subr.mxu0 0.0
  %1226 = vmatpush1.msra.mxu0 0.0
  %1227 = vmatprep.subr.mxu0 0.0
  %1228 = vmatpush1.msra.mxu0 0.0
  %1229 = vmatprep.subr.mxu0 0.0
  %1230 = vmatpush1.msra.mxu0 0.0
  %1231 = vmatprep.subr.mxu0 0.0
  %1232 = vmatpush1.msra.mxu0 0.0
  %1233 = vmatprep.subr.mxu0 0.0
  %1234 = vmatpush1.msra.mxu0 0.0
  %1235 = vmatprep.subr.mxu0 0.0
  %1236 = vmatpush1.msra.mxu0 0.0
  %1237 = vmatprep.subr.mxu0 0.0
  %1238 = vmatpush1.msra.mxu0 0.0
  %1239 = vmatprep.subr.mxu0 0.0
  %1240 = vmatpush1.msra.mxu0 0.0
  %1241 = vmatprep.subr.mxu0 0.0
  %1242 = vmatpush1.msra.mxu0 0.0
  %1243 = vmatprep.subr.mxu0 0.0
  %1244 = vmatpush1.msra.mxu0 0.0
  %1245 = vmatprep.subr.mxu0 0.0
  %1246 = vmatpush1.msra.mxu0 0.0
  %1247 = vmatprep.subr.mxu0 0.0
  %1248 = vmatpush1.msra.mxu0 0.0
  %1249 = vmatprep.subr.mxu0 0.0
  %1250 = vmatpush1.msra.mxu0 0.0
  %1251 = vmatprep.subr.mxu0 0.0
  %1252 = vmatpush1.msra.mxu0 0.0
  %1253 = vmatprep.subr.mxu0 0.0
  %1254 = vmatpush1.msra.mxu0 0.0
  %1255 = vmatprep.subr.mxu0 0.0
  %1256 = vmatpush1.msra.mxu0 0.0
  %1257 = vmatprep.subr.mxu0 0.0
  %1258 = vmatpush1.msra.mxu0 0.0
  %1259 = vmatprep.subr.mxu0 0.0
  %1260 = vmatpush1.msra.mxu0 0.0
  %1261 = vmatprep.subr.mxu0 0.0
  %1262 = vmatpush1.msra.mxu0 0.0
  %1263 = vmatprep.subr.mxu0 0.0
  %1264 = vmatpush1.msra.mxu0 0.0
  %1265 = vmatprep.subr.mxu0 0.0
  %1266 = vmatpush1.msra.mxu0 0.0
  %1267 = vmatprep.subr.mxu0 0.0
  %1268 = vmatpush1.msra.mxu0 0.0
  %1269 = vmatprep.subr.mxu0 0.0
  %1270 = vmatpush1.msra.mxu0 0.0
  %1271 = vmatprep.subr.mxu0 0.0
  %1272 = vmatpush1.msra.mxu0 0.0
  %1273 = vmatprep.mubr.f32.mxu0 0.0
  %1274 = vmatmul.mubr.f32.gmra.mrb[0].mxu0 %v679
  %v1275 = vpop.f32.mrb[0].mxu0
  %v1276 = vadd.f32 0.0, %v1275
  %v1277 = vpop.f32.mrb[0].mxu0
  %1278 = vmatprep.mubr.f32.mxu0 0.0
  %1279 = vmatmul.mubr.f32.gmra.mrb[0].mxu0 %v682
  %v1280 = vpop.f32.mrb[0].mxu0
  %v1281 = vadd.f32 0.0, %v1280
  %v1282 = vpop.f32.mrb[0].mxu0
  %1283 = vdwg.mxu0
  %1284 = vst.msk [vmem:[%s2] sm:$0xff] %vm29, %v751
  %1285 = vst.msk [vmem:[%s2 + $0x8] sm:$0xff] %vm29, %v756
  %1286 = vst.msk [vmem:[%s2 + $0x10] sm:$0xff] %vm29, %v826
  %1287 = vst.msk [vmem:[%s2 + $0x18] sm:$0xff] %vm29, %v831
  %1288 = vst.msk [vmem:[%s2 + $0x20] sm:$0xff] %vm29, %v901
  %1289 = vst.msk [vmem:[%s2 + $0x28] sm:$0xff] %vm29, %v906
  %1290 = vst.msk [vmem:[%s2 + $0x30] sm:$0xff] %vm29, %v976
  %1291 = vst.msk [vmem:[%s2 + $0x38] sm:$0xff] %vm29, %v981
  %1292 = vst.msk [vmem:[%s2 + $0x40] sm:$0xff] %vm29, %v1051
  %1293 = vst.msk [vmem:[%s2 + $0x48] sm:$0xff] %vm29, %v1056
  %1294 = vst.msk [vmem:[%s2 + $0x50] sm:$0xff] %vm29, %v1126
  %1295 = vst.msk [vmem:[%s2 + $0x58] sm:$0xff] %vm29, %v1131
  %1296 = vst.msk [vmem:[%s2 + $0x60] sm:$0xff] %vm29, %v1201
  %1297 = vst.msk [vmem:[%s2 + $0x68] sm:$0xff] %vm29, %v1206
  %1298 = vst.msk [vmem:[%s2 + $0x70] sm:$0xff] %vm29, %v1276
  %1299 = vst.msk [vmem:[%s2 + $0x78] sm:$0xff] %vm29, %v1281
  // Predicated region
  $region10: #{a_call__.3} parent=0 // pred_check
    _
  $region11: #{a_call__.3} parent=0 // pred_check_branch
    %1301 = sbr.rel (0) target = $region13
  $region12: #{a_call__.3} parent=0 // pred_region
    _
  $region13: #{a_call__.3} parent=0 // pred_fallthru
    _
  // Predicated region
  $region14: #{a_call__.3} parent=0 // pred_check
    _
  $region15: #{a_call__.3} parent=0 // pred_check_branch
    %1303 = sbr.rel (0) target = $region17
  $region16: #{a_call__.3} parent=0 // pred_region
    _
  $region17: #{a_call__.3} parent=0 // pred_fallthru
    _

// kernel: a_call__.4
$region0: #{a_call__.4}
  #allocation0 [shape = 'u32[]', space=smem, size = 0x4, offset = 0x4, fixed_abs, tag = 'smem constant byte address 0x4 - core index']
  #allocation1 [shape = 'u32[144,128]{1,0:T(1,128)}', space=vmem, size = 0x12000, scoped, tag = 'internal scratch']
  %s0 = inlined_call_operand.vmem [shape: f32[8,16,16], index: 0, kind: input, shape index: {}]
  %s1 = inlined_call_operand.vmem [shape: f32[8,1,16], index: 1, kind: input, shape index: {}]
  %s2 = inlined_call_operand.vmem [shape: f32[16,16], index: 2, kind: output, shape index: {}]
  %s3 = sld [smem:[#allocation0]]
  $region26: #{a_call__.4} parent=0
    _
  %s5 = ssub.s32 1, %s3
  %s6 = scalar_select 0, %s5, %s3
  // Predicated region
  $region2: #{a_call__.4} parent=0 // pred_check
    _
  $region3: #{a_call__.4} parent=0 // pred_check_branch
    %8 = sbr.rel (0) target = $region5
  $region4: #{a_call__.4} parent=0 // pred_region
    _
  $region5: #{a_call__.4} parent=0 // pred_fallthru
    _
  // Predicated region
  $region6: #{a_call__.4} parent=0 // pred_check
    _
  $region7: #{a_call__.4} parent=0 // pred_check_branch
    %10 = sbr.rel (0) target = $region9
  $region8: #{a_call__.4} parent=0 // pred_region
    _
  $region9: #{a_call__.4} parent=0 // pred_fallthru
    _
  %p11 = scmp.eq.s32.totalorder 0, 0
  // Predicated region
  $region10: #{a_call__.4} parent=0 // pred_check
    %p12 = pneg %p11
  $region11: #{a_call__.4} parent=0 // pred_check_branch
    %14 = sbr.rel (%p12) target = $region13
  $region12: #{a_call__.4} parent=0 // pred_region
    %vm15 = vcmask 130048
    %16 = vst.msk [vmem:[%s2] sm:$0xff] %vm15, 0.0
    %17 = vst.msk [vmem:[%s2 + $0x8] sm:$0xff] %vm15, 0.0
  $region13: #{a_call__.4} parent=0 // pred_fallthru
    _
  %v18 = vld [vmem:[%s0] sm:$0xff]
  %v19 = vld [vmem:[%s0 + $0x8] sm:$0xff]
  %v20 = vld [vmem:[%s0 + $0x10] sm:$0xff]
  %v21 = vld [vmem:[%s0 + $0x18] sm:$0xff]
  %v22 = vld [vmem:[%s0 + $0x20] sm:$0xff]
  %v23 = vld [vmem:[%s0 + $0x28] sm:$0xff]
  %v24 = vld [vmem:[%s0 + $0x30] sm:$0xff]
  %v25 = vld [vmem:[%s0 + $0x38] sm:$0xff]
  %v26 = vld [vmem:[%s0 + $0x40] sm:$0xff]
  %v27 = vld [vmem:[%s0 + $0x48] sm:$0xff]
  %v28 = vld [vmem:[%s0 + $0x50] sm:$0xff]
  %v29 = vld [vmem:[%s0 + $0x58] sm:$0xff]
  %v30 = vld [vmem:[%s0 + $0x60] sm:$0xff]
  %v31 = vld [vmem:[%s0 + $0x68] sm:$0xff]
  %v32 = vld [vmem:[%s0 + $0x70] sm:$0xff]
  %v33 = vld [vmem:[%s0 + $0x78] sm:$0xff]
  %v34 = vld [vmem:[%s1] sm:$0x1]
  %v35 = vld [vmem:[%s1 + $0x1] sm:$0x1]
  %v36 = vld [vmem:[%s1 + $0x2] sm:$0x1]
  %v37 = vld [vmem:[%s1 + $0x3] sm:$0x1]
  %v38 = vld [vmem:[%s1 + $0x4] sm:$0x1]
  %v39 = vld [vmem:[%s1 + $0x5] sm:$0x1]
  %v40 = vld [vmem:[%s1 + $0x6] sm:$0x1]
  %v41 = vld [vmem:[%s1 + $0x7] sm:$0x1]
  %v42 = vmax.f32 %v34, 1e-12
  %v43 = vmax.f32 %v35, 1e-12
  %v44 = vmax.f32 %v36, 1e-12
  %v45 = vmax.f32 %v37, 1e-12
  %v46 = vmax.f32 %v38, 1e-12
  %v47 = vmax.f32 %v39, 1e-12
  %v48 = vmax.f32 %v40, 1e-12
  %v49 = vmax.f32 %v41, 1e-12
  %v50 = vlog2.pop %v42
  %v51 = vmul.f32 %v50, 0.6931472
  %v52 = vlog2.pop %v43
  %v53 = vmul.f32 %v52, 0.6931472
  %v54 = vlog2.pop %v44
  %v55 = vmul.f32 %v54, 0.6931472
  %v56 = vlog2.pop %v45
  %v57 = vmul.f32 %v56, 0.6931472
  %v58 = vlog2.pop %v46
  %v59 = vmul.f32 %v58, 0.6931472
  %v60 = vlog2.pop %v47
  %v61 = vmul.f32 %v60, 0.6931472
  %v62 = vlog2.pop %v48
  %v63 = vmul.f32 %v62, 0.6931472
  %v64 = vlog2.pop %v49
  %v65 = vmul.f32 %v64, 0.6931472
  %v74 = vlaneseq
  %v75 = vshrl.u32 %v74, 7
  %v76 = vsub.s32 0, %v75
  %v77 = vrot.slane %v51, %v76
  %v78 = vlaneseq
  %v79 = vshrl.u32 %v78, 7
  %v80 = vsub.s32 0, %v79
  %v81 = vrot.slane %v53, %v80
  %v82 = vlaneseq
  %v83 = vshrl.u32 %v82, 7
  %v84 = vsub.s32 0, %v83
  %v85 = vrot.slane %v55, %v84
  %v86 = vlaneseq
  %v87 = vshrl.u32 %v86, 7
  %v88 = vsub.s32 0, %v87
  %v89 = vrot.slane %v57, %v88
  %v90 = vlaneseq
  %v91 = vshrl.u32 %v90, 7
  %v92 = vsub.s32 0, %v91
  %v93 = vrot.slane %v59, %v92
  %v94 = vlaneseq
  %v95 = vshrl.u32 %v94, 7
  %v96 = vsub.s32 0, %v95
  %v97 = vrot.slane %v61, %v96
  %v98 = vlaneseq
  %v99 = vshrl.u32 %v98, 7
  %v100 = vsub.s32 0, %v99
  %v101 = vrot.slane %v63, %v100
  %v102 = vlaneseq
  %v103 = vshrl.u32 %v102, 7
  %v104 = vsub.s32 0, %v103
  %v105 = vrot.slane %v65, %v104
  %v114 = vmul.f32 %v18, %v77
  %v115 = vmul.f32 %v19, %v77
  %v116 = vmul.f32 %v20, %v81
  %v117 = vmul.f32 %v21, %v81
  %v118 = vmul.f32 %v22, %v85
  %v119 = vmul.f32 %v23, %v85
  %v120 = vmul.f32 %v24, %v89
  %v121 = vmul.f32 %v25, %v89
  %v122 = vmul.f32 %v26, %v93
  %v123 = vmul.f32 %v27, %v93
  %v124 = vmul.f32 %v28, %v97
  %v125 = vmul.f32 %v29, %v97
  %v126 = vmul.f32 %v30, %v101
  %v127 = vmul.f32 %v31, %v101
  %v128 = vmul.f32 %v32, %v105
  %v129 = vmul.f32 %v33, %v105
  %vm130 = vcmask 130048
  %v132 = vsel %vm130, %v114, 0
  %v135 = vsel %vm130, %v115, 0
  %v138 = vsel %vm130, %v18, 0
  %v141 = vsel %vm130, %v19, 0
  %143 = vmatprep.subr.mxu0 0.0
  %144 = vmatpush1.xpose.msra.mxu0 %v138
  %145 = vmatprep.subr.mxu0 0.0
  %146 = vmatpush1.xpose.msra.mxu0 %v141
  %147 = vmatprep.subr.mxu0 0.0
  %148 = vmatpush1.xpose.msra.mxu0 0.0
  %149 = vmatprep.subr.mxu0 0.0
  %150 = vmatpush1.xpose.msra.mxu0 0.0
  %151 = vmatprep.subr.mxu0 0.0
  %152 = vmatpush1.xpose.msra.mxu0 0.0
  %153 = vmatprep.subr.mxu0 0.0
  %154 = vmatpush1.xpose.msra.mxu0 0.0
  %155 = vmatprep.subr.mxu0 0.0
  %156 = vmatpush1.xpose.msra.mxu0 0.0
  %157 = vmatprep.subr.mxu0 0.0
  %158 = vmatpush1.xpose.msra.mxu0 0.0
  %159 = vmatprep.subr.mxu0 0.0
  %160 = vmatpush1.xpose.msra.mxu0 0.0
  %161 = vmatprep.subr.mxu0 0.0
  %162 = vmatpush1.xpose.msra.mxu0 0.0
  %163 = vmatprep.subr.mxu0 0.0
  %164 = vmatpush1.xpose.msra.mxu0 0.0
  %165 = vmatprep.subr.mxu0 0.0
  %166 = vmatpush1.xpose.msra.mxu0 0.0
  %167 = vmatprep.subr.mxu0 0.0
  %168 = vmatpush1.xpose.msra.mxu0 0.0
  %169 = vmatprep.subr.mxu0 0.0
  %170 = vmatpush1.xpose.msra.mxu0 0.0
  %171 = vmatprep.subr.mxu0 0.0
  %172 = vmatpush1.xpose.msra.mxu0 0.0
  %173 = vmatprep.subr.mxu0 0.0
  %174 = vmatpush1.xpose.msra.mxu0 0.0
  %175 = vmatprep.subr.mxu0 0.0
  %176 = vmatpush1.xpose.msra.mxu0 0.0
  %177 = vmatprep.subr.mxu0 0.0
  %178 = vmatpush1.xpose.msra.mxu0 0.0
  %179 = vmatprep.subr.mxu0 0.0
  %180 = vmatpush1.xpose.msra.mxu0 0.0
  %181 = vmatprep.subr.mxu0 0.0
  %182 = vmatpush1.xpose.msra.mxu0 0.0
  %183 = vmatprep.subr.mxu0 0.0
  %184 = vmatpush1.xpose.msra.mxu0 0.0
  %185 = vmatprep.subr.mxu0 0.0
  %186 = vmatpush1.xpose.msra.mxu0 0.0
  %187 = vmatprep.subr.mxu0 0.0
  %188 = vmatpush1.xpose.msra.mxu0 0.0
  %189 = vmatprep.subr.mxu0 0.0
  %190 = vmatpush1.xpose.msra.mxu0 0.0
  %191 = vmatprep.subr.mxu0 0.0
  %192 = vmatpush1.xpose.msra.mxu0 0.0
  %193 = vmatprep.subr.mxu0 0.0
  %194 = vmatpush1.xpose.msra.mxu0 0.0
  %195 = vmatprep.subr.mxu0 0.0
  %196 = vmatpush1.xpose.msra.mxu0 0.0
  %197 = vmatprep.subr.mxu0 0.0
  %198 = vmatpush1.xpose.msra.mxu0 0.0
  %199 = vmatprep.subr.mxu0 0.0
  %200 = vmatpush1.xpose.msra.mxu0 0.0
  %201 = vmatprep.subr.mxu0 0.0
  %202 = vmatpush1.xpose.msra.mxu0 0.0
  %203 = vmatprep.subr.mxu0 0.0
  %204 = vmatpush1.xpose.msra.mxu0 0.0
  %205 = vmatprep.subr.mxu0 0.0
  %206 = vmatpush1.xpose.msra.mxu0 0.0
  %207 = vmatprep.mubr.f32.mxu0 0.0
  %208 = vmatmul.mubr.f32.gmra.mrb[0].mxu0 %v132
  %v209 = vpop.f32.mrb[0].mxu0
  %v210 = vadd.f32 0.0, %v209
  %v211 = vpop.f32.mrb[0].mxu0
  %212 = vmatprep.mubr.f32.mxu0 0.0
  %213 = vmatmul.mubr.f32.gmra.mrb[0].mxu0 %v135
  %v214 = vpop.f32.mrb[0].mxu0
  %v215 = vadd.f32 0.0, %v214
  %v216 = vpop.f32.mrb[0].mxu0
  %217 = vdwg.mxu0
  %v219 = vsel %vm130, %v116, 0
  %v222 = vsel %vm130, %v117, 0
  %v225 = vsel %vm130, %v20, 0
  %v228 = vsel %vm130, %v21, 0
  %230 = vmatprep.subr.mxu0 0.0
  %231 = vmatpush1.xpose.msra.mxu0 %v225
  %232 = vmatprep.subr.mxu0 0.0
  %233 = vmatpush1.xpose.msra.mxu0 %v228
  %234 = vmatprep.subr.mxu0 0.0
  %235 = vmatpush1.xpose.msra.mxu0 0.0
  %236 = vmatprep.subr.mxu0 0.0
  %237 = vmatpush1.xpose.msra.mxu0 0.0
  %238 = vmatprep.subr.mxu0 0.0
  %239 = vmatpush1.xpose.msra.mxu0 0.0
  %240 = vmatprep.subr.mxu0 0.0
  %241 = vmatpush1.xpose.msra.mxu0 0.0
  %242 = vmatprep.subr.mxu0 0.0
  %243 = vmatpush1.xpose.msra.mxu0 0.0
  %244 = vmatprep.subr.mxu0 0.0
  %245 = vmatpush1.xpose.msra.mxu0 0.0
  %246 = vmatprep.subr.mxu0 0.0
  %247 = vmatpush1.xpose.msra.mxu0 0.0
  %248 = vmatprep.subr.mxu0 0.0
  %249 = vmatpush1.xpose.msra.mxu0 0.0
  %250 = vmatprep.subr.mxu0 0.0
  %251 = vmatpush1.xpose.msra.mxu0 0.0
  %252 = vmatprep.subr.mxu0 0.0
  %253 = vmatpush1.xpose.msra.mxu0 0.0
  %254 = vmatprep.subr.mxu0 0.0
  %255 = vmatpush1.xpose.msra.mxu0 0.0
  %256 = vmatprep.subr.mxu0 0.0
  %257 = vmatpush1.xpose.msra.mxu0 0.0
  %258 = vmatprep.subr.mxu0 0.0
  %259 = vmatpush1.xpose.msra.mxu0 0.0
  %260 = vmatprep.subr.mxu0 0.0
  %261 = vmatpush1.xpose.msra.mxu0 0.0
  %262 = vmatprep.subr.mxu0 0.0
  %263 = vmatpush1.xpose.msra.mxu0 0.0
  %264 = vmatprep.subr.mxu0 0.0
  %265 = vmatpush1.xpose.msra.mxu0 0.0
  %266 = vmatprep.subr.mxu0 0.0
  %267 = vmatpush1.xpose.msra.mxu0 0.0
  %268 = vmatprep.subr.mxu0 0.0
  %269 = vmatpush1.xpose.msra.mxu0 0.0
  %270 = vmatprep.subr.mxu0 0.0
  %271 = vmatpush1.xpose.msra.mxu0 0.0
  %272 = vmatprep.subr.mxu0 0.0
  %273 = vmatpush1.xpose.msra.mxu0 0.0
  %274 = vmatprep.subr.mxu0 0.0
  %275 = vmatpush1.xpose.msra.mxu0 0.0
  %276 = vmatprep.subr.mxu0 0.0
  %277 = vmatpush1.xpose.msra.mxu0 0.0
  %278 = vmatprep.subr.mxu0 0.0
  %279 = vmatpush1.xpose.msra.mxu0 0.0
  %280 = vmatprep.subr.mxu0 0.0
  %281 = vmatpush1.xpose.msra.mxu0 0.0
  %282 = vmatprep.subr.mxu0 0.0
  %283 = vmatpush1.xpose.msra.mxu0 0.0
  %284 = vmatprep.subr.mxu0 0.0
  %285 = vmatpush1.xpose.msra.mxu0 0.0
  %286 = vmatprep.subr.mxu0 0.0
  %287 = vmatpush1.xpose.msra.mxu0 0.0
  %288 = vmatprep.subr.mxu0 0.0
  %289 = vmatpush1.xpose.msra.mxu0 0.0
  %290 = vmatprep.subr.mxu0 0.0
  %291 = vmatpush1.xpose.msra.mxu0 0.0
  %292 = vmatprep.subr.mxu0 0.0
  %293 = vmatpush1.xpose.msra.mxu0 0.0
  %294 = vmatprep.mubr.f32.mxu0 0.0
  %295 = vmatmul.mubr.f32.gmra.mrb[0].mxu0 %v219
  %v296 = vpop.f32.mrb[0].mxu0
  %v297 = vadd.f32 0.0, %v296
  %v298 = vpop.f32.mrb[0].mxu0
  %299 = vmatprep.mubr.f32.mxu0 0.0
  %300 = vmatmul.mubr.f32.gmra.mrb[0].mxu0 %v222
  %v301 = vpop.f32.mrb[0].mxu0
  %v302 = vadd.f32 0.0, %v301
  %v303 = vpop.f32.mrb[0].mxu0
  %304 = vdwg.mxu0
  %v306 = vsel %vm130, %v118, 0
  %v309 = vsel %vm130, %v119, 0
  %v312 = vsel %vm130, %v22, 0
  %v315 = vsel %vm130, %v23, 0
  %317 = vmatprep.subr.mxu0 0.0
  %318 = vmatpush1.xpose.msra.mxu0 %v312
  %319 = vmatprep.subr.mxu0 0.0
  %320 = vmatpush1.xpose.msra.mxu0 %v315
  %321 = vmatprep.subr.mxu0 0.0
  %322 = vmatpush1.xpose.msra.mxu0 0.0
  %323 = vmatprep.subr.mxu0 0.0
  %324 = vmatpush1.xpose.msra.mxu0 0.0
  %325 = vmatprep.subr.mxu0 0.0
  %326 = vmatpush1.xpose.msra.mxu0 0.0
  %327 = vmatprep.subr.mxu0 0.0
  %328 = vmatpush1.xpose.msra.mxu0 0.0
  %329 = vmatprep.subr.mxu0 0.0
  %330 = vmatpush1.xpose.msra.mxu0 0.0
  %331 = vmatprep.subr.mxu0 0.0
  %332 = vmatpush1.xpose.msra.mxu0 0.0
  %333 = vmatprep.subr.mxu0 0.0
  %334 = vmatpush1.xpose.msra.mxu0 0.0
  %335 = vmatprep.subr.mxu0 0.0
  %336 = vmatpush1.xpose.msra.mxu0 0.0
  %337 = vmatprep.subr.mxu0 0.0
  %338 = vmatpush1.xpose.msra.mxu0 0.0
  %339 = vmatprep.subr.mxu0 0.0
  %340 = vmatpush1.xpose.msra.mxu0 0.0
  %341 = vmatprep.subr.mxu0 0.0
  %342 = vmatpush1.xpose.msra.mxu0 0.0
  %343 = vmatprep.subr.mxu0 0.0
  %344 = vmatpush1.xpose.msra.mxu0 0.0
  %345 = vmatprep.subr.mxu0 0.0
  %346 = vmatpush1.xpose.msra.mxu0 0.0
  %347 = vmatprep.subr.mxu0 0.0
  %348 = vmatpush1.xpose.msra.mxu0 0.0
  %349 = vmatprep.subr.mxu0 0.0
  %350 = vmatpush1.xpose.msra.mxu0 0.0
  %351 = vmatprep.subr.mxu0 0.0
  %352 = vmatpush1.xpose.msra.mxu0 0.0
  %353 = vmatprep.subr.mxu0 0.0
  %354 = vmatpush1.xpose.msra.mxu0 0.0
  %355 = vmatprep.subr.mxu0 0.0
  %356 = vmatpush1.xpose.msra.mxu0 0.0
  %357 = vmatprep.subr.mxu0 0.0
  %358 = vmatpush1.xpose.msra.mxu0 0.0
  %359 = vmatprep.subr.mxu0 0.0
  %360 = vmatpush1.xpose.msra.mxu0 0.0
  %361 = vmatprep.subr.mxu0 0.0
  %362 = vmatpush1.xpose.msra.mxu0 0.0
  %363 = vmatprep.subr.mxu0 0.0
  %364 = vmatpush1.xpose.msra.mxu0 0.0
  %365 = vmatprep.subr.mxu0 0.0
  %366 = vmatpush1.xpose.msra.mxu0 0.0
  %367 = vmatprep.subr.mxu0 0.0
  %368 = vmatpush1.xpose.msra.mxu0 0.0
  %369 = vmatprep.subr.mxu0 0.0
  %370 = vmatpush1.xpose.msra.mxu0 0.0
  %371 = vmatprep.subr.mxu0 0.0
  %372 = vmatpush1.xpose.msra.mxu0 0.0
  %373 = vmatprep.subr.mxu0 0.0
  %374 = vmatpush1.xpose.msra.mxu0 0.0
  %375 = vmatprep.subr.mxu0 0.0
  %376 = vmatpush1.xpose.msra.mxu0 0.0
  %377 = vmatprep.subr.mxu0 0.0
  %378 = vmatpush1.xpose.msra.mxu0 0.0
  %379 = vmatprep.subr.mxu0 0.0
  %380 = vmatpush1.xpose.msra.mxu0 0.0
  %381 = vmatprep.mubr.f32.mxu0 0.0
  %382 = vmatmul.mubr.f32.gmra.mrb[0].mxu0 %v306
  %v383 = vpop.f32.mrb[0].mxu0
  %v384 = vadd.f32 0.0, %v383
  %v385 = vpop.f32.mrb[0].mxu0
  %386 = vmatprep.mubr.f32.mxu0 0.0
  %387 = vmatmul.mubr.f32.gmra.mrb[0].mxu0 %v309
  %v388 = vpop.f32.mrb[0].mxu0
  %v389 = vadd.f32 0.0, %v388
  %v390 = vpop.f32.mrb[0].mxu0
  %391 = vdwg.mxu0
  %v393 = vsel %vm130, %v120, 0
  %v396 = vsel %vm130, %v121, 0
  %v399 = vsel %vm130, %v24, 0
  %v402 = vsel %vm130, %v25, 0
  %404 = vmatprep.subr.mxu0 0.0
  %405 = vmatpush1.xpose.msra.mxu0 %v399
  %406 = vmatprep.subr.mxu0 0.0
  %407 = vmatpush1.xpose.msra.mxu0 %v402
  %408 = vmatprep.subr.mxu0 0.0
  %409 = vmatpush1.xpose.msra.mxu0 0.0
  %410 = vmatprep.subr.mxu0 0.0
  %411 = vmatpush1.xpose.msra.mxu0 0.0
  %412 = vmatprep.subr.mxu0 0.0
  %413 = vmatpush1.xpose.msra.mxu0 0.0
  %414 = vmatprep.subr.mxu0 0.0
  %415 = vmatpush1.xpose.msra.mxu0 0.0
  %416 = vmatprep.subr.mxu0 0.0
  %417 = vmatpush1.xpose.msra.mxu0 0.0
  %418 = vmatprep.subr.mxu0 0.0
  %419 = vmatpush1.xpose.msra.mxu0 0.0
  %420 = vmatprep.subr.mxu0 0.0
  %421 = vmatpush1.xpose.msra.mxu0 0.0
  %422 = vmatprep.subr.mxu0 0.0
  %423 = vmatpush1.xpose.msra.mxu0 0.0
  %424 = vmatprep.subr.mxu0 0.0
  %425 = vmatpush1.xpose.msra.mxu0 0.0
  %426 = vmatprep.subr.mxu0 0.0
  %427 = vmatpush1.xpose.msra.mxu0 0.0
  %428 = vmatprep.subr.mxu0 0.0
  %429 = vmatpush1.xpose.msra.mxu0 0.0
  %430 = vmatprep.subr.mxu0 0.0
  %431 = vmatpush1.xpose.msra.mxu0 0.0
  %432 = vmatprep.subr.mxu0 0.0
  %433 = vmatpush1.xpose.msra.mxu0 0.0
  %434 = vmatprep.subr.mxu0 0.0
  %435 = vmatpush1.xpose.msra.mxu0 0.0
  %436 = vmatprep.subr.mxu0 0.0
  %437 = vmatpush1.xpose.msra.mxu0 0.0
  %438 = vmatprep.subr.mxu0 0.0
  %439 = vmatpush1.xpose.msra.mxu0 0.0
  %440 = vmatprep.subr.mxu0 0.0
  %441 = vmatpush1.xpose.msra.mxu0 0.0
  %442 = vmatprep.subr.mxu0 0.0
  %443 = vmatpush1.xpose.msra.mxu0 0.0
  %444 = vmatprep.subr.mxu0 0.0
  %445 = vmatpush1.xpose.msra.mxu0 0.0
  %446 = vmatprep.subr.mxu0 0.0
  %447 = vmatpush1.xpose.msra.mxu0 0.0
  %448 = vmatprep.subr.mxu0 0.0
  %449 = vmatpush1.xpose.msra.mxu0 0.0
  %450 = vmatprep.subr.mxu0 0.0
  %451 = vmatpush1.xpose.msra.mxu0 0.0
  %452 = vmatprep.subr.mxu0 0.0
  %453 = vmatpush1.xpose.msra.mxu0 0.0
  %454 = vmatprep.subr.mxu0 0.0
  %455 = vmatpush1.xpose.msra.mxu0 0.0
  %456 = vmatprep.subr.mxu0 0.0
  %457 = vmatpush1.xpose.msra.mxu0 0.0
  %458 = vmatprep.subr.mxu0 0.0
  %459 = vmatpush1.xpose.msra.mxu0 0.0
  %460 = vmatprep.subr.mxu0 0.0
  %461 = vmatpush1.xpose.msra.mxu0 0.0
  %462 = vmatprep.subr.mxu0 0.0
  %463 = vmatpush1.xpose.msra.mxu0 0.0
  %464 = vmatprep.subr.mxu0 0.0
  %465 = vmatpush1.xpose.msra.mxu0 0.0
  %466 = vmatprep.subr.mxu0 0.0
  %467 = vmatpush1.xpose.msra.mxu0 0.0
  %468 = vmatprep.mubr.f32.mxu0 0.0
  %469 = vmatmul.mubr.f32.gmra.mrb[0].mxu0 %v393
  %v470 = vpop.f32.mrb[0].mxu0
  %v471 = vadd.f32 0.0, %v470
  %v472 = vpop.f32.mrb[0].mxu0
  %473 = vmatprep.mubr.f32.mxu0 0.0
  %474 = vmatmul.mubr.f32.gmra.mrb[0].mxu0 %v396
  %v475 = vpop.f32.mrb[0].mxu0
  %v476 = vadd.f32 0.0, %v475
  %v477 = vpop.f32.mrb[0].mxu0
  %478 = vdwg.mxu0
  %v480 = vsel %vm130, %v122, 0
  %v483 = vsel %vm130, %v123, 0
  %v486 = vsel %vm130, %v26, 0
  %v489 = vsel %vm130, %v27, 0
  %491 = vmatprep.subr.mxu0 0.0
  %492 = vmatpush1.xpose.msra.mxu0 %v486
  %493 = vmatprep.subr.mxu0 0.0
  %494 = vmatpush1.xpose.msra.mxu0 %v489
  %495 = vmatprep.subr.mxu0 0.0
  %496 = vmatpush1.xpose.msra.mxu0 0.0
  %497 = vmatprep.subr.mxu0 0.0
  %498 = vmatpush1.xpose.msra.mxu0 0.0
  %499 = vmatprep.subr.mxu0 0.0
  %500 = vmatpush1.xpose.msra.mxu0 0.0
  %501 = vmatprep.subr.mxu0 0.0
  %502 = vmatpush1.xpose.msra.mxu0 0.0
  %503 = vmatprep.subr.mxu0 0.0
  %504 = vmatpush1.xpose.msra.mxu0 0.0
  %505 = vmatprep.subr.mxu0 0.0
  %506 = vmatpush1.xpose.msra.mxu0 0.0
  %507 = vmatprep.subr.mxu0 0.0
  %508 = vmatpush1.xpose.msra.mxu0 0.0
  %509 = vmatprep.subr.mxu0 0.0
  %510 = vmatpush1.xpose.msra.mxu0 0.0
  %511 = vmatprep.subr.mxu0 0.0
  %512 = vmatpush1.xpose.msra.mxu0 0.0
  %513 = vmatprep.subr.mxu0 0.0
  %514 = vmatpush1.xpose.msra.mxu0 0.0
  %515 = vmatprep.subr.mxu0 0.0
  %516 = vmatpush1.xpose.msra.mxu0 0.0
  %517 = vmatprep.subr.mxu0 0.0
  %518 = vmatpush1.xpose.msra.mxu0 0.0
  %519 = vmatprep.subr.mxu0 0.0
  %520 = vmatpush1.xpose.msra.mxu0 0.0
  %521 = vmatprep.subr.mxu0 0.0
  %522 = vmatpush1.xpose.msra.mxu0 0.0
  %523 = vmatprep.subr.mxu0 0.0
  %524 = vmatpush1.xpose.msra.mxu0 0.0
  %525 = vmatprep.subr.mxu0 0.0
  %526 = vmatpush1.xpose.msra.mxu0 0.0
  %527 = vmatprep.subr.mxu0 0.0
  %528 = vmatpush1.xpose.msra.mxu0 0.0
  %529 = vmatprep.subr.mxu0 0.0
  %530 = vmatpush1.xpose.msra.mxu0 0.0
  %531 = vmatprep.subr.mxu0 0.0
  %532 = vmatpush1.xpose.msra.mxu0 0.0
  %533 = vmatprep.subr.mxu0 0.0
  %534 = vmatpush1.xpose.msra.mxu0 0.0
  %535 = vmatprep.subr.mxu0 0.0
  %536 = vmatpush1.xpose.msra.mxu0 0.0
  %537 = vmatprep.subr.mxu0 0.0
  %538 = vmatpush1.xpose.msra.mxu0 0.0
  %539 = vmatprep.subr.mxu0 0.0
  %540 = vmatpush1.xpose.msra.mxu0 0.0
  %541 = vmatprep.subr.mxu0 0.0
  %542 = vmatpush1.xpose.msra.mxu0 0.0
  %543 = vmatprep.subr.mxu0 0.0
  %544 = vmatpush1.xpose.msra.mxu0 0.0
  %545 = vmatprep.subr.mxu0 0.0
  %546 = vmatpush1.xpose.msra.mxu0 0.0
  %547 = vmatprep.subr.mxu0 0.0
  %548 = vmatpush1.xpose.msra.mxu0 0.0
  %549 = vmatprep.subr.mxu0 0.0
  %550 = vmatpush1.xpose.msra.mxu0 0.0
  %551 = vmatprep.subr.mxu0 0.0
  %552 = vmatpush1.xpose.msra.mxu0 0.0
  %553 = vmatprep.subr.mxu0 0.0
  %554 = vmatpush1.xpose.msra.mxu0 0.0
  %555 = vmatprep.mubr.f32.mxu0 0.0
  %556 = vmatmul.mubr.f32.gmra.mrb[0].mxu0 %v480
  %v557 = vpop.f32.mrb[0].mxu0
  %v558 = vadd.f32 0.0, %v557
  %v559 = vpop.f32.mrb[0].mxu0
  %560 = vmatprep.mubr.f32.mxu0 0.0
  %561 = vmatmul.mubr.f32.gmra.mrb[0].mxu0 %v483
  %v562 = vpop.f32.mrb[0].mxu0
  %v563 = vadd.f32 0.0, %v562
  %v564 = vpop.f32.mrb[0].mxu0
  %565 = vdwg.mxu0
  %v567 = vsel %vm130, %v124, 0
  %v570 = vsel %vm130, %v125, 0
  %v573 = vsel %vm130, %v28, 0
  %v576 = vsel %vm130, %v29, 0
  %578 = vmatprep.subr.mxu0 0.0
  %579 = vmatpush1.xpose.msra.mxu0 %v573
  %580 = vmatprep.subr.mxu0 0.0
  %581 = vmatpush1.xpose.msra.mxu0 %v576
  %582 = vmatprep.subr.mxu0 0.0
  %583 = vmatpush1.xpose.msra.mxu0 0.0
  %584 = vmatprep.subr.mxu0 0.0
  %585 = vmatpush1.xpose.msra.mxu0 0.0
  %586 = vmatprep.subr.mxu0 0.0
  %587 = vmatpush1.xpose.msra.mxu0 0.0
  %588 = vmatprep.subr.mxu0 0.0
  %589 = vmatpush1.xpose.msra.mxu0 0.0
  %590 = vmatprep.subr.mxu0 0.0
  %591 = vmatpush1.xpose.msra.mxu0 0.0
  %592 = vmatprep.subr.mxu0 0.0
  %593 = vmatpush1.xpose.msra.mxu0 0.0
  %594 = vmatprep.subr.mxu0 0.0
  %595 = vmatpush1.xpose.msra.mxu0 0.0
  %596 = vmatprep.subr.mxu0 0.0
  %597 = vmatpush1.xpose.msra.mxu0 0.0
  %598 = vmatprep.subr.mxu0 0.0
  %599 = vmatpush1.xpose.msra.mxu0 0.0
  %600 = vmatprep.subr.mxu0 0.0
  %601 = vmatpush1.xpose.msra.mxu0 0.0
  %602 = vmatprep.subr.mxu0 0.0
  %603 = vmatpush1.xpose.msra.mxu0 0.0
  %604 = vmatprep.subr.mxu0 0.0
  %605 = vmatpush1.xpose.msra.mxu0 0.0
  %606 = vmatprep.subr.mxu0 0.0
  %607 = vmatpush1.xpose.msra.mxu0 0.0
  %608 = vmatprep.subr.mxu0 0.0
  %609 = vmatpush1.xpose.msra.mxu0 0.0
  %610 = vmatprep.subr.mxu0 0.0
  %611 = vmatpush1.xpose.msra.mxu0 0.0
  %612 = vmatprep.subr.mxu0 0.0
  %613 = vmatpush1.xpose.msra.mxu0 0.0
  %614 = vmatprep.subr.mxu0 0.0
  %615 = vmatpush1.xpose.msra.mxu0 0.0
  %616 = vmatprep.subr.mxu0 0.0
  %617 = vmatpush1.xpose.msra.mxu0 0.0
  %618 = vmatprep.subr.mxu0 0.0
  %619 = vmatpush1.xpose.msra.mxu0 0.0
  %620 = vmatprep.subr.mxu0 0.0
  %621 = vmatpush1.xpose.msra.mxu0 0.0
  %622 = vmatprep.subr.mxu0 0.0
  %623 = vmatpush1.xpose.msra.mxu0 0.0
  %624 = vmatprep.subr.mxu0 0.0
  %625 = vmatpush1.xpose.msra.mxu0 0.0
  %626 = vmatprep.subr.mxu0 0.0
  %627 = vmatpush1.xpose.msra.mxu0 0.0
  %628 = vmatprep.subr.mxu0 0.0
  %629 = vmatpush1.xpose.msra.mxu0 0.0
  %630 = vmatprep.subr.mxu0 0.0
  %631 = vmatpush1.xpose.msra.mxu0 0.0
  %632 = vmatprep.subr.mxu0 0.0
  %633 = vmatpush1.xpose.msra.mxu0 0.0
  %634 = vmatprep.subr.mxu0 0.0
  %635 = vmatpush1.xpose.msra.mxu0 0.0
  %636 = vmatprep.subr.mxu0 0.0
  %637 = vmatpush1.xpose.msra.mxu0 0.0
  %638 = vmatprep.subr.mxu0 0.0
  %639 = vmatpush1.xpose.msra.mxu0 0.0
  %640 = vmatprep.subr.mxu0 0.0
  %641 = vmatpush1.xpose.msra.mxu0 0.0
  %642 = vmatprep.mubr.f32.mxu0 0.0
  %643 = vmatmul.mubr.f32.gmra.mrb[0].mxu0 %v567
  %v644 = vpop.f32.mrb[0].mxu0
  %v645 = vadd.f32 0.0, %v644
  %v646 = vpop.f32.mrb[0].mxu0
  %647 = vmatprep.mubr.f32.mxu0 0.0
  %648 = vmatmul.mubr.f32.gmra.mrb[0].mxu0 %v570
  %v649 = vpop.f32.mrb[0].mxu0
  %v650 = vadd.f32 0.0, %v649
  %v651 = vpop.f32.mrb[0].mxu0
  %652 = vdwg.mxu0
  %v654 = vsel %vm130, %v126, 0
  %v657 = vsel %vm130, %v127, 0
  %v660 = vsel %vm130, %v30, 0
  %v663 = vsel %vm130, %v31, 0
  %665 = vmatprep.subr.mxu0 0.0
  %666 = vmatpush1.xpose.msra.mxu0 %v660
  %667 = vmatprep.subr.mxu0 0.0
  %668 = vmatpush1.xpose.msra.mxu0 %v663
  %669 = vmatprep.subr.mxu0 0.0
  %670 = vmatpush1.xpose.msra.mxu0 0.0
  %671 = vmatprep.subr.mxu0 0.0
  %672 = vmatpush1.xpose.msra.mxu0 0.0
  %673 = vmatprep.subr.mxu0 0.0
  %674 = vmatpush1.xpose.msra.mxu0 0.0
  %675 = vmatprep.subr.mxu0 0.0
  %676 = vmatpush1.xpose.msra.mxu0 0.0
  %677 = vmatprep.subr.mxu0 0.0
  %678 = vmatpush1.xpose.msra.mxu0 0.0
  %679 = vmatprep.subr.mxu0 0.0
  %680 = vmatpush1.xpose.msra.mxu0 0.0
  %681 = vmatprep.subr.mxu0 0.0
  %682 = vmatpush1.xpose.msra.mxu0 0.0
  %683 = vmatprep.subr.mxu0 0.0
  %684 = vmatpush1.xpose.msra.mxu0 0.0
  %685 = vmatprep.subr.mxu0 0.0
  %686 = vmatpush1.xpose.msra.mxu0 0.0
  %687 = vmatprep.subr.mxu0 0.0
  %688 = vmatpush1.xpose.msra.mxu0 0.0
  %689 = vmatprep.subr.mxu0 0.0
  %690 = vmatpush1.xpose.msra.mxu0 0.0
  %691 = vmatprep.subr.mxu0 0.0
  %692 = vmatpush1.xpose.msra.mxu0 0.0
  %693 = vmatprep.subr.mxu0 0.0
  %694 = vmatpush1.xpose.msra.mxu0 0.0
  %695 = vmatprep.subr.mxu0 0.0
  %696 = vmatpush1.xpose.msra.mxu0 0.0
  %697 = vmatprep.subr.mxu0 0.0
  %698 = vmatpush1.xpose.msra.mxu0 0.0
  %699 = vmatprep.subr.mxu0 0.0
  %700 = vmatpush1.xpose.msra.mxu0 0.0
  %701 = vmatprep.subr.mxu0 0.0
  %702 = vmatpush1.xpose.msra.mxu0 0.0
  %703 = vmatprep.subr.mxu0 0.0
  %704 = vmatpush1.xpose.msra.mxu0 0.0
  %705 = vmatprep.subr.mxu0 0.0
  %706 = vmatpush1.xpose.msra.mxu0 0.0
  %707 = vmatprep.subr.mxu0 0.0
  %708 = vmatpush1.xpose.msra.mxu0 0.0
  %709 = vmatprep.subr.mxu0 0.0
  %710 = vmatpush1.xpose.msra.mxu0 0.0
  %711 = vmatprep.subr.mxu0 0.0
  %712 = vmatpush1.xpose.msra.mxu0 0.0
  %713 = vmatprep.subr.mxu0 0.0
  %714 = vmatpush1.xpose.msra.mxu0 0.0
  %715 = vmatprep.subr.mxu0 0.0
  %716 = vmatpush1.xpose.msra.mxu0 0.0
  %717 = vmatprep.subr.mxu0 0.0
  %718 = vmatpush1.xpose.msra.mxu0 0.0
  %719 = vmatprep.subr.mxu0 0.0
  %720 = vmatpush1.xpose.msra.mxu0 0.0
  %721 = vmatprep.subr.mxu0 0.0
  %722 = vmatpush1.xpose.msra.mxu0 0.0
  %723 = vmatprep.subr.mxu0 0.0
  %724 = vmatpush1.xpose.msra.mxu0 0.0
  %725 = vmatprep.subr.mxu0 0.0
  %726 = vmatpush1.xpose.msra.mxu0 0.0
  %727 = vmatprep.subr.mxu0 0.0
  %728 = vmatpush1.xpose.msra.mxu0 0.0
  %729 = vmatprep.mubr.f32.mxu0 0.0
  %730 = vmatmul.mubr.f32.gmra.mrb[0].mxu0 %v654
  %v731 = vpop.f32.mrb[0].mxu0
  %v732 = vadd.f32 0.0, %v731
  %v733 = vpop.f32.mrb[0].mxu0
  %734 = vmatprep.mubr.f32.mxu0 0.0
  %735 = vmatmul.mubr.f32.gmra.mrb[0].mxu0 %v657
  %v736 = vpop.f32.mrb[0].mxu0
  %v737 = vadd.f32 0.0, %v736
  %v738 = vpop.f32.mrb[0].mxu0
  %739 = vdwg.mxu0
  %v741 = vsel %vm130, %v128, 0
  %v744 = vsel %vm130, %v129, 0
  %v747 = vsel %vm130, %v32, 0
  %v750 = vsel %vm130, %v33, 0
  %752 = vmatprep.subr.mxu0 0.0
  %753 = vmatpush1.xpose.msra.mxu0 %v747
  %754 = vmatprep.subr.mxu0 0.0
  %755 = vmatpush1.xpose.msra.mxu0 %v750
  %756 = vmatprep.subr.mxu0 0.0
  %757 = vmatpush1.xpose.msra.mxu0 0.0
  %758 = vmatprep.subr.mxu0 0.0
  %759 = vmatpush1.xpose.msra.mxu0 0.0
  %760 = vmatprep.subr.mxu0 0.0
  %761 = vmatpush1.xpose.msra.mxu0 0.0
  %762 = vmatprep.subr.mxu0 0.0
  %763 = vmatpush1.xpose.msra.mxu0 0.0
  %764 = vmatprep.subr.mxu0 0.0
  %765 = vmatpush1.xpose.msra.mxu0 0.0
  %766 = vmatprep.subr.mxu0 0.0
  %767 = vmatpush1.xpose.msra.mxu0 0.0
  %768 = vmatprep.subr.mxu0 0.0
  %769 = vmatpush1.xpose.msra.mxu0 0.0
  %770 = vmatprep.subr.mxu0 0.0
  %771 = vmatpush1.xpose.msra.mxu0 0.0
  %772 = vmatprep.subr.mxu0 0.0
  %773 = vmatpush1.xpose.msra.mxu0 0.0
  %774 = vmatprep.subr.mxu0 0.0
  %775 = vmatpush1.xpose.msra.mxu0 0.0
  %776 = vmatprep.subr.mxu0 0.0
  %777 = vmatpush1.xpose.msra.mxu0 0.0
  %778 = vmatprep.subr.mxu0 0.0
  %779 = vmatpush1.xpose.msra.mxu0 0.0
  %780 = vmatprep.subr.mxu0 0.0
  %781 = vmatpush1.xpose.msra.mxu0 0.0
  %782 = vmatprep.subr.mxu0 0.0
  %783 = vmatpush1.xpose.msra.mxu0 0.0
  %784 = vmatprep.subr.mxu0 0.0
  %785 = vmatpush1.xpose.msra.mxu0 0.0
  %786 = vmatprep.subr.mxu0 0.0
  %787 = vmatpush1.xpose.msra.mxu0 0.0
  %788 = vmatprep.subr.mxu0 0.0
  %789 = vmatpush1.xpose.msra.mxu0 0.0
  %790 = vmatprep.subr.mxu0 0.0
  %791 = vmatpush1.xpose.msra.mxu0 0.0
  %792 = vmatprep.subr.mxu0 0.0
  %793 = vmatpush1.xpose.msra.mxu0 0.0
  %794 = vmatprep.subr.mxu0 0.0
  %795 = vmatpush1.xpose.msra.mxu0 0.0
  %796 = vmatprep.subr.mxu0 0.0
  %797 = vmatpush1.xpose.msra.mxu0 0.0
  %798 = vmatprep.subr.mxu0 0.0
  %799 = vmatpush1.xpose.msra.mxu0 0.0
  %800 = vmatprep.subr.mxu0 0.0
  %801 = vmatpush1.xpose.msra.mxu0 0.0
  %802 = vmatprep.subr.mxu0 0.0
  %803 = vmatpush1.xpose.msra.mxu0 0.0
  %804 = vmatprep.subr.mxu0 0.0
  %805 = vmatpush1.xpose.msra.mxu0 0.0
  %806 = vmatprep.subr.mxu0 0.0
  %807 = vmatpush1.xpose.msra.mxu0 0.0
  %808 = vmatprep.subr.mxu0 0.0
  %809 = vmatpush1.xpose.msra.mxu0 0.0
  %810 = vmatprep.subr.mxu0 0.0
  %811 = vmatpush1.xpose.msra.mxu0 0.0
  %812 = vmatprep.subr.mxu0 0.0
  %813 = vmatpush1.xpose.msra.mxu0 0.0
  %814 = vmatprep.subr.mxu0 0.0
  %815 = vmatpush1.xpose.msra.mxu0 0.0
  %816 = vmatprep.mubr.f32.mxu0 0.0
  %817 = vmatmul.mubr.f32.gmra.mrb[0].mxu0 %v741
  %v818 = vpop.f32.mrb[0].mxu0
  %v819 = vadd.f32 0.0, %v818
  %v820 = vpop.f32.mrb[0].mxu0
  %821 = vmatprep.mubr.f32.mxu0 0.0
  %822 = vmatmul.mubr.f32.gmra.mrb[0].mxu0 %v744
  %v823 = vpop.f32.mrb[0].mxu0
  %v824 = vadd.f32 0.0, %v823
  %v825 = vpop.f32.mrb[0].mxu0
  %826 = vdwg.mxu0
  %v827 = vld [vmem:[%s2] sm:$0xff]
  %v828 = vld [vmem:[%s2 + $0x8] sm:$0xff]
  %v829 = vsel %vm130, %v210, 0.0
  %v830 = vsel %vm130, %v297, 0.0
  %v831 = vadd.f32 %v829, %v830
  %v832 = vsel %vm130, %v384, 0.0
  %v833 = vadd.f32 %v831, %v832
  %v834 = vsel %vm130, %v471, 0.0
  %v835 = vadd.f32 %v833, %v834
  %v836 = vsel %vm130, %v558, 0.0
  %v837 = vadd.f32 %v835, %v836
  %v838 = vsel %vm130, %v645, 0.0
  %v839 = vadd.f32 %v837, %v838
  %v840 = vsel %vm130, %v732, 0.0
  %v841 = vadd.f32 %v839, %v840
  %v842 = vsel %vm130, %v819, 0.0
  %v843 = vadd.f32 %v841, %v842
  %v844 = vsel %vm130, %v215, 0.0
  %v845 = vsel %vm130, %v302, 0.0
  %v846 = vadd.f32 %v844, %v845
  %v847 = vsel %vm130, %v389, 0.0
  %v848 = vadd.f32 %v846, %v847
  %v849 = vsel %vm130, %v476, 0.0
  %v850 = vadd.f32 %v848, %v849
  %v851 = vsel %vm130, %v563, 0.0
  %v852 = vadd.f32 %v850, %v851
  %v853 = vsel %vm130, %v650, 0.0
  %v854 = vadd.f32 %v852, %v853
  %v855 = vsel %vm130, %v737, 0.0
  %v856 = vadd.f32 %v854, %v855
  %v857 = vsel %vm130, %v824, 0.0
  %v858 = vadd.f32 %v856, %v857
  %v859 = vadd.f32 %v827, %v843
  %v860 = vadd.f32 %v828, %v858
  %861 = vst.msk [vmem:[%s2] sm:$0xff] %vm130, %v859
  %862 = vst.msk [vmem:[%s2 + $0x8] sm:$0xff] %vm130, %v860
  // Predicated region
  $region14: #{a_call__.4} parent=0 // pred_check
    %p863 = pneg %p11
  $region15: #{a_call__.4} parent=0 // pred_check_branch
    %865 = sbr.rel (%p863) target = $region17
  $region16: #{a_call__.4} parent=0 // pred_region
    %v866 = vld [vmem:[%s2] sm:$0xff]
    %v867 = vld [vmem:[%s2 + $0x8] sm:$0xff]
    %v868 = vmul.f32 %v866, 0.125
    %v869 = vmul.f32 %v867, 0.125
    %870 = vst.msk [vmem:[%s2] sm:$0xff] %vm130, %v868
    %871 = vst.msk [vmem:[%s2 + $0x8] sm:$0xff] %vm130, %v869
  $region17: #{a_call__.4} parent=0 // pred_fallthru
    _
  // Predicated region
  $region18: #{a_call__.4} parent=0 // pred_check
    _
  $region19: #{a_call__.4} parent=0 // pred_check_branch
    %873 = sbr.rel (0) target = $region21
  $region20: #{a_call__.4} parent=0 // pred_region
    _
  $region21: #{a_call__.4} parent=0 // pred_fallthru
    _
  // Predicated region
  $region22: #{a_call__.4} parent=0 // pred_check
    _
  $region23: #{a_call__.4} parent=0 // pred_check_branch
    %875 = sbr.rel (0) target = $region25
  $region24: #{a_call__.4} parent=0 // pred_region
    _
  $region25: #{a_call__.4} parent=0 // pred_fallthru
    _

// kernel: a_call__.5
$region0: #{a_call__.5}
  #allocation0 [shape = 'u32[]', space=smem, size = 0x4, offset = 0x4, fixed_abs, tag = 'smem constant byte address 0x4 - core index']
  #allocation1 [shape = 'u32[144,128]{1,0:T(1,128)}', space=vmem, size = 0x12000, scoped, tag = 'internal scratch']
  %s0 = inlined_call_operand.vmem [shape: bf16[16,16], index: 0, kind: input, shape index: {}]
  %s1 = inlined_call_operand.vmem [shape: bf16[8,16,16], index: 1, kind: input, shape index: {}]
  %s2 = inlined_call_operand.hbm [shape: f32[8,16,16], index: 2, kind: output, shape index: {}]
  %s3 = sld [smem:[#allocation0]]
  $region18: #{a_call__.5} parent=0
    _
  %s5 = ssub.s32 1, %s3
  %s6 = scalar_select 0, %s5, %s3
  $region1: #{a_call__.5} parent=0
    #allocation2 [shape = 'u8[65536]{0}', space=vmem, size = 0x10000, scoped, tag = 'output window, operand 0, single buffered']
    #allocation3 [shape = 's32[1]{0}', space=sflag, size = 0x4, scoped, tag = 'scoped memory for a_call__.5']
    %7 = vsyncpa [#allocation3], 0
    // Predicated region
    $region2: #{a_call__.5} parent=1 // pred_check
      _
    $region3: #{a_call__.5} parent=1 // pred_check_branch
      %9 = sbr.rel (0) target = $region5
    $region4: #{a_call__.5} parent=1 // pred_region
      _
    $region5: #{a_call__.5} parent=1 // pred_fallthru
      _
    // Predicated region
    $region6: #{a_call__.5} parent=1 // pred_check
      _
    $region7: #{a_call__.5} parent=1 // pred_check_branch
      %11 = sbr.rel (0) target = $region9
    $region8: #{a_call__.5} parent=1 // pred_region
      _
    $region9: #{a_call__.5} parent=1 // pred_fallthru
      _
    %v13 = vld [vmem:[%s0] sm:$0xf]
    %v14 = vld [vmem:[%s0 + $0x4] sm:$0xf]
    %v15 = vld [vmem:[%s1] sm:$0xf]
    %v16 = vld [vmem:[%s1 + $0x4] sm:$0xf]
    %v17 = vld [vmem:[%s1 + $0x8] sm:$0xf]
    %v18 = vld [vmem:[%s1 + $0xc] sm:$0xf]
    %v19 = vld [vmem:[%s1 + $0x10] sm:$0xf]
    %v20 = vld [vmem:[%s1 + $0x14] sm:$0xf]
    %v21 = vld [vmem:[%s1 + $0x18] sm:$0xf]
    %v22 = vld [vmem:[%s1 + $0x1c] sm:$0xf]
    %v23 = vld [vmem:[%s1 + $0x20] sm:$0xf]
    %v24 = vld [vmem:[%s1 + $0x24] sm:$0xf]
    %v25 = vld [vmem:[%s1 + $0x28] sm:$0xf]
    %v26 = vld [vmem:[%s1 + $0x2c] sm:$0xf]
    %v27 = vld [vmem:[%s1 + $0x30] sm:$0xf]
    %v28 = vld [vmem:[%s1 + $0x34] sm:$0xf]
    %v29 = vld [vmem:[%s1 + $0x38] sm:$0xf]
    %v30 = vld [vmem:[%s1 + $0x3c] sm:$0xf]
    %v33 = vunpack.c.l.b16 %v15
    %v34 = vunpack.c.l.b16 %v16
    %v35 = vpack.c.b16 %v34, %v33
    %v38 = vunpack.c.l.b16 %v13
    %v39 = vunpack.c.l.b16 %v14
    %v40 = vpack.c.b16 %v39, %v38
    %vm42 = vcmask 130048
    %v44 = vsel %vm42, %v35, 0
    %46 = vmatprep.subr.bf16.mxu0 0
    %47 = vmatpush1.bf16.msra.mxu0 %v40
    %48 = vmatprep.subr.bf16.mxu0 0
    %49 = vmatpush1.bf16.msra.mxu0 0
    %50 = vmatprep.subr.bf16.mxu0 0
    %51 = vmatpush1.bf16.msra.mxu0 0
    %52 = vmatprep.subr.bf16.mxu0 0
    %53 = vmatpush1.bf16.msra.mxu0 0
    %54 = vmatprep.subr.bf16.mxu0 0
    %55 = vmatpush1.bf16.msra.mxu0 0
    %56 = vmatprep.subr.bf16.mxu0 0
    %57 = vmatpush1.bf16.msra.mxu0 0
    %58 = vmatprep.subr.bf16.mxu0 0
    %59 = vmatpush1.bf16.msra.mxu0 0
    %60 = vmatprep.subr.bf16.mxu0 0
    %61 = vmatpush1.bf16.msra.mxu0 0
    %62 = vmatprep.subr.bf16.mxu0 0
    %63 = vmatpush1.bf16.msra.mxu0 0
    %64 = vmatprep.subr.bf16.mxu0 0
    %65 = vmatpush1.bf16.msra.mxu0 0
    %66 = vmatprep.subr.bf16.mxu0 0
    %67 = vmatpush1.bf16.msra.mxu0 0
    %68 = vmatprep.subr.bf16.mxu0 0
    %69 = vmatpush1.bf16.msra.mxu0 0
    %70 = vmatprep.subr.bf16.mxu0 0
    %71 = vmatpush1.bf16.msra.mxu0 0
    %72 = vmatprep.subr.bf16.mxu0 0
    %73 = vmatpush1.bf16.msra.mxu0 0
    %74 = vmatprep.subr.bf16.mxu0 0
    %75 = vmatpush1.bf16.msra.mxu0 0
    %76 = vmatprep.subr.bf16.mxu0 0
    %77 = vmatpush1.bf16.msra.mxu0 0
    %78 = vmatprep.mubr.bf16.mxu0 0
    %79 = vmatmul.mubr.bf16.gmra.mrb[0].mxu0 %v44
    %v80 = vpop.f32.mrb[0].mxu0
    %v81 = vadd.f32 0.0, %v80
    %v82 = vpop.f32.mrb[0].mxu0
    %v83 = vpop.f32.mrb[0].mxu0
    %v84 = vadd.f32 0.0, %v83
    %v85 = vpop.f32.mrb[0].mxu0
    %86 = vdwg.mxu0
    %v89 = vunpack.c.l.b16 %v17
    %v90 = vunpack.c.l.b16 %v18
    %v91 = vpack.c.b16 %v90, %v89
    %v93 = vsel %vm42, %v91, 0
    %95 = vmatprep.subr.bf16.mxu0 0
    %96 = vmatpush1.bf16.msra.mxu0 %v40
    %97 = vmatprep.subr.bf16.mxu0 0
    %98 = vmatpush1.bf16.msra.mxu0 0
    %99 = vmatprep.subr.bf16.mxu0 0
    %100 = vmatpush1.bf16.msra.mxu0 0
    %101 = vmatprep.subr.bf16.mxu0 0
    %102 = vmatpush1.bf16.msra.mxu0 0
    %103 = vmatprep.subr.bf16.mxu0 0
    %104 = vmatpush1.bf16.msra.mxu0 0
    %105 = vmatprep.subr.bf16.mxu0 0
    %106 = vmatpush1.bf16.msra.mxu0 0
    %107 = vmatprep.subr.bf16.mxu0 0
    %108 = vmatpush1.bf16.msra.mxu0 0
    %109 = vmatprep.subr.bf16.mxu0 0
    %110 = vmatpush1.bf16.msra.mxu0 0
    %111 = vmatprep.subr.bf16.mxu0 0
    %112 = vmatpush1.bf16.msra.mxu0 0
    %113 = vmatprep.subr.bf16.mxu0 0
    %114 = vmatpush1.bf16.msra.mxu0 0
    %115 = vmatprep.subr.bf16.mxu0 0
    %116 = vmatpush1.bf16.msra.mxu0 0
    %117 = vmatprep.subr.bf16.mxu0 0
    %118 = vmatpush1.bf16.msra.mxu0 0
    %119 = vmatprep.subr.bf16.mxu0 0
    %120 = vmatpush1.bf16.msra.mxu0 0
    %121 = vmatprep.subr.bf16.mxu0 0
    %122 = vmatpush1.bf16.msra.mxu0 0
    %123 = vmatprep.subr.bf16.mxu0 0
    %124 = vmatpush1.bf16.msra.mxu0 0
    %125 = vmatprep.subr.bf16.mxu0 0
    %126 = vmatpush1.bf16.msra.mxu0 0
    %127 = vmatprep.mubr.bf16.mxu0 0
    %128 = vmatmul.mubr.bf16.gmra.mrb[0].mxu0 %v93
    %v129 = vpop.f32.mrb[0].mxu0
    %v130 = vadd.f32 0.0, %v129
    %v131 = vpop.f32.mrb[0].mxu0
    %v132 = vpop.f32.mrb[0].mxu0
    %v133 = vadd.f32 0.0, %v132
    %v134 = vpop.f32.mrb[0].mxu0
    %135 = vdwg.mxu0
    %v138 = vunpack.c.l.b16 %v19
    %v139 = vunpack.c.l.b16 %v20
    %v140 = vpack.c.b16 %v139, %v138
    %v142 = vsel %vm42, %v140, 0
    %144 = vmatprep.subr.bf16.mxu0 0
    %145 = vmatpush1.bf16.msra.mxu0 %v40
    %146 = vmatprep.subr.bf16.mxu0 0
    %147 = vmatpush1.bf16.msra.mxu0 0
    %148 = vmatprep.subr.bf16.mxu0 0
    %149 = vmatpush1.bf16.msra.mxu0 0
    %150 = vmatprep.subr.bf16.mxu0 0
    %151 = vmatpush1.bf16.msra.mxu0 0
    %152 = vmatprep.subr.bf16.mxu0 0
    %153 = vmatpush1.bf16.msra.mxu0 0
    %154 = vmatprep.subr.bf16.mxu0 0
    %155 = vmatpush1.bf16.msra.mxu0 0
    %156 = vmatprep.subr.bf16.mxu0 0
    %157 = vmatpush1.bf16.msra.mxu0 0
    %158 = vmatprep.subr.bf16.mxu0 0
    %159 = vmatpush1.bf16.msra.mxu0 0
    %160 = vmatprep.subr.bf16.mxu0 0
    %161 = vmatpush1.bf16.msra.mxu0 0
    %162 = vmatprep.subr.bf16.mxu0 0
    %163 = vmatpush1.bf16.msra.mxu0 0
    %164 = vmatprep.subr.bf16.mxu0 0
    %165 = vmatpush1.bf16.msra.mxu0 0
    %166 = vmatprep.subr.bf16.mxu0 0
    %167 = vmatpush1.bf16.msra.mxu0 0
    %168 = vmatprep.subr.bf16.mxu0 0
    %169 = vmatpush1.bf16.msra.mxu0 0
    %170 = vmatprep.subr.bf16.mxu0 0
    %171 = vmatpush1.bf16.msra.mxu0 0
    %172 = vmatprep.subr.bf16.mxu0 0
    %173 = vmatpush1.bf16.msra.mxu0 0
    %174 = vmatprep.subr.bf16.mxu0 0
    %175 = vmatpush1.bf16.msra.mxu0 0
    %176 = vmatprep.mubr.bf16.mxu0 0
    %177 = vmatmul.mubr.bf16.gmra.mrb[0].mxu0 %v142
    %v178 = vpop.f32.mrb[0].mxu0
    %v179 = vadd.f32 0.0, %v178
    %v180 = vpop.f32.mrb[0].mxu0
    %v181 = vpop.f32.mrb[0].mxu0
    %v182 = vadd.f32 0.0, %v181
    %v183 = vpop.f32.mrb[0].mxu0
    %184 = vdwg.mxu0
    %v187 = vunpack.c.l.b16 %v21
    %v188 = vunpack.c.l.b16 %v22
    %v189 = vpack.c.b16 %v188, %v187
    %v191 = vsel %vm42, %v189, 0
    %193 = vmatprep.subr.bf16.mxu0 0
    %194 = vmatpush1.bf16.msra.mxu0 %v40
    %195 = vmatprep.subr.bf16.mxu0 0
    %196 = vmatpush1.bf16.msra.mxu0 0
    %197 = vmatprep.subr.bf16.mxu0 0
    %198 = vmatpush1.bf16.msra.mxu0 0
    %199 = vmatprep.subr.bf16.mxu0 0
    %200 = vmatpush1.bf16.msra.mxu0 0
    %201 = vmatprep.subr.bf16.mxu0 0
    %202 = vmatpush1.bf16.msra.mxu0 0
    %203 = vmatprep.subr.bf16.mxu0 0
    %204 = vmatpush1.bf16.msra.mxu0 0
    %205 = vmatprep.subr.bf16.mxu0 0
    %206 = vmatpush1.bf16.msra.mxu0 0
    %207 = vmatprep.subr.bf16.mxu0 0
    %208 = vmatpush1.bf16.msra.mxu0 0
    %209 = vmatprep.subr.bf16.mxu0 0
    %210 = vmatpush1.bf16.msra.mxu0 0
    %211 = vmatprep.subr.bf16.mxu0 0
    %212 = vmatpush1.bf16.msra.mxu0 0
    %213 = vmatprep.subr.bf16.mxu0 0
    %214 = vmatpush1.bf16.msra.mxu0 0
    %215 = vmatprep.subr.bf16.mxu0 0
    %216 = vmatpush1.bf16.msra.mxu0 0
    %217 = vmatprep.subr.bf16.mxu0 0
    %218 = vmatpush1.bf16.msra.mxu0 0
    %219 = vmatprep.subr.bf16.mxu0 0
    %220 = vmatpush1.bf16.msra.mxu0 0
    %221 = vmatprep.subr.bf16.mxu0 0
    %222 = vmatpush1.bf16.msra.mxu0 0
    %223 = vmatprep.subr.bf16.mxu0 0
    %224 = vmatpush1.bf16.msra.mxu0 0
    %225 = vmatprep.mubr.bf16.mxu0 0
    %226 = vmatmul.mubr.bf16.gmra.mrb[0].mxu0 %v191
    %v227 = vpop.f32.mrb[0].mxu0
    %v228 = vadd.f32 0.0, %v227
    %v229 = vpop.f32.mrb[0].mxu0
    %v230 = vpop.f32.mrb[0].mxu0
    %v231 = vadd.f32 0.0, %v230
    %v232 = vpop.f32.mrb[0].mxu0
    %233 = vdwg.mxu0
    %v236 = vunpack.c.l.b16 %v23
    %v237 = vunpack.c.l.b16 %v24
    %v238 = vpack.c.b16 %v237, %v236
    %v240 = vsel %vm42, %v238, 0
    %242 = vmatprep.subr.bf16.mxu0 0
    %243 = vmatpush1.bf16.msra.mxu0 %v40
    %244 = vmatprep.subr.bf16.mxu0 0
    %245 = vmatpush1.bf16.msra.mxu0 0
    %246 = vmatprep.subr.bf16.mxu0 0
    %247 = vmatpush1.bf16.msra.mxu0 0
    %248 = vmatprep.subr.bf16.mxu0 0
    %249 = vmatpush1.bf16.msra.mxu0 0
    %250 = vmatprep.subr.bf16.mxu0 0
    %251 = vmatpush1.bf16.msra.mxu0 0
    %252 = vmatprep.subr.bf16.mxu0 0
    %253 = vmatpush1.bf16.msra.mxu0 0
    %254 = vmatprep.subr.bf16.mxu0 0
    %255 = vmatpush1.bf16.msra.mxu0 0
    %256 = vmatprep.subr.bf16.mxu0 0
    %257 = vmatpush1.bf16.msra.mxu0 0
    %258 = vmatprep.subr.bf16.mxu0 0
    %259 = vmatpush1.bf16.msra.mxu0 0
    %260 = vmatprep.subr.bf16.mxu0 0
    %261 = vmatpush1.bf16.msra.mxu0 0
    %262 = vmatprep.subr.bf16.mxu0 0
    %263 = vmatpush1.bf16.msra.mxu0 0
    %264 = vmatprep.subr.bf16.mxu0 0
    %265 = vmatpush1.bf16.msra.mxu0 0
    %266 = vmatprep.subr.bf16.mxu0 0
    %267 = vmatpush1.bf16.msra.mxu0 0
    %268 = vmatprep.subr.bf16.mxu0 0
    %269 = vmatpush1.bf16.msra.mxu0 0
    %270 = vmatprep.subr.bf16.mxu0 0
    %271 = vmatpush1.bf16.msra.mxu0 0
    %272 = vmatprep.subr.bf16.mxu0 0
    %273 = vmatpush1.bf16.msra.mxu0 0
    %274 = vmatprep.mubr.bf16.mxu0 0
    %275 = vmatmul.mubr.bf16.gmra.mrb[0].mxu0 %v240
    %v276 = vpop.f32.mrb[0].mxu0
    %v277 = vadd.f32 0.0, %v276
    %v278 = vpop.f32.mrb[0].mxu0
    %v279 = vpop.f32.mrb[0].mxu0
    %v280 = vadd.f32 0.0, %v279
    %v281 = vpop.f32.mrb[0].mxu0
    %282 = vdwg.mxu0
    %v285 = vunpack.c.l.b16 %v25
    %v286 = vunpack.c.l.b16 %v26
    %v287 = vpack.c.b16 %v286, %v285
    %v289 = vsel %vm42, %v287, 0
    %291 = vmatprep.subr.bf16.mxu0 0
    %292 = vmatpush1.bf16.msra.mxu0 %v40
    %293 = vmatprep.subr.bf16.mxu0 0
    %294 = vmatpush1.bf16.msra.mxu0 0
    %295 = vmatprep.subr.bf16.mxu0 0
    %296 = vmatpush1.bf16.msra.mxu0 0
    %297 = vmatprep.subr.bf16.mxu0 0
    %298 = vmatpush1.bf16.msra.mxu0 0
    %299 = vmatprep.subr.bf16.mxu0 0
    %300 = vmatpush1.bf16.msra.mxu0 0
    %301 = vmatprep.subr.bf16.mxu0 0
    %302 = vmatpush1.bf16.msra.mxu0 0
    %303 = vmatprep.subr.bf16.mxu0 0
    %304 = vmatpush1.bf16.msra.mxu0 0
    %305 = vmatprep.subr.bf16.mxu0 0
    %306 = vmatpush1.bf16.msra.mxu0 0
    %307 = vmatprep.subr.bf16.mxu0 0
    %308 = vmatpush1.bf16.msra.mxu0 0
    %309 = vmatprep.subr.bf16.mxu0 0
    %310 = vmatpush1.bf16.msra.mxu0 0
    %311 = vmatprep.subr.bf16.mxu0 0
    %312 = vmatpush1.bf16.msra.mxu0 0
    %313 = vmatprep.subr.bf16.mxu0 0
    %314 = vmatpush1.bf16.msra.mxu0 0
    %315 = vmatprep.subr.bf16.mxu0 0
    %316 = vmatpush1.bf16.msra.mxu0 0
    %317 = vmatprep.subr.bf16.mxu0 0
    %318 = vmatpush1.bf16.msra.mxu0 0
    %319 = vmatprep.subr.bf16.mxu0 0
    %320 = vmatpush1.bf16.msra.mxu0 0
    %321 = vmatprep.subr.bf16.mxu0 0
    %322 = vmatpush1.bf16.msra.mxu0 0
    %323 = vmatprep.mubr.bf16.mxu0 0
    %324 = vmatmul.mubr.bf16.gmra.mrb[0].mxu0 %v289
    %v325 = vpop.f32.mrb[0].mxu0
    %v326 = vadd.f32 0.0, %v325
    %v327 = vpop.f32.mrb[0].mxu0
    %v328 = vpop.f32.mrb[0].mxu0
    %v329 = vadd.f32 0.0, %v328
    %v330 = vpop.f32.mrb[0].mxu0
    %331 = vdwg.mxu0
    %v334 = vunpack.c.l.b16 %v27
    %v335 = vunpack.c.l.b16 %v28
    %v336 = vpack.c.b16 %v335, %v334
    %v338 = vsel %vm42, %v336, 0
    %340 = vmatprep.subr.bf16.mxu0 0
    %341 = vmatpush1.bf16.msra.mxu0 %v40
    %342 = vmatprep.subr.bf16.mxu0 0
    %343 = vmatpush1.bf16.msra.mxu0 0
    %344 = vmatprep.subr.bf16.mxu0 0
    %345 = vmatpush1.bf16.msra.mxu0 0
    %346 = vmatprep.subr.bf16.mxu0 0
    %347 = vmatpush1.bf16.msra.mxu0 0
    %348 = vmatprep.subr.bf16.mxu0 0
    %349 = vmatpush1.bf16.msra.mxu0 0
    %350 = vmatprep.subr.bf16.mxu0 0
    %351 = vmatpush1.bf16.msra.mxu0 0
    %352 = vmatprep.subr.bf16.mxu0 0
    %353 = vmatpush1.bf16.msra.mxu0 0
    %354 = vmatprep.subr.bf16.mxu0 0
    %355 = vmatpush1.bf16.msra.mxu0 0
    %356 = vmatprep.subr.bf16.mxu0 0
    %357 = vmatpush1.bf16.msra.mxu0 0
    %358 = vmatprep.subr.bf16.mxu0 0
    %359 = vmatpush1.bf16.msra.mxu0 0
    %360 = vmatprep.subr.bf16.mxu0 0
    %361 = vmatpush1.bf16.msra.mxu0 0
    %362 = vmatprep.subr.bf16.mxu0 0
    %363 = vmatpush1.bf16.msra.mxu0 0
    %364 = vmatprep.subr.bf16.mxu0 0
    %365 = vmatpush1.bf16.msra.mxu0 0
    %366 = vmatprep.subr.bf16.mxu0 0
    %367 = vmatpush1.bf16.msra.mxu0 0
    %368 = vmatprep.subr.bf16.mxu0 0
    %369 = vmatpush1.bf16.msra.mxu0 0
    %370 = vmatprep.subr.bf16.mxu0 0
    %371 = vmatpush1.bf16.msra.mxu0 0
    %372 = vmatprep.mubr.bf16.mxu0 0
    %373 = vmatmul.mubr.bf16.gmra.mrb[0].mxu0 %v338
    %v374 = vpop.f32.mrb[0].mxu0
    %v375 = vadd.f32 0.0, %v374
    %v376 = vpop.f32.mrb[0].mxu0
    %v377 = vpop.f32.mrb[0].mxu0
    %v378 = vadd.f32 0.0, %v377
    %v379 = vpop.f32.mrb[0].mxu0
    %380 = vdwg.mxu0
    %v383 = vunpack.c.l.b16 %v29
    %v384 = vunpack.c.l.b16 %v30
    %v385 = vpack.c.b16 %v384, %v383
    %v387 = vsel %vm42, %v385, 0
    %389 = vmatprep.subr.bf16.mxu0 0
    %390 = vmatpush1.bf16.msra.mxu0 %v40
    %391 = vmatprep.subr.bf16.mxu0 0
    %392 = vmatpush1.bf16.msra.mxu0 0
    %393 = vmatprep.subr.bf16.mxu0 0
    %394 = vmatpush1.bf16.msra.mxu0 0
    %395 = vmatprep.subr.bf16.mxu0 0
    %396 = vmatpush1.bf16.msra.mxu0 0
    %397 = vmatprep.subr.bf16.mxu0 0
    %398 = vmatpush1.bf16.msra.mxu0 0
    %399 = vmatprep.subr.bf16.mxu0 0
    %400 = vmatpush1.bf16.msra.mxu0 0
    %401 = vmatprep.subr.bf16.mxu0 0
    %402 = vmatpush1.bf16.msra.mxu0 0
    %403 = vmatprep.subr.bf16.mxu0 0
    %404 = vmatpush1.bf16.msra.mxu0 0
    %405 = vmatprep.subr.bf16.mxu0 0
    %406 = vmatpush1.bf16.msra.mxu0 0
    %407 = vmatprep.subr.bf16.mxu0 0
    %408 = vmatpush1.bf16.msra.mxu0 0
    %409 = vmatprep.subr.bf16.mxu0 0
    %410 = vmatpush1.bf16.msra.mxu0 0
    %411 = vmatprep.subr.bf16.mxu0 0
    %412 = vmatpush1.bf16.msra.mxu0 0
    %413 = vmatprep.subr.bf16.mxu0 0
    %414 = vmatpush1.bf16.msra.mxu0 0
    %415 = vmatprep.subr.bf16.mxu0 0
    %416 = vmatpush1.bf16.msra.mxu0 0
    %417 = vmatprep.subr.bf16.mxu0 0
    %418 = vmatpush1.bf16.msra.mxu0 0
    %419 = vmatprep.subr.bf16.mxu0 0
    %420 = vmatpush1.bf16.msra.mxu0 0
    %421 = vmatprep.mubr.bf16.mxu0 0
    %422 = vmatmul.mubr.bf16.gmra.mrb[0].mxu0 %v387
    %v423 = vpop.f32.mrb[0].mxu0
    %v424 = vadd.f32 0.0, %v423
    %v425 = vpop.f32.mrb[0].mxu0
    %v426 = vpop.f32.mrb[0].mxu0
    %v427 = vadd.f32 0.0, %v426
    %v428 = vpop.f32.mrb[0].mxu0
    %429 = vdwg.mxu0
    %v430 = vpack.c.bf16 %v84, %v81
    %v431 = vpack.c.bf16 %v133, %v130
    %v432 = vpack.c.bf16 %v182, %v179
    %v433 = vpack.c.bf16 %v231, %v228
    %v434 = vpack.c.bf16 %v280, %v277
    %v435 = vpack.c.bf16 %v329, %v326
    %v436 = vpack.c.bf16 %v378, %v375
    %v437 = vpack.c.bf16 %v427, %v424
    %v439 = vsel %vm42, %v40, 0
    %441 = vmatprep.subr.bf16.mxu0 0
    %442 = vmatpush1.bf16.msra.mxu0 %v430
    %443 = vmatprep.subr.bf16.mxu0 0
    %444 = vmatpush1.bf16.msra.mxu0 0
    %445 = vmatprep.subr.bf16.mxu0 0
    %446 = vmatpush1.bf16.msra.mxu0 0
    %447 = vmatprep.subr.bf16.mxu0 0
    %448 = vmatpush1.bf16.msra.mxu0 0
    %449 = vmatprep.subr.bf16.mxu0 0
    %450 = vmatpush1.bf16.msra.mxu0 0
    %451 = vmatprep.subr.bf16.mxu0 0
    %452 = vmatpush1.bf16.msra.mxu0 0
    %453 = vmatprep.subr.bf16.mxu0 0
    %454 = vmatpush1.bf16.msra.mxu0 0
    %455 = vmatprep.subr.bf16.mxu0 0
    %456 = vmatpush1.bf16.msra.mxu0 0
    %457 = vmatprep.subr.bf16.mxu0 0
    %458 = vmatpush1.bf16.msra.mxu0 0
    %459 = vmatprep.subr.bf16.mxu0 0
    %460 = vmatpush1.bf16.msra.mxu0 0
    %461 = vmatprep.subr.bf16.mxu0 0
    %462 = vmatpush1.bf16.msra.mxu0 0
    %463 = vmatprep.subr.bf16.mxu0 0
    %464 = vmatpush1.bf16.msra.mxu0 0
    %465 = vmatprep.subr.bf16.mxu0 0
    %466 = vmatpush1.bf16.msra.mxu0 0
    %467 = vmatprep.subr.bf16.mxu0 0
    %468 = vmatpush1.bf16.msra.mxu0 0
    %469 = vmatprep.subr.bf16.mxu0 0
    %470 = vmatpush1.bf16.msra.mxu0 0
    %471 = vmatprep.subr.bf16.mxu0 0
    %472 = vmatpush1.bf16.msra.mxu0 0
    %473 = vmatprep.mubr.bf16.mxu0 0
    %474 = vmatmul.mubr.bf16.gmra.mrb[0].mxu0 %v439
    %v475 = vpop.f32.mrb[0].mxu0
    %v476 = vadd.f32 0.0, %v475
    %v477 = vpop.f32.mrb[0].mxu0
    %v478 = vpop.f32.mrb[0].mxu0
    %v479 = vadd.f32 0.0, %v478
    %v480 = vpop.f32.mrb[0].mxu0
    %481 = vdwg.mxu0
    %482 = vmatprep.subr.bf16.mxu0 0
    %483 = vmatpush1.bf16.msra.mxu0 %v431
    %484 = vmatprep.subr.bf16.mxu0 0
    %485 = vmatpush1.bf16.msra.mxu0 0
    %486 = vmatprep.subr.bf16.mxu0 0
    %487 = vmatpush1.bf16.msra.mxu0 0
    %488 = vmatprep.subr.bf16.mxu0 0
    %489 = vmatpush1.bf16.msra.mxu0 0
    %490 = vmatprep.subr.bf16.mxu0 0
    %491 = vmatpush1.bf16.msra.mxu0 0
    %492 = vmatprep.subr.bf16.mxu0 0
    %493 = vmatpush1.bf16.msra.mxu0 0
    %494 = vmatprep.subr.bf16.mxu0 0
    %495 = vmatpush1.bf16.msra.mxu0 0
    %496 = vmatprep.subr.bf16.mxu0 0
    %497 = vmatpush1.bf16.msra.mxu0 0
    %498 = vmatprep.subr.bf16.mxu0 0
    %499 = vmatpush1.bf16.msra.mxu0 0
    %500 = vmatprep.subr.bf16.mxu0 0
    %501 = vmatpush1.bf16.msra.mxu0 0
    %502 = vmatprep.subr.bf16.mxu0 0
    %503 = vmatpush1.bf16.msra.mxu0 0
    %504 = vmatprep.subr.bf16.mxu0 0
    %505 = vmatpush1.bf16.msra.mxu0 0
    %506 = vmatprep.subr.bf16.mxu0 0
    %507 = vmatpush1.bf16.msra.mxu0 0
    %508 = vmatprep.subr.bf16.mxu0 0
    %509 = vmatpush1.bf16.msra.mxu0 0
    %510 = vmatprep.subr.bf16.mxu0 0
    %511 = vmatpush1.bf16.msra.mxu0 0
    %512 = vmatprep.subr.bf16.mxu0 0
    %513 = vmatpush1.bf16.msra.mxu0 0
    %514 = vmatprep.mubr.bf16.mxu0 0
    %515 = vmatmul.mubr.bf16.gmra.mrb[0].mxu0 %v439
    %v516 = vpop.f32.mrb[0].mxu0
    %v517 = vadd.f32 0.0, %v516
    %v518 = vpop.f32.mrb[0].mxu0
    %v519 = vpop.f32.mrb[0].mxu0
    %v520 = vadd.f32 0.0, %v519
    %v521 = vpop.f32.mrb[0].mxu0
    %522 = vdwg.mxu0
    %523 = vmatprep.subr.bf16.mxu0 0
    %524 = vmatpush1.bf16.msra.mxu0 %v432
    %525 = vmatprep.subr.bf16.mxu0 0
    %526 = vmatpush1.bf16.msra.mxu0 0
    %527 = vmatprep.subr.bf16.mxu0 0
    %528 = vmatpush1.bf16.msra.mxu0 0
    %529 = vmatprep.subr.bf16.mxu0 0
    %530 = vmatpush1.bf16.msra.mxu0 0
    %531 = vmatprep.subr.bf16.mxu0 0
    %532 = vmatpush1.bf16.msra.mxu0 0
    %533 = vmatprep.subr.bf16.mxu0 0
    %534 = vmatpush1.bf16.msra.mxu0 0
    %535 = vmatprep.subr.bf16.mxu0 0
    %536 = vmatpush1.bf16.msra.mxu0 0
    %537 = vmatprep.subr.bf16.mxu0 0
    %538 = vmatpush1.bf16.msra.mxu0 0
    %539 = vmatprep.subr.bf16.mxu0 0
    %540 = vmatpush1.bf16.msra.mxu0 0
    %541 = vmatprep.subr.bf16.mxu0 0
    %542 = vmatpush1.bf16.msra.mxu0 0
    %543 = vmatprep.subr.bf16.mxu0 0
    %544 = vmatpush1.bf16.msra.mxu0 0
    %545 = vmatprep.subr.bf16.mxu0 0
    %546 = vmatpush1.bf16.msra.mxu0 0
    %547 = vmatprep.subr.bf16.mxu0 0
    %548 = vmatpush1.bf16.msra.mxu0 0
    %549 = vmatprep.subr.bf16.mxu0 0
    %550 = vmatpush1.bf16.msra.mxu0 0
    %551 = vmatprep.subr.bf16.mxu0 0
    %552 = vmatpush1.bf16.msra.mxu0 0
    %553 = vmatprep.subr.bf16.mxu0 0
    %554 = vmatpush1.bf16.msra.mxu0 0
    %555 = vmatprep.mubr.bf16.mxu0 0
    %556 = vmatmul.mubr.bf16.gmra.mrb[0].mxu0 %v439
    %v557 = vpop.f32.mrb[0].mxu0
    %v558 = vadd.f32 0.0, %v557
    %v559 = vpop.f32.mrb[0].mxu0
    %v560 = vpop.f32.mrb[0].mxu0
    %v561 = vadd.f32 0.0, %v560
    %v562 = vpop.f32.mrb[0].mxu0
    %563 = vdwg.mxu0
    %564 = vmatprep.subr.bf16.mxu0 0
    %565 = vmatpush1.bf16.msra.mxu0 %v433
    %566 = vmatprep.subr.bf16.mxu0 0
    %567 = vmatpush1.bf16.msra.mxu0 0
    %568 = vmatprep.subr.bf16.mxu0 0
    %569 = vmatpush1.bf16.msra.mxu0 0
    %570 = vmatprep.subr.bf16.mxu0 0
    %571 = vmatpush1.bf16.msra.mxu0 0
    %572 = vmatprep.subr.bf16.mxu0 0
    %573 = vmatpush1.bf16.msra.mxu0 0
    %574 = vmatprep.subr.bf16.mxu0 0
    %575 = vmatpush1.bf16.msra.mxu0 0
    %576 = vmatprep.subr.bf16.mxu0 0
    %577 = vmatpush1.bf16.msra.mxu0 0
    %578 = vmatprep.subr.bf16.mxu0 0
    %579 = vmatpush1.bf16.msra.mxu0 0
    %580 = vmatprep.subr.bf16.mxu0 0
    %581 = vmatpush1.bf16.msra.mxu0 0
    %582 = vmatprep.subr.bf16.mxu0 0
    %583 = vmatpush1.bf16.msra.mxu0 0
    %584 = vmatprep.subr.bf16.mxu0 0
    %585 = vmatpush1.bf16.msra.mxu0 0
    %586 = vmatprep.subr.bf16.mxu0 0
    %587 = vmatpush1.bf16.msra.mxu0 0
    %588 = vmatprep.subr.bf16.mxu0 0
    %589 = vmatpush1.bf16.msra.mxu0 0
    %590 = vmatprep.subr.bf16.mxu0 0
    %591 = vmatpush1.bf16.msra.mxu0 0
    %592 = vmatprep.subr.bf16.mxu0 0
    %593 = vmatpush1.bf16.msra.mxu0 0
    %594 = vmatprep.subr.bf16.mxu0 0
    %595 = vmatpush1.bf16.msra.mxu0 0
    %596 = vmatprep.mubr.bf16.mxu0 0
    %597 = vmatmul.mubr.bf16.gmra.mrb[0].mxu0 %v439
    %v598 = vpop.f32.mrb[0].mxu0
    %v599 = vadd.f32 0.0, %v598
    %v600 = vpop.f32.mrb[0].mxu0
    %v601 = vpop.f32.mrb[0].mxu0
    %v602 = vadd.f32 0.0, %v601
    %v603 = vpop.f32.mrb[0].mxu0
    %604 = vdwg.mxu0
    %605 = vmatprep.subr.bf16.mxu0 0
    %606 = vmatpush1.bf16.msra.mxu0 %v434
    %607 = vmatprep.subr.bf16.mxu0 0
    %608 = vmatpush1.bf16.msra.mxu0 0
    %609 = vmatprep.subr.bf16.mxu0 0
    %610 = vmatpush1.bf16.msra.mxu0 0
    %611 = vmatprep.subr.bf16.mxu0 0
    %612 = vmatpush1.bf16.msra.mxu0 0
    %613 = vmatprep.subr.bf16.mxu0 0
    %614 = vmatpush1.bf16.msra.mxu0 0
    %615 = vmatprep.subr.bf16.mxu0 0
    %616 = vmatpush1.bf16.msra.mxu0 0
    %617 = vmatprep.subr.bf16.mxu0 0
    %618 = vmatpush1.bf16.msra.mxu0 0
    %619 = vmatprep.subr.bf16.mxu0 0
    %620 = vmatpush1.bf16.msra.mxu0 0
    %621 = vmatprep.subr.bf16.mxu0 0
    %622 = vmatpush1.bf16.msra.mxu0 0
    %623 = vmatprep.subr.bf16.mxu0 0
    %624 = vmatpush1.bf16.msra.mxu0 0
    %625 = vmatprep.subr.bf16.mxu0 0
    %626 = vmatpush1.bf16.msra.mxu0 0
    %627 = vmatprep.subr.bf16.mxu0 0
    %628 = vmatpush1.bf16.msra.mxu0 0
    %629 = vmatprep.subr.bf16.mxu0 0
    %630 = vmatpush1.bf16.msra.mxu0 0
    %631 = vmatprep.subr.bf16.mxu0 0
    %632 = vmatpush1.bf16.msra.mxu0 0
    %633 = vmatprep.subr.bf16.mxu0 0
    %634 = vmatpush1.bf16.msra.mxu0 0
    %635 = vmatprep.subr.bf16.mxu0 0
    %636 = vmatpush1.bf16.msra.mxu0 0
    %637 = vmatprep.mubr.bf16.mxu0 0
    %638 = vmatmul.mubr.bf16.gmra.mrb[0].mxu0 %v439
    %v639 = vpop.f32.mrb[0].mxu0
    %v640 = vadd.f32 0.0, %v639
    %v641 = vpop.f32.mrb[0].mxu0
    %v642 = vpop.f32.mrb[0].mxu0
    %v643 = vadd.f32 0.0, %v642
    %v644 = vpop.f32.mrb[0].mxu0
    %645 = vdwg.mxu0
    %646 = vmatprep.subr.bf16.mxu0 0
    %647 = vmatpush1.bf16.msra.mxu0 %v435
    %648 = vmatprep.subr.bf16.mxu0 0
    %649 = vmatpush1.bf16.msra.mxu0 0
    %650 = vmatprep.subr.bf16.mxu0 0
    %651 = vmatpush1.bf16.msra.mxu0 0
    %652 = vmatprep.subr.bf16.mxu0 0
    %653 = vmatpush1.bf16.msra.mxu0 0
    %654 = vmatprep.subr.bf16.mxu0 0
    %655 = vmatpush1.bf16.msra.mxu0 0
    %656 = vmatprep.subr.bf16.mxu0 0
    %657 = vmatpush1.bf16.msra.mxu0 0
    %658 = vmatprep.subr.bf16.mxu0 0
    %659 = vmatpush1.bf16.msra.mxu0 0
    %660 = vmatprep.subr.bf16.mxu0 0
    %661 = vmatpush1.bf16.msra.mxu0 0
    %662 = vmatprep.subr.bf16.mxu0 0
    %663 = vmatpush1.bf16.msra.mxu0 0
    %664 = vmatprep.subr.bf16.mxu0 0
    %665 = vmatpush1.bf16.msra.mxu0 0
    %666 = vmatprep.subr.bf16.mxu0 0
    %667 = vmatpush1.bf16.msra.mxu0 0
    %668 = vmatprep.subr.bf16.mxu0 0
    %669 = vmatpush1.bf16.msra.mxu0 0
    %670 = vmatprep.subr.bf16.mxu0 0
    %671 = vmatpush1.bf16.msra.mxu0 0
    %672 = vmatprep.subr.bf16.mxu0 0
    %673 = vmatpush1.bf16.msra.mxu0 0
    %674 = vmatprep.subr.bf16.mxu0 0
    %675 = vmatpush1.bf16.msra.mxu0 0
    %676 = vmatprep.subr.bf16.mxu0 0
    %677 = vmatpush1.bf16.msra.mxu0 0
    %678 = vmatprep.mubr.bf16.mxu0 0
    %679 = vmatmul.mubr.bf16.gmra.mrb[0].mxu0 %v439
    %v680 = vpop.f32.mrb[0].mxu0
    %v681 = vadd.f32 0.0, %v680
    %v682 = vpop.f32.mrb[0].mxu0
    %v683 = vpop.f32.mrb[0].mxu0
    %v684 = vadd.f32 0.0, %v683
    %v685 = vpop.f32.mrb[0].mxu0
    %686 = vdwg.mxu0
    %687 = vmatprep.subr.bf16.mxu0 0
    %688 = vmatpush1.bf16.msra.mxu0 %v436
    %689 = vmatprep.subr.bf16.mxu0 0
    %690 = vmatpush1.bf16.msra.mxu0 0
    %691 = vmatprep.subr.bf16.mxu0 0
    %692 = vmatpush1.bf16.msra.mxu0 0
    %693 = vmatprep.subr.bf16.mxu0 0
    %694 = vmatpush1.bf16.msra.mxu0 0
    %695 = vmatprep.subr.bf16.mxu0 0
    %696 = vmatpush1.bf16.msra.mxu0 0
    %697 = vmatprep.subr.bf16.mxu0 0
    %698 = vmatpush1.bf16.msra.mxu0 0
    %699 = vmatprep.subr.bf16.mxu0 0
    %700 = vmatpush1.bf16.msra.mxu0 0
    %701 = vmatprep.subr.bf16.mxu0 0
    %702 = vmatpush1.bf16.msra.mxu0 0
    %703 = vmatprep.subr.bf16.mxu0 0
    %704 = vmatpush1.bf16.msra.mxu0 0
    %705 = vmatprep.subr.bf16.mxu0 0
    %706 = vmatpush1.bf16.msra.mxu0 0
    %707 = vmatprep.subr.bf16.mxu0 0
    %708 = vmatpush1.bf16.msra.mxu0 0
    %709 = vmatprep.subr.bf16.mxu0 0
    %710 = vmatpush1.bf16.msra.mxu0 0
    %711 = vmatprep.subr.bf16.mxu0 0
    %712 = vmatpush1.bf16.msra.mxu0 0
    %713 = vmatprep.subr.bf16.mxu0 0
    %714 = vmatpush1.bf16.msra.mxu0 0
    %715 = vmatprep.subr.bf16.mxu0 0
    %716 = vmatpush1.bf16.msra.mxu0 0
    %717 = vmatprep.subr.bf16.mxu0 0
    %718 = vmatpush1.bf16.msra.mxu0 0
    %719 = vmatprep.mubr.bf16.mxu0 0
    %720 = vmatmul.mubr.bf16.gmra.mrb[0].mxu0 %v439
    %v721 = vpop.f32.mrb[0].mxu0
    %v722 = vadd.f32 0.0, %v721
    %v723 = vpop.f32.mrb[0].mxu0
    %v724 = vpop.f32.mrb[0].mxu0
    %v725 = vadd.f32 0.0, %v724
    %v726 = vpop.f32.mrb[0].mxu0
    %727 = vdwg.mxu0
    %728 = vmatprep.subr.bf16.mxu0 0
    %729 = vmatpush1.bf16.msra.mxu0 %v437
    %730 = vmatprep.subr.bf16.mxu0 0
    %731 = vmatpush1.bf16.msra.mxu0 0
    %732 = vmatprep.subr.bf16.mxu0 0
    %733 = vmatpush1.bf16.msra.mxu0 0
    %734 = vmatprep.subr.bf16.mxu0 0
    %735 = vmatpush1.bf16.msra.mxu0 0
    %736 = vmatprep.subr.bf16.mxu0 0
    %737 = vmatpush1.bf16.msra.mxu0 0
    %738 = vmatprep.subr.bf16.mxu0 0
    %739 = vmatpush1.bf16.msra.mxu0 0
    %740 = vmatprep.subr.bf16.mxu0 0
    %741 = vmatpush1.bf16.msra.mxu0 0
    %742 = vmatprep.subr.bf16.mxu0 0
    %743 = vmatpush1.bf16.msra.mxu0 0
    %744 = vmatprep.subr.bf16.mxu0 0
    %745 = vmatpush1.bf16.msra.mxu0 0
    %746 = vmatprep.subr.bf16.mxu0 0
    %747 = vmatpush1.bf16.msra.mxu0 0
    %748 = vmatprep.subr.bf16.mxu0 0
    %749 = vmatpush1.bf16.msra.mxu0 0
    %750 = vmatprep.subr.bf16.mxu0 0
    %751 = vmatpush1.bf16.msra.mxu0 0
    %752 = vmatprep.subr.bf16.mxu0 0
    %753 = vmatpush1.bf16.msra.mxu0 0
    %754 = vmatprep.subr.bf16.mxu0 0
    %755 = vmatpush1.bf16.msra.mxu0 0
    %756 = vmatprep.subr.bf16.mxu0 0
    %757 = vmatpush1.bf16.msra.mxu0 0
    %758 = vmatprep.subr.bf16.mxu0 0
    %759 = vmatpush1.bf16.msra.mxu0 0
    %760 = vmatprep.mubr.bf16.mxu0 0
    %761 = vmatmul.mubr.bf16.gmra.mrb[0].mxu0 %v439
    %v762 = vpop.f32.mrb[0].mxu0
    %v763 = vadd.f32 0.0, %v762
    %v764 = vpop.f32.mrb[0].mxu0
    %v765 = vpop.f32.mrb[0].mxu0
    %v766 = vadd.f32 0.0, %v765
    %v767 = vpop.f32.mrb[0].mxu0
    %768 = vdwg.mxu0
    %769 = vst.msk [vmem:[#allocation2] sm:$0xff] %vm42, %v476
    %770 = vst.msk [vmem:[#allocation2 + $0x8] sm:$0xff] %vm42, %v479
    %771 = vst.msk [vmem:[#allocation2 + $0x10] sm:$0xff] %vm42, %v517
    %772 = vst.msk [vmem:[#allocation2 + $0x18] sm:$0xff] %vm42, %v520
    %773 = vst.msk [vmem:[#allocation2 + $0x20] sm:$0xff] %vm42, %v558
    %774 = vst.msk [vmem:[#allocation2 + $0x28] sm:$0xff] %vm42, %v561
    %775 = vst.msk [vmem:[#allocation2 + $0x30] sm:$0xff] %vm42, %v599
    %776 = vst.msk [vmem:[#allocation2 + $0x38] sm:$0xff] %vm42, %v602
    %777 = vst.msk [vmem:[#allocation2 + $0x40] sm:$0xff] %vm42, %v640
    %778 = vst.msk [vmem:[#allocation2 + $0x48] sm:$0xff] %vm42, %v643
    %779 = vst.msk [vmem:[#allocation2 + $0x50] sm:$0xff] %vm42, %v681
    %780 = vst.msk [vmem:[#allocation2 + $0x58] sm:$0xff] %vm42, %v684
    %781 = vst.msk [vmem:[#allocation2 + $0x60] sm:$0xff] %vm42, %v722
    %782 = vst.msk [vmem:[#allocation2 + $0x68] sm:$0xff] %vm42, %v725
    %783 = vst.msk [vmem:[#allocation2 + $0x70] sm:$0xff] %vm42, %v763
    %784 = vst.msk [vmem:[#allocation2 + $0x78] sm:$0xff] %vm42, %v766
    // Predicated region
    $region10: #{a_call__.5} parent=1 // pred_check
      _
    $region11: #{a_call__.5} parent=1 // pred_check_branch
      %786 = sbr.rel (0) target = $region13
    $region12: #{a_call__.5} parent=1 // pred_region
      %s788 = ssub.s32 2048, 2048
      %789 = vsyncadd [#allocation3], %s788
      %s790 = sshll.u32 [#allocation2], 4
      %s791 = int_to_ptr.vmem [resolvable:$true] %s790
      %796 = dma.vmem_to_hbm [thread:$0]  %s791, 2048, %s2, [#allocation3], 128, 128, 8
    $region13: #{a_call__.5} parent=1 // pred_fallthru
      _
    // Predicated region
    $region14: #{a_call__.5} parent=1 // pred_check
      _
    $region15: #{a_call__.5} parent=1 // pred_check_branch
      %798 = sbr.rel (0) target = $region17
    $region16: #{a_call__.5} parent=1 // pred_region
      %799 = dma.done [#allocation3], 2048
    $region17: #{a_call__.5} parent=1 // pred_fallthru
      _
    %800 = vsyncpa [#allocation3], 1

</llo_original>
